<compile_context>
chip_gen: v5e
topology: v5e:2x2
jax: 0.10.0
libtpu: 0.0.40
codegen_flags: <defaults>
</compile_context>

<pallas_src>
import math
import functools

import jax
import jax.numpy as jnp
import numpy as np
from jax import lax
from jax.experimental import pallas as pl
from jax.experimental.pallas import tpu as pltpu


# ------------------------- module hyper-parameters -------------------------
N_CONVS = 2
KERNEL_SIZE = (2, 2)
STRIDE = (1, 1)
PADDING = (0, 0)
DILATION = (1, 1)
GRID_SIZE = 5
SPLINE_ORDER = 3
GRID_RANGE = (-1.0, 1.0)

KK = math.prod(KERNEL_SIZE)                      # in_features of the KANLinear
N_BASIS = GRID_SIZE + SPLINE_ORDER               # number of B-spline bases
N_KNOTS = GRID_SIZE + 2 * SPLINE_ORDER + 1       # knots per input feature

LANE = 128                                       # lanes per vreg row
S_CHUNK = 8                                      # sublane rows per inner step (bounds vreg pressure)


# ------------------------------ Pallas kernel ------------------------------
def _kan_conv_kernel(knots_ref, inv_ref, bw_ref, spw_ref, x_ref, out_ref):
    """knots_ref: SMEM (KK, N_KNOTS)               spline knots per input feature
       inv_ref  : SMEM (KK, SPLINE_ORDER*N_KNOTS)  1/(g[t+k]-g[t]) reciprocal table
       bw_ref   : SMEM (n_convs, KK)               base weights (out_features == 1)
       spw_ref  : SMEM (n_convs, KK*N_BASIS)       scaled spline weights (flattened)
       x_ref    : VMEM (KK, block_rows, 128)       im2col patch tile (sublane+lane dense)
       out_ref  : VMEM (n_convs, block_rows, 128)  per-conv outputs
    """
    n_convs = out_ref.shape[0]
    block_rows = x_ref.shape[1]
    n_chunks = block_rows // S_CHUNK

    def chunk_body(c, carry):
        lo = pl.multiple_of(c * S_CHUNK, S_CHUNK)
        accs = [jnp.zeros((S_CHUNK, LANE), jnp.float32) for _ in range(n_convs)]

        for i in range(KK):                               # static unroll over patch features
            xi = x_ref[i, pl.ds(lo, S_CHUNK), :]          # (S_CHUNK, 128) dense tile

            # --- base path: SiLU(x) * base_weight  (tanh form -> EUP, no divide) ---
            silu = 0.5 * xi * (jnp.tanh(0.5 * xi) + 1.0)
            for n in range(n_convs):
                accs[n] = accs[n] + silu * bw_ref[n, i]

            # --- B-spline bases (Cox-de Boor, statically unrolled) -----------------
            g = [knots_ref[i, t] for t in range(N_KNOTS)]          # scalar knots (SMEM)
            dlo = [xi - g[t] for t in range(N_KNOTS)]              # x - g[t], reused all levels
            bases = [((xi >= g[t]) & (xi < g[t + 1])).astype(jnp.float32)
                     for t in range(N_KNOTS - 1)]
            for k in range(1, SPLINE_ORDER + 1):
                # inv[t] = 1 / (g[t+k] - g[t])   (precomputed, scalar SMEM read)
                inv = [inv_ref[i, (k - 1) * N_KNOTS + t] for t in range(N_KNOTS - k)]
                # new[t] = (x-g[t])*inv[t]*b[t] + (g[t+k+1]-x)*inv[t+1]*b[t+1]
                #        = dlo[t]*inv[t]*b[t] - dlo[t+k+1]*inv[t+1]*b[t+1]
                bases = [
                    dlo[t] * inv[t] * bases[t]
                    - dlo[t + k + 1] * inv[t + 1] * bases[t + 1]
                    for t in range(len(bases) - 1)
                ]
            # len(bases) == N_BASIS

            # --- spline path: bases . scaled_spline_weight -------------------------
            for n in range(n_convs):
                s = bases[0] * spw_ref[n, i * N_BASIS]
                for j in range(1, N_BASIS):
                    s = s + bases[j] * spw_ref[n, i * N_BASIS + j]
                accs[n] = accs[n] + s

        for n in range(n_convs):                          # full (8,128) stores, no masking
            out_ref[n, pl.ds(lo, S_CHUNK), :] = accs[n].astype(out_ref.dtype)
        return carry

    lax.fori_loop(0, n_chunks, chunk_body, 0)


# ------------------------------- JAX glue ----------------------------------
def _im2col(x, kernel_size, stride, dilation, padding):
    """torch.nn.Unfold equivalent, per channel. Returns slab (KK, B*C*h_out*w_out)
    built directly in tap-major order (no materialized KK-duplicated transpose)."""
    B, C, H, W = x.shape
    kh_s, kw_s = kernel_size
    sh, sw = stride
    dh, dw = dilation
    ph, pw = padding
    xp = jnp.pad(x, ((0, 0), (0, 0), (ph, ph), (pw, pw)))
    Hp, Wp = H + 2 * ph, W + 2 * pw
    h_out = (Hp - dh * (kh_s - 1) - 1) // sh + 1
    w_out = (Wp - dw * (kw_s - 1) - 1) // sw + 1
    cols = []
    for kh in range(kh_s):
        for kw in range(kw_s):
            sub = xp[:, :,
                     kh * dh: kh * dh + sh * (h_out - 1) + 1: sh,
                     kw * dw: kw * dw + sw * (w_out - 1) + 1: sw]
            cols.append(sub.reshape(-1))                  # (B*C*h_out*w_out,)
    slab = jnp.stack(cols, axis=0)                        # (KK, N), lane-dense layout target
    return slab, h_out, w_out


def _make_inv_table(knots):
    """inv[f, k-1, t] = 1/(g[f, t+k] - g[f, t]) for each feature f, flattened."""
    kk, nk = knots.shape
    inv = jnp.zeros((kk, SPLINE_ORDER, nk), jnp.float32)
    for k in range(1, SPLINE_ORDER + 1):
        d = knots[:, k:] - knots[:, :-k]                  # all nonzero for a valid grid
        inv = inv.at[:, k - 1, : nk - k].set(1.0 / d)
    return inv.reshape(kk, SPLINE_ORDER * nk)


def _pick_block_rows(n_rows):
    """Rows (of 128 lanes) per grid step: large enough to amortize per-step overhead,
    small enough to keep >=4 pipelined steps on large inputs (v7x megacore) and to
    avoid a huge padded tail on small ones."""
    for rows in (64, 32, 16):
        if n_rows >= 4 * rows:
            return rows
    return 8


@functools.partial(jax.jit, static_argnames=("n_convs",))
def kan_convolutional_layer(x, grid, base_w, scaled_spline_w, *, n_convs):
    """Forward of KAN_Convolutional_Layer.

    x               : (B, C, H, W) float32   (NCHW, like PyTorch)
    grid            : (KK, N_KNOTS) spline knots
    base_w          : (n_convs, KK)
    scaled_spline_w : (n_convs, KK, N_BASIS)  (spline_weight * spline_scaler)
    returns         : (B, C * n_convs, h_out, w_out) float32
    """
    B, C, _, _ = x.shape
    slab, h_out, w_out = _im2col(x, KERNEL_SIZE, STRIDE, DILATION, PADDING)  # (KK, N)
    P = h_out * w_out
    N = B * C * P

    n_rows = pl.cdiv(N, LANE)
    block_rows = _pick_block_rows(n_rows)
    padded_rows = pl.cdiv(n_rows, block_rows) * block_rows
    n_pad = padded_rows * LANE

    # (KK, N) -> (KK, rows, 128): N spans sublanes AND lanes (dense vreg tiles).
    slab = jnp.pad(slab, ((0, 0), (0, n_pad - N))).reshape(KK, padded_rows, LANE)

    inv_tab = _make_inv_table(grid)                            # (KK, SPLINE_ORDER*N_KNOTS)
    spw_flat = scaled_spline_w.reshape(n_convs, KK * N_BASIS)

    grid_spec = pltpu.PrefetchScalarGridSpec(
        num_scalar_prefetch=0,
        grid=(padded_rows // block_rows,),
        in_specs=[
            pl.BlockSpec(memory_space=pltpu.MemorySpace.SMEM),   # knots
            pl.BlockSpec(memory_space=pltpu.MemorySpace.SMEM),   # knot-diff reciprocals
            pl.BlockSpec(memory_space=pltpu.MemorySpace.SMEM),   # base weights
            pl.BlockSpec(memory_space=pltpu.MemorySpace.SMEM),   # spline weights
            pl.BlockSpec((KK, block_rows, LANE), lambda i: (0, i, 0)),        # patch tile
        ],
        out_specs=pl.BlockSpec((n_convs, block_rows, LANE), lambda i: (0, i, 0)),
    )

    out3 = pl.pallas_call(
        _kan_conv_kernel,
        out_shape=jax.ShapeDtypeStruct((n_convs, padded_rows, LANE), jnp.float32),
        grid_spec=grid_spec,
        compiler_params=pltpu.CompilerParams(dimension_semantics=("parallel",)),
    )(grid, inv_tab, base_w, spw_flat, slab)

    out = out3.reshape(n_convs, n_pad)[:, :N].reshape(n_convs, B, C, P)
    # output channel ordering: kern + channel * n_convs (matches multiple_convs_kan_conv2d)
    out = out.transpose(1, 2, 0, 3).reshape(B, C * n_convs, h_out, w_out)
    return out


# --------------------------- pure-JAX reference -----------------------------
def _reference(x, grid, base_w, scaled_spline_w, n_convs):
    B, C = x.shape[0], x.shape[1]
    slab, h_out, w_out = _im2col(x, KERNEL_SIZE, STRIDE, DILATION, PADDING)
    flat = slab.T                                          # (N, KK)
    P = h_out * w_out

    xg = flat[..., None]                                   # (N, KK, 1)
    bases = ((xg >= grid[:, :-1]) & (xg < grid[:, 1:])).astype(flat.dtype)
    for k in range(1, SPLINE_ORDER + 1):
        bases = ((xg - grid[:, : -(k + 1)]) / (grid[:, k:-1] - grid[:, : -(k + 1)])
                 * bases[..., :-1]
                 + (grid[:, k + 1:] - xg) / (grid[:, k + 1:] - grid[:, 1:-k])
                 * bases[..., 1:])
    silu = flat * jax.nn.sigmoid(flat)

    outs = []
    for n in range(n_convs):
        base_out = jnp.sum(silu * base_w[n], axis=-1)                                    # (N,)
        spline_out = jnp.sum(bases.reshape(flat.shape[0], -1)
                             * scaled_spline_w[n].reshape(-1), axis=-1)
        outs.append(base_out + spline_out)
    out = jnp.stack(outs, 0).reshape(n_convs, B, C, P)
    return out.transpose(1, 2, 0, 3).reshape(B, C * n_convs, h_out, w_out)


# ---------------------------------- main ------------------------------------
if __name__ == "__main__":
    key = jax.random.PRNGKey(0)
    k_x, k_bw, k_sw, k_sc = jax.random.split(key, 4)

    B, C, H, W = 2, 4, 16, 16
    x = jax.random.normal(k_x, (B, C, H, W), dtype=jnp.float32)

    # Deterministic synthetic parameters (shapes per KANLinear(in=KK, out=1)):
    h = (GRID_RANGE[1] - GRID_RANGE[0]) / GRID_SIZE
    grid_row = jnp.arange(-SPLINE_ORDER, GRID_SIZE + SPLINE_ORDER + 1,
                          dtype=jnp.float32) * h + GRID_RANGE[0]
    grid = jnp.tile(grid_row[None, :], (KK, 1))                       # (KK, N_KNOTS)

    base_w = jax.random.uniform(k_bw, (N_CONVS, KK), jnp.float32, -0.5, 0.5)
    spline_w = 0.1 * jax.random.normal(k_sw, (N_CONVS, KK, N_BASIS), jnp.float32)
    spline_scaler = jax.random.uniform(k_sc, (N_CONVS, KK), jnp.float32, 0.5, 1.5)
    scaled_spline_w = spline_w * spline_scaler[..., None]             # (n_convs, KK, N_BASIS)

    out = kan_convolutional_layer(x, grid, base_w, scaled_spline_w, n_convs=N_CONVS)
    out = jax.block_until_ready(out)

    ref = _reference(x, grid, base_w, scaled_spline_w, N_CONVS)
    np.testing.assert_allclose(np.asarray(out), np.asarray(ref), rtol=1e-4, atol=1e-5)
    assert out.shape == (B, C * N_CONVS, H - 1, W - 1)

    print("KERNEL_OK")
</pallas_src>

<mosaic_0001>
module attributes {stable_mosaic.version = 11 : i64} {
  func.func @_kan_conv_kernel(%arg0: i32, %arg1: memref<4x12xf32, #tpu.memory_space<smem>>, %arg2: memref<4x36xf32, #tpu.memory_space<smem>>, %arg3: memref<2x4xf32, #tpu.memory_space<smem>>, %arg4: memref<2x32xf32, #tpu.memory_space<smem>>, %arg5: memref<4x8x128xf32, #tpu.memory_space<vmem>>, %arg6: memref<2x8x128xf32, #tpu.memory_space<vmem>>) attributes {dimension_semantics = [#tpu.dimension_semantics<parallel>], iteration_bounds = array<i64: 2>, scalar_prefetch = 0 : i64, scratch_operands = 0 : i64, tpu.core_type = #tpu.core_type<tc>, window_params = [{transform_indices = @transform_0, window_bounds = array<i64: 4, 12>}, {transform_indices = @transform_1, window_bounds = array<i64: 4, 36>}, {transform_indices = @transform_2, window_bounds = array<i64: 2, 4>}, {transform_indices = @transform_3, window_bounds = array<i64: 2, 32>}, {transform_indices = @transform_4, window_bounds = array<i64: 4, 8, 128>}, {transform_indices = @transform_5, window_bounds = array<i64: 2, 8, 128>}]} {
    %c0_i32 = arith.constant 0 : i32
    %c8_i32 = arith.constant 8 : i32
    %0 = arith.muli %c0_i32, %c8_i32 : i32
    %1 = tpu.assume_multiple %0, 8 : i32
    %cst = arith.constant 0.000000e+00 : f32
    %2 = vector.broadcast %cst : f32 to vector<8x128xf32>
    %cst_0 = arith.constant 0.000000e+00 : f32
    %3 = vector.broadcast %cst_0 : f32 to vector<8x128xf32>
    %c0 = arith.constant 0 : index
    %4 = arith.index_cast %1 : i32 to index
    %c0_1 = arith.constant 0 : index
    %5 = vector.load %arg5[%c0, %4, %c0_1] : memref<4x8x128xf32, #tpu.memory_space<vmem>>, vector<1x8x128xf32>
    %6 = vector.shape_cast %5 : vector<1x8x128xf32> to vector<8x128xf32>
    %cst_2 = arith.constant 5.000000e-01 : f32
    %7 = vector.broadcast %cst_2 : f32 to vector<8x128xf32>
    %8 = arith.mulf %7, %6 : vector<8x128xf32>
    %cst_3 = arith.constant 5.000000e-01 : f32
    %9 = vector.broadcast %cst_3 : f32 to vector<8x128xf32>
    %10 = arith.mulf %9, %6 : vector<8x128xf32>
    %11 = math.tanh %10 : vector<8x128xf32>
    %cst_4 = arith.constant 1.000000e+00 : f32
    %12 = vector.broadcast %cst_4 : f32 to vector<8x128xf32>
    %13 = arith.addf %11, %12 : vector<8x128xf32>
    %14 = arith.mulf %8, %13 : vector<8x128xf32>
    %c0_5 = arith.constant 0 : index
    %c0_6 = arith.constant 0 : index
    %15 = memref.load %arg3[%c0_5, %c0_6] : memref<2x4xf32, #tpu.memory_space<smem>>
    %16 = vector.broadcast %15 : f32 to vector<8x128xf32>
    %17 = arith.mulf %14, %16 : vector<8x128xf32>
    %18 = arith.addf %2, %17 : vector<8x128xf32>
    %c1 = arith.constant 1 : index
    %c0_7 = arith.constant 0 : index
    %19 = memref.load %arg3[%c1, %c0_7] : memref<2x4xf32, #tpu.memory_space<smem>>
    %20 = vector.broadcast %19 : f32 to vector<8x128xf32>
    %21 = arith.mulf %14, %20 : vector<8x128xf32>
    %22 = arith.addf %3, %21 : vector<8x128xf32>
    %c0_8 = arith.constant 0 : index
    %c0_9 = arith.constant 0 : index
    %23 = memref.load %arg1[%c0_8, %c0_9] : memref<4x12xf32, #tpu.memory_space<smem>>
    %c0_10 = arith.constant 0 : index
    %c1_11 = arith.constant 1 : index
    %24 = memref.load %arg1[%c0_10, %c1_11] : memref<4x12xf32, #tpu.memory_space<smem>>
    %c0_12 = arith.constant 0 : index
    %c2 = arith.constant 2 : index
    %25 = memref.load %arg1[%c0_12, %c2] : memref<4x12xf32, #tpu.memory_space<smem>>
    %c0_13 = arith.constant 0 : index
    %c3 = arith.constant 3 : index
    %26 = memref.load %arg1[%c0_13, %c3] : memref<4x12xf32, #tpu.memory_space<smem>>
    %c0_14 = arith.constant 0 : index
    %c4 = arith.constant 4 : index
    %27 = memref.load %arg1[%c0_14, %c4] : memref<4x12xf32, #tpu.memory_space<smem>>
    %c0_15 = arith.constant 0 : index
    %c5 = arith.constant 5 : index
    %28 = memref.load %arg1[%c0_15, %c5] : memref<4x12xf32, #tpu.memory_space<smem>>
    %c0_16 = arith.constant 0 : index
    %c6 = arith.constant 6 : index
    %29 = memref.load %arg1[%c0_16, %c6] : memref<4x12xf32, #tpu.memory_space<smem>>
    %c0_17 = arith.constant 0 : index
    %c7 = arith.constant 7 : index
    %30 = memref.load %arg1[%c0_17, %c7] : memref<4x12xf32, #tpu.memory_space<smem>>
    %c0_18 = arith.constant 0 : index
    %c8 = arith.constant 8 : index
    %31 = memref.load %arg1[%c0_18, %c8] : memref<4x12xf32, #tpu.memory_space<smem>>
    %c0_19 = arith.constant 0 : index
    %c9 = arith.constant 9 : index
    %32 = memref.load %arg1[%c0_19, %c9] : memref<4x12xf32, #tpu.memory_space<smem>>
    %c0_20 = arith.constant 0 : index
    %c10 = arith.constant 10 : index
    %33 = memref.load %arg1[%c0_20, %c10] : memref<4x12xf32, #tpu.memory_space<smem>>
    %c0_21 = arith.constant 0 : index
    %c11 = arith.constant 11 : index
    %34 = memref.load %arg1[%c0_21, %c11] : memref<4x12xf32, #tpu.memory_space<smem>>
    %35 = vector.broadcast %23 : f32 to vector<8x128xf32>
    %36 = arith.subf %6, %35 : vector<8x128xf32>
    %37 = vector.broadcast %24 : f32 to vector<8x128xf32>
    %38 = arith.subf %6, %37 : vector<8x128xf32>
    %39 = vector.broadcast %25 : f32 to vector<8x128xf32>
    %40 = arith.subf %6, %39 : vector<8x128xf32>
    %41 = vector.broadcast %26 : f32 to vector<8x128xf32>
    %42 = arith.subf %6, %41 : vector<8x128xf32>
    %43 = vector.broadcast %27 : f32 to vector<8x128xf32>
    %44 = arith.subf %6, %43 : vector<8x128xf32>
    %45 = vector.broadcast %28 : f32 to vector<8x128xf32>
    %46 = arith.subf %6, %45 : vector<8x128xf32>
    %47 = vector.broadcast %29 : f32 to vector<8x128xf32>
    %48 = arith.subf %6, %47 : vector<8x128xf32>
    %49 = vector.broadcast %30 : f32 to vector<8x128xf32>
    %50 = arith.subf %6, %49 : vector<8x128xf32>
    %51 = vector.broadcast %31 : f32 to vector<8x128xf32>
    %52 = arith.subf %6, %51 : vector<8x128xf32>
    %53 = vector.broadcast %32 : f32 to vector<8x128xf32>
    %54 = arith.subf %6, %53 : vector<8x128xf32>
    %55 = vector.broadcast %33 : f32 to vector<8x128xf32>
    %56 = arith.subf %6, %55 : vector<8x128xf32>
    %57 = vector.broadcast %34 : f32 to vector<8x128xf32>
    %58 = arith.subf %6, %57 : vector<8x128xf32>
    %59 = vector.broadcast %23 : f32 to vector<8x128xf32>
    %60 = arith.cmpf oge, %6, %59 : vector<8x128xf32>
    %61 = vector.broadcast %24 : f32 to vector<8x128xf32>
    %62 = arith.cmpf olt, %6, %61 : vector<8x128xf32>
    %63 = arith.andi %60, %62 : vector<8x128xi1>
    %64 = arith.extui %63 : vector<8x128xi1> to vector<8x128xi32>
    %65 = arith.sitofp %64 : vector<8x128xi32> to vector<8x128xf32>
    %66 = vector.broadcast %24 : f32 to vector<8x128xf32>
    %67 = arith.cmpf oge, %6, %66 : vector<8x128xf32>
    %68 = vector.broadcast %25 : f32 to vector<8x128xf32>
    %69 = arith.cmpf olt, %6, %68 : vector<8x128xf32>
    %70 = arith.andi %67, %69 : vector<8x128xi1>
    %71 = arith.extui %70 : vector<8x128xi1> to vector<8x128xi32>
    %72 = arith.sitofp %71 : vector<8x128xi32> to vector<8x128xf32>
    %73 = vector.broadcast %25 : f32 to vector<8x128xf32>
    %74 = arith.cmpf oge, %6, %73 : vector<8x128xf32>
    %75 = vector.broadcast %26 : f32 to vector<8x128xf32>
    %76 = arith.cmpf olt, %6, %75 : vector<8x128xf32>
    %77 = arith.andi %74, %76 : vector<8x128xi1>
    %78 = arith.extui %77 : vector<8x128xi1> to vector<8x128xi32>
    %79 = arith.sitofp %78 : vector<8x128xi32> to vector<8x128xf32>
    %80 = vector.broadcast %26 : f32 to vector<8x128xf32>
    %81 = arith.cmpf oge, %6, %80 : vector<8x128xf32>
    %82 = vector.broadcast %27 : f32 to vector<8x128xf32>
    %83 = arith.cmpf olt, %6, %82 : vector<8x128xf32>
    %84 = arith.andi %81, %83 : vector<8x128xi1>
    %85 = arith.extui %84 : vector<8x128xi1> to vector<8x128xi32>
    %86 = arith.sitofp %85 : vector<8x128xi32> to vector<8x128xf32>
    %87 = vector.broadcast %27 : f32 to vector<8x128xf32>
    %88 = arith.cmpf oge, %6, %87 : vector<8x128xf32>
    %89 = vector.broadcast %28 : f32 to vector<8x128xf32>
    %90 = arith.cmpf olt, %6, %89 : vector<8x128xf32>
    %91 = arith.andi %88, %90 : vector<8x128xi1>
    %92 = arith.extui %91 : vector<8x128xi1> to vector<8x128xi32>
    %93 = arith.sitofp %92 : vector<8x128xi32> to vector<8x128xf32>
    %94 = vector.broadcast %28 : f32 to vector<8x128xf32>
    %95 = arith.cmpf oge, %6, %94 : vector<8x128xf32>
    %96 = vector.broadcast %29 : f32 to vector<8x128xf32>
    %97 = arith.cmpf olt, %6, %96 : vector<8x128xf32>
    %98 = arith.andi %95, %97 : vector<8x128xi1>
    %99 = arith.extui %98 : vector<8x128xi1> to vector<8x128xi32>
    %100 = arith.sitofp %99 : vector<8x128xi32> to vector<8x128xf32>
    %101 = vector.broadcast %29 : f32 to vector<8x128xf32>
    %102 = arith.cmpf oge, %6, %101 : vector<8x128xf32>
    %103 = vector.broadcast %30 : f32 to vector<8x128xf32>
    %104 = arith.cmpf olt, %6, %103 : vector<8x128xf32>
    %105 = arith.andi %102, %104 : vector<8x128xi1>
    %106 = arith.extui %105 : vector<8x128xi1> to vector<8x128xi32>
    %107 = arith.sitofp %106 : vector<8x128xi32> to vector<8x128xf32>
    %108 = vector.broadcast %30 : f32 to vector<8x128xf32>
    %109 = arith.cmpf oge, %6, %108 : vector<8x128xf32>
    %110 = vector.broadcast %31 : f32 to vector<8x128xf32>
    %111 = arith.cmpf olt, %6, %110 : vector<8x128xf32>
    %112 = arith.andi %109, %111 : vector<8x128xi1>
    %113 = arith.extui %112 : vector<8x128xi1> to vector<8x128xi32>
    %114 = arith.sitofp %113 : vector<8x128xi32> to vector<8x128xf32>
    %115 = vector.broadcast %31 : f32 to vector<8x128xf32>
    %116 = arith.cmpf oge, %6, %115 : vector<8x128xf32>
    %117 = vector.broadcast %32 : f32 to vector<8x128xf32>
    %118 = arith.cmpf olt, %6, %117 : vector<8x128xf32>
    %119 = arith.andi %116, %118 : vector<8x128xi1>
    %120 = arith.extui %119 : vector<8x128xi1> to vector<8x128xi32>
    %121 = arith.sitofp %120 : vector<8x128xi32> to vector<8x128xf32>
    %122 = vector.broadcast %32 : f32 to vector<8x128xf32>
    %123 = arith.cmpf oge, %6, %122 : vector<8x128xf32>
    %124 = vector.broadcast %33 : f32 to vector<8x128xf32>
    %125 = arith.cmpf olt, %6, %124 : vector<8x128xf32>
    %126 = arith.andi %123, %125 : vector<8x128xi1>
    %127 = arith.extui %126 : vector<8x128xi1> to vector<8x128xi32>
    %128 = arith.sitofp %127 : vector<8x128xi32> to vector<8x128xf32>
    %129 = vector.broadcast %33 : f32 to vector<8x128xf32>
    %130 = arith.cmpf oge, %6, %129 : vector<8x128xf32>
    %131 = vector.broadcast %34 : f32 to vector<8x128xf32>
    %132 = arith.cmpf olt, %6, %131 : vector<8x128xf32>
    %133 = arith.andi %130, %132 : vector<8x128xi1>
    %134 = arith.extui %133 : vector<8x128xi1> to vector<8x128xi32>
    %135 = arith.sitofp %134 : vector<8x128xi32> to vector<8x128xf32>
    %c0_22 = arith.constant 0 : index
    %c0_23 = arith.constant 0 : index
    %136 = memref.load %arg2[%c0_22, %c0_23] : memref<4x36xf32, #tpu.memory_space<smem>>
    %c0_24 = arith.constant 0 : index
    %c1_25 = arith.constant 1 : index
    %137 = memref.load %arg2[%c0_24, %c1_25] : memref<4x36xf32, #tpu.memory_space<smem>>
    %c0_26 = arith.constant 0 : index
    %c2_27 = arith.constant 2 : index
    %138 = memref.load %arg2[%c0_26, %c2_27] : memref<4x36xf32, #tpu.memory_space<smem>>
    %c0_28 = arith.constant 0 : index
    %c3_29 = arith.constant 3 : index
    %139 = memref.load %arg2[%c0_28, %c3_29] : memref<4x36xf32, #tpu.memory_space<smem>>
    %c0_30 = arith.constant 0 : index
    %c4_31 = arith.constant 4 : index
    %140 = memref.load %arg2[%c0_30, %c4_31] : memref<4x36xf32, #tpu.memory_space<smem>>
    %c0_32 = arith.constant 0 : index
    %c5_33 = arith.constant 5 : index
    %141 = memref.load %arg2[%c0_32, %c5_33] : memref<4x36xf32, #tpu.memory_space<smem>>
    %c0_34 = arith.constant 0 : index
    %c6_35 = arith.constant 6 : index
    %142 = memref.load %arg2[%c0_34, %c6_35] : memref<4x36xf32, #tpu.memory_space<smem>>
    %c0_36 = arith.constant 0 : index
    %c7_37 = arith.constant 7 : index
    %143 = memref.load %arg2[%c0_36, %c7_37] : memref<4x36xf32, #tpu.memory_space<smem>>
    %c0_38 = arith.constant 0 : index
    %c8_39 = arith.constant 8 : index
    %144 = memref.load %arg2[%c0_38, %c8_39] : memref<4x36xf32, #tpu.memory_space<smem>>
    %c0_40 = arith.constant 0 : index
    %c9_41 = arith.constant 9 : index
    %145 = memref.load %arg2[%c0_40, %c9_41] : memref<4x36xf32, #tpu.memory_space<smem>>
    %c0_42 = arith.constant 0 : index
    %c10_43 = arith.constant 10 : index
    %146 = memref.load %arg2[%c0_42, %c10_43] : memref<4x36xf32, #tpu.memory_space<smem>>
    %147 = vector.broadcast %136 : f32 to vector<8x128xf32>
    %148 = arith.mulf %36, %147 : vector<8x128xf32>
    %149 = arith.mulf %148, %65 : vector<8x128xf32>
    %150 = vector.broadcast %137 : f32 to vector<8x128xf32>
    %151 = arith.mulf %40, %150 : vector<8x128xf32>
    %152 = arith.mulf %151, %72 : vector<8x128xf32>
    %153 = arith.subf %149, %152 : vector<8x128xf32>
    %154 = vector.broadcast %137 : f32 to vector<8x128xf32>
    %155 = arith.mulf %38, %154 : vector<8x128xf32>
    %156 = arith.mulf %155, %72 : vector<8x128xf32>
    %157 = vector.broadcast %138 : f32 to vector<8x128xf32>
    %158 = arith.mulf %42, %157 : vector<8x128xf32>
    %159 = arith.mulf %158, %79 : vector<8x128xf32>
    %160 = arith.subf %156, %159 : vector<8x128xf32>
    %161 = vector.broadcast %138 : f32 to vector<8x128xf32>
    %162 = arith.mulf %40, %161 : vector<8x128xf32>
    %163 = arith.mulf %162, %79 : vector<8x128xf32>
    %164 = vector.broadcast %139 : f32 to vector<8x128xf32>
    %165 = arith.mulf %44, %164 : vector<8x128xf32>
    %166 = arith.mulf %165, %86 : vector<8x128xf32>
    %167 = arith.subf %163, %166 : vector<8x128xf32>
    %168 = vector.broadcast %139 : f32 to vector<8x128xf32>
    %169 = arith.mulf %42, %168 : vector<8x128xf32>
    %170 = arith.mulf %169, %86 : vector<8x128xf32>
    %171 = vector.broadcast %140 : f32 to vector<8x128xf32>
    %172 = arith.mulf %46, %171 : vector<8x128xf32>
    %173 = arith.mulf %172, %93 : vector<8x128xf32>
    %174 = arith.subf %170, %173 : vector<8x128xf32>
    %175 = vector.broadcast %140 : f32 to vector<8x128xf32>
    %176 = arith.mulf %44, %175 : vector<8x128xf32>
    %177 = arith.mulf %176, %93 : vector<8x128xf32>
    %178 = vector.broadcast %141 : f32 to vector<8x128xf32>
    %179 = arith.mulf %48, %178 : vector<8x128xf32>
    %180 = arith.mulf %179, %100 : vector<8x128xf32>
    %181 = arith.subf %177, %180 : vector<8x128xf32>
    %182 = vector.broadcast %141 : f32 to vector<8x128xf32>
    %183 = arith.mulf %46, %182 : vector<8x128xf32>
    %184 = arith.mulf %183, %100 : vector<8x128xf32>
    %185 = vector.broadcast %142 : f32 to vector<8x128xf32>
    %186 = arith.mulf %50, %185 : vector<8x128xf32>
    %187 = arith.mulf %186, %107 : vector<8x128xf32>
    %188 = arith.subf %184, %187 : vector<8x128xf32>
    %189 = vector.broadcast %142 : f32 to vector<8x128xf32>
    %190 = arith.mulf %48, %189 : vector<8x128xf32>
    %191 = arith.mulf %190, %107 : vector<8x128xf32>
    %192 = vector.broadcast %143 : f32 to vector<8x128xf32>
    %193 = arith.mulf %52, %192 : vector<8x128xf32>
    %194 = arith.mulf %193, %114 : vector<8x128xf32>
    %195 = arith.subf %191, %194 : vector<8x128xf32>
    %196 = vector.broadcast %143 : f32 to vector<8x128xf32>
    %197 = arith.mulf %50, %196 : vector<8x128xf32>
    %198 = arith.mulf %197, %114 : vector<8x128xf32>
    %199 = vector.broadcast %144 : f32 to vector<8x128xf32>
    %200 = arith.mulf %54, %199 : vector<8x128xf32>
    %201 = arith.mulf %200, %121 : vector<8x128xf32>
    %202 = arith.subf %198, %201 : vector<8x128xf32>
    %203 = vector.broadcast %144 : f32 to vector<8x128xf32>
    %204 = arith.mulf %52, %203 : vector<8x128xf32>
    %205 = arith.mulf %204, %121 : vector<8x128xf32>
    %206 = vector.broadcast %145 : f32 to vector<8x128xf32>
    %207 = arith.mulf %56, %206 : vector<8x128xf32>
    %208 = arith.mulf %207, %128 : vector<8x128xf32>
    %209 = arith.subf %205, %208 : vector<8x128xf32>
    %210 = vector.broadcast %145 : f32 to vector<8x128xf32>
    %211 = arith.mulf %54, %210 : vector<8x128xf32>
    %212 = arith.mulf %211, %128 : vector<8x128xf32>
    %213 = vector.broadcast %146 : f32 to vector<8x128xf32>
    %214 = arith.mulf %58, %213 : vector<8x128xf32>
    %215 = arith.mulf %214, %135 : vector<8x128xf32>
    %216 = arith.subf %212, %215 : vector<8x128xf32>
    %c0_44 = arith.constant 0 : index
    %c12 = arith.constant 12 : index
    %217 = memref.load %arg2[%c0_44, %c12] : memref<4x36xf32, #tpu.memory_space<smem>>
    %c0_45 = arith.constant 0 : index
    %c13 = arith.constant 13 : index
    %218 = memref.load %arg2[%c0_45, %c13] : memref<4x36xf32, #tpu.memory_space<smem>>
    %c0_46 = arith.constant 0 : index
    %c14 = arith.constant 14 : index
    %219 = memref.load %arg2[%c0_46, %c14] : memref<4x36xf32, #tpu.memory_space<smem>>
    %c0_47 = arith.constant 0 : index
    %c15 = arith.constant 15 : index
    %220 = memref.load %arg2[%c0_47, %c15] : memref<4x36xf32, #tpu.memory_space<smem>>
    %c0_48 = arith.constant 0 : index
    %c16 = arith.constant 16 : index
    %221 = memref.load %arg2[%c0_48, %c16] : memref<4x36xf32, #tpu.memory_space<smem>>
    %c0_49 = arith.constant 0 : index
    %c17 = arith.constant 17 : index
    %222 = memref.load %arg2[%c0_49, %c17] : memref<4x36xf32, #tpu.memory_space<smem>>
    %c0_50 = arith.constant 0 : index
    %c18 = arith.constant 18 : index
    %223 = memref.load %arg2[%c0_50, %c18] : memref<4x36xf32, #tpu.memory_space<smem>>
    %c0_51 = arith.constant 0 : index
    %c19 = arith.constant 19 : index
    %224 = memref.load %arg2[%c0_51, %c19] : memref<4x36xf32, #tpu.memory_space<smem>>
    %c0_52 = arith.constant 0 : index
    %c20 = arith.constant 20 : index
    %225 = memref.load %arg2[%c0_52, %c20] : memref<4x36xf32, #tpu.memory_space<smem>>
    %c0_53 = arith.constant 0 : index
    %c21 = arith.constant 21 : index
    %226 = memref.load %arg2[%c0_53, %c21] : memref<4x36xf32, #tpu.memory_space<smem>>
    %227 = vector.broadcast %217 : f32 to vector<8x128xf32>
    %228 = arith.mulf %36, %227 : vector<8x128xf32>
    %229 = arith.mulf %228, %153 : vector<8x128xf32>
    %230 = vector.broadcast %218 : f32 to vector<8x128xf32>
    %231 = arith.mulf %42, %230 : vector<8x128xf32>
    %232 = arith.mulf %231, %160 : vector<8x128xf32>
    %233 = arith.subf %229, %232 : vector<8x128xf32>
    %234 = vector.broadcast %218 : f32 to vector<8x128xf32>
    %235 = arith.mulf %38, %234 : vector<8x128xf32>
    %236 = arith.mulf %235, %160 : vector<8x128xf32>
    %237 = vector.broadcast %219 : f32 to vector<8x128xf32>
    %238 = arith.mulf %44, %237 : vector<8x128xf32>
    %239 = arith.mulf %238, %167 : vector<8x128xf32>
    %240 = arith.subf %236, %239 : vector<8x128xf32>
    %241 = vector.broadcast %219 : f32 to vector<8x128xf32>
    %242 = arith.mulf %40, %241 : vector<8x128xf32>
    %243 = arith.mulf %242, %167 : vector<8x128xf32>
    %244 = vector.broadcast %220 : f32 to vector<8x128xf32>
    %245 = arith.mulf %46, %244 : vector<8x128xf32>
    %246 = arith.mulf %245, %174 : vector<8x128xf32>
    %247 = arith.subf %243, %246 : vector<8x128xf32>
    %248 = vector.broadcast %220 : f32 to vector<8x128xf32>
    %249 = arith.mulf %42, %248 : vector<8x128xf32>
    %250 = arith.mulf %249, %174 : vector<8x128xf32>
    %251 = vector.broadcast %221 : f32 to vector<8x128xf32>
    %252 = arith.mulf %48, %251 : vector<8x128xf32>
    %253 = arith.mulf %252, %181 : vector<8x128xf32>
    %254 = arith.subf %250, %253 : vector<8x128xf32>
    %255 = vector.broadcast %221 : f32 to vector<8x128xf32>
    %256 = arith.mulf %44, %255 : vector<8x128xf32>
    %257 = arith.mulf %256, %181 : vector<8x128xf32>
    %258 = vector.broadcast %222 : f32 to vector<8x128xf32>
    %259 = arith.mulf %50, %258 : vector<8x128xf32>
    %260 = arith.mulf %259, %188 : vector<8x128xf32>
    %261 = arith.subf %257, %260 : vector<8x128xf32>
    %262 = vector.broadcast %222 : f32 to vector<8x128xf32>
    %263 = arith.mulf %46, %262 : vector<8x128xf32>
    %264 = arith.mulf %263, %188 : vector<8x128xf32>
    %265 = vector.broadcast %223 : f32 to vector<8x128xf32>
    %266 = arith.mulf %52, %265 : vector<8x128xf32>
    %267 = arith.mulf %266, %195 : vector<8x128xf32>
    %268 = arith.subf %264, %267 : vector<8x128xf32>
    %269 = vector.broadcast %223 : f32 to vector<8x128xf32>
    %270 = arith.mulf %48, %269 : vector<8x128xf32>
    %271 = arith.mulf %270, %195 : vector<8x128xf32>
    %272 = vector.broadcast %224 : f32 to vector<8x128xf32>
    %273 = arith.mulf %54, %272 : vector<8x128xf32>
    %274 = arith.mulf %273, %202 : vector<8x128xf32>
    %275 = arith.subf %271, %274 : vector<8x128xf32>
    %276 = vector.broadcast %224 : f32 to vector<8x128xf32>
    %277 = arith.mulf %50, %276 : vector<8x128xf32>
    %278 = arith.mulf %277, %202 : vector<8x128xf32>
    %279 = vector.broadcast %225 : f32 to vector<8x128xf32>
    %280 = arith.mulf %56, %279 : vector<8x128xf32>
    %281 = arith.mulf %280, %209 : vector<8x128xf32>
    %282 = arith.subf %278, %281 : vector<8x128xf32>
    %283 = vector.broadcast %225 : f32 to vector<8x128xf32>
    %284 = arith.mulf %52, %283 : vector<8x128xf32>
    %285 = arith.mulf %284, %209 : vector<8x128xf32>
    %286 = vector.broadcast %226 : f32 to vector<8x128xf32>
    %287 = arith.mulf %58, %286 : vector<8x128xf32>
    %288 = arith.mulf %287, %216 : vector<8x128xf32>
    %289 = arith.subf %285, %288 : vector<8x128xf32>
    %c0_54 = arith.constant 0 : index
    %c24 = arith.constant 24 : index
    %290 = memref.load %arg2[%c0_54, %c24] : memref<4x36xf32, #tpu.memory_space<smem>>
    %c0_55 = arith.constant 0 : index
    %c25 = arith.constant 25 : index
    %291 = memref.load %arg2[%c0_55, %c25] : memref<4x36xf32, #tpu.memory_space<smem>>
    %c0_56 = arith.constant 0 : index
    %c26 = arith.constant 26 : index
    %292 = memref.load %arg2[%c0_56, %c26] : memref<4x36xf32, #tpu.memory_space<smem>>
    %c0_57 = arith.constant 0 : index
    %c27 = arith.constant 27 : index
    %293 = memref.load %arg2[%c0_57, %c27] : memref<4x36xf32, #tpu.memory_space<smem>>
    %c0_58 = arith.constant 0 : index
    %c28 = arith.constant 28 : index
    %294 = memref.load %arg2[%c0_58, %c28] : memref<4x36xf32, #tpu.memory_space<smem>>
    %c0_59 = arith.constant 0 : index
    %c29 = arith.constant 29 : index
    %295 = memref.load %arg2[%c0_59, %c29] : memref<4x36xf32, #tpu.memory_space<smem>>
    %c0_60 = arith.constant 0 : index
    %c30 = arith.constant 30 : index
    %296 = memref.load %arg2[%c0_60, %c30] : memref<4x36xf32, #tpu.memory_space<smem>>
    %c0_61 = arith.constant 0 : index
    %c31 = arith.constant 31 : index
    %297 = memref.load %arg2[%c0_61, %c31] : memref<4x36xf32, #tpu.memory_space<smem>>
    %c0_62 = arith.constant 0 : index
    %c32 = arith.constant 32 : index
    %298 = memref.load %arg2[%c0_62, %c32] : memref<4x36xf32, #tpu.memory_space<smem>>
    %299 = vector.broadcast %290 : f32 to vector<8x128xf32>
    %300 = arith.mulf %36, %299 : vector<8x128xf32>
    %301 = arith.mulf %300, %233 : vector<8x128xf32>
    %302 = vector.broadcast %291 : f32 to vector<8x128xf32>
    %303 = arith.mulf %44, %302 : vector<8x128xf32>
    %304 = arith.mulf %303, %240 : vector<8x128xf32>
    %305 = arith.subf %301, %304 : vector<8x128xf32>
    %306 = vector.broadcast %291 : f32 to vector<8x128xf32>
    %307 = arith.mulf %38, %306 : vector<8x128xf32>
    %308 = arith.mulf %307, %240 : vector<8x128xf32>
    %309 = vector.broadcast %292 : f32 to vector<8x128xf32>
    %310 = arith.mulf %46, %309 : vector<8x128xf32>
    %311 = arith.mulf %310, %247 : vector<8x128xf32>
    %312 = arith.subf %308, %311 : vector<8x128xf32>
    %313 = vector.broadcast %292 : f32 to vector<8x128xf32>
    %314 = arith.mulf %40, %313 : vector<8x128xf32>
    %315 = arith.mulf %314, %247 : vector<8x128xf32>
    %316 = vector.broadcast %293 : f32 to vector<8x128xf32>
    %317 = arith.mulf %48, %316 : vector<8x128xf32>
    %318 = arith.mulf %317, %254 : vector<8x128xf32>
    %319 = arith.subf %315, %318 : vector<8x128xf32>
    %320 = vector.broadcast %293 : f32 to vector<8x128xf32>
    %321 = arith.mulf %42, %320 : vector<8x128xf32>
    %322 = arith.mulf %321, %254 : vector<8x128xf32>
    %323 = vector.broadcast %294 : f32 to vector<8x128xf32>
    %324 = arith.mulf %50, %323 : vector<8x128xf32>
    %325 = arith.mulf %324, %261 : vector<8x128xf32>
    %326 = arith.subf %322, %325 : vector<8x128xf32>
    %327 = vector.broadcast %294 : f32 to vector<8x128xf32>
    %328 = arith.mulf %44, %327 : vector<8x128xf32>
    %329 = arith.mulf %328, %261 : vector<8x128xf32>
    %330 = vector.broadcast %295 : f32 to vector<8x128xf32>
    %331 = arith.mulf %52, %330 : vector<8x128xf32>
    %332 = arith.mulf %331, %268 : vector<8x128xf32>
    %333 = arith.subf %329, %332 : vector<8x128xf32>
    %334 = vector.broadcast %295 : f32 to vector<8x128xf32>
    %335 = arith.mulf %46, %334 : vector<8x128xf32>
    %336 = arith.mulf %335, %268 : vector<8x128xf32>
    %337 = vector.broadcast %296 : f32 to vector<8x128xf32>
    %338 = arith.mulf %54, %337 : vector<8x128xf32>
    %339 = arith.mulf %338, %275 : vector<8x128xf32>
    %340 = arith.subf %336, %339 : vector<8x128xf32>
    %341 = vector.broadcast %296 : f32 to vector<8x128xf32>
    %342 = arith.mulf %48, %341 : vector<8x128xf32>
    %343 = arith.mulf %342, %275 : vector<8x128xf32>
    %344 = vector.broadcast %297 : f32 to vector<8x128xf32>
    %345 = arith.mulf %56, %344 : vector<8x128xf32>
    %346 = arith.mulf %345, %282 : vector<8x128xf32>
    %347 = arith.subf %343, %346 : vector<8x128xf32>
    %348 = vector.broadcast %297 : f32 to vector<8x128xf32>
    %349 = arith.mulf %50, %348 : vector<8x128xf32>
    %350 = arith.mulf %349, %282 : vector<8x128xf32>
    %351 = vector.broadcast %298 : f32 to vector<8x128xf32>
    %352 = arith.mulf %58, %351 : vector<8x128xf32>
    %353 = arith.mulf %352, %289 : vector<8x128xf32>
    %354 = arith.subf %350, %353 : vector<8x128xf32>
    %c0_63 = arith.constant 0 : index
    %c0_64 = arith.constant 0 : index
    %355 = memref.load %arg4[%c0_63, %c0_64] : memref<2x32xf32, #tpu.memory_space<smem>>
    %356 = vector.broadcast %355 : f32 to vector<8x128xf32>
    %357 = arith.mulf %305, %356 : vector<8x128xf32>
    %c0_65 = arith.constant 0 : index
    %c1_66 = arith.constant 1 : index
    %358 = memref.load %arg4[%c0_65, %c1_66] : memref<2x32xf32, #tpu.memory_space<smem>>
    %359 = vector.broadcast %358 : f32 to vector<8x128xf32>
    %360 = arith.mulf %312, %359 : vector<8x128xf32>
    %361 = arith.addf %357, %360 : vector<8x128xf32>
    %c0_67 = arith.constant 0 : index
    %c2_68 = arith.constant 2 : index
    %362 = memref.load %arg4[%c0_67, %c2_68] : memref<2x32xf32, #tpu.memory_space<smem>>
    %363 = vector.broadcast %362 : f32 to vector<8x128xf32>
    %364 = arith.mulf %319, %363 : vector<8x128xf32>
    %365 = arith.addf %361, %364 : vector<8x128xf32>
    %c0_69 = arith.constant 0 : index
    %c3_70 = arith.constant 3 : index
    %366 = memref.load %arg4[%c0_69, %c3_70] : memref<2x32xf32, #tpu.memory_space<smem>>
    %367 = vector.broadcast %366 : f32 to vector<8x128xf32>
    %368 = arith.mulf %326, %367 : vector<8x128xf32>
    %369 = arith.addf %365, %368 : vector<8x128xf32>
    %c0_71 = arith.constant 0 : index
    %c4_72 = arith.constant 4 : index
    %370 = memref.load %arg4[%c0_71, %c4_72] : memref<2x32xf32, #tpu.memory_space<smem>>
    %371 = vector.broadcast %370 : f32 to vector<8x128xf32>
    %372 = arith.mulf %333, %371 : vector<8x128xf32>
    %373 = arith.addf %369, %372 : vector<8x128xf32>
    %c0_73 = arith.constant 0 : index
    %c5_74 = arith.constant 5 : index
    %374 = memref.load %arg4[%c0_73, %c5_74] : memref<2x32xf32, #tpu.memory_space<smem>>
    %375 = vector.broadcast %374 : f32 to vector<8x128xf32>
    %376 = arith.mulf %340, %375 : vector<8x128xf32>
    %377 = arith.addf %373, %376 : vector<8x128xf32>
    %c0_75 = arith.constant 0 : index
    %c6_76 = arith.constant 6 : index
    %378 = memref.load %arg4[%c0_75, %c6_76] : memref<2x32xf32, #tpu.memory_space<smem>>
    %379 = vector.broadcast %378 : f32 to vector<8x128xf32>
    %380 = arith.mulf %347, %379 : vector<8x128xf32>
    %381 = arith.addf %377, %380 : vector<8x128xf32>
    %c0_77 = arith.constant 0 : index
    %c7_78 = arith.constant 7 : index
    %382 = memref.load %arg4[%c0_77, %c7_78] : memref<2x32xf32, #tpu.memory_space<smem>>
    %383 = vector.broadcast %382 : f32 to vector<8x128xf32>
    %384 = arith.mulf %354, %383 : vector<8x128xf32>
    %385 = arith.addf %381, %384 : vector<8x128xf32>
    %386 = arith.addf %18, %385 : vector<8x128xf32>
    %c1_79 = arith.constant 1 : index
    %c0_80 = arith.constant 0 : index
    %387 = memref.load %arg4[%c1_79, %c0_80] : memref<2x32xf32, #tpu.memory_space<smem>>
    %388 = vector.broadcast %387 : f32 to vector<8x128xf32>
    %389 = arith.mulf %305, %388 : vector<8x128xf32>
    %c1_81 = arith.constant 1 : index
    %c1_82 = arith.constant 1 : index
    %390 = memref.load %arg4[%c1_81, %c1_82] : memref<2x32xf32, #tpu.memory_space<smem>>
    %391 = vector.broadcast %390 : f32 to vector<8x128xf32>
    %392 = arith.mulf %312, %391 : vector<8x128xf32>
    %393 = arith.addf %389, %392 : vector<8x128xf32>
    %c1_83 = arith.constant 1 : index
    %c2_84 = arith.constant 2 : index
    %394 = memref.load %arg4[%c1_83, %c2_84] : memref<2x32xf32, #tpu.memory_space<smem>>
    %395 = vector.broadcast %394 : f32 to vector<8x128xf32>
    %396 = arith.mulf %319, %395 : vector<8x128xf32>
    %397 = arith.addf %393, %396 : vector<8x128xf32>
    %c1_85 = arith.constant 1 : index
    %c3_86 = arith.constant 3 : index
    %398 = memref.load %arg4[%c1_85, %c3_86] : memref<2x32xf32, #tpu.memory_space<smem>>
    %399 = vector.broadcast %398 : f32 to vector<8x128xf32>
    %400 = arith.mulf %326, %399 : vector<8x128xf32>
    %401 = arith.addf %397, %400 : vector<8x128xf32>
    %c1_87 = arith.constant 1 : index
    %c4_88 = arith.constant 4 : index
    %402 = memref.load %arg4[%c1_87, %c4_88] : memref<2x32xf32, #tpu.memory_space<smem>>
    %403 = vector.broadcast %402 : f32 to vector<8x128xf32>
    %404 = arith.mulf %333, %403 : vector<8x128xf32>
    %405 = arith.addf %401, %404 : vector<8x128xf32>
    %c1_89 = arith.constant 1 : index
    %c5_90 = arith.constant 5 : index
    %406 = memref.load %arg4[%c1_89, %c5_90] : memref<2x32xf32, #tpu.memory_space<smem>>
    %407 = vector.broadcast %406 : f32 to vector<8x128xf32>
    %408 = arith.mulf %340, %407 : vector<8x128xf32>
    %409 = arith.addf %405, %408 : vector<8x128xf32>
    %c1_91 = arith.constant 1 : index
    %c6_92 = arith.constant 6 : index
    %410 = memref.load %arg4[%c1_91, %c6_92] : memref<2x32xf32, #tpu.memory_space<smem>>
    %411 = vector.broadcast %410 : f32 to vector<8x128xf32>
    %412 = arith.mulf %347, %411 : vector<8x128xf32>
    %413 = arith.addf %409, %412 : vector<8x128xf32>
    %c1_93 = arith.constant 1 : index
    %c7_94 = arith.constant 7 : index
    %414 = memref.load %arg4[%c1_93, %c7_94] : memref<2x32xf32, #tpu.memory_space<smem>>
    %415 = vector.broadcast %414 : f32 to vector<8x128xf32>
    %416 = arith.mulf %354, %415 : vector<8x128xf32>
    %417 = arith.addf %413, %416 : vector<8x128xf32>
    %418 = arith.addf %22, %417 : vector<8x128xf32>
    %c1_95 = arith.constant 1 : index
    %419 = arith.index_cast %1 : i32 to index
    %c0_96 = arith.constant 0 : index
    %420 = vector.load %arg5[%c1_95, %419, %c0_96] : memref<4x8x128xf32, #tpu.memory_space<vmem>>, vector<1x8x128xf32>
    %421 = vector.shape_cast %420 : vector<1x8x128xf32> to vector<8x128xf32>
    %cst_97 = arith.constant 5.000000e-01 : f32
    %422 = vector.broadcast %cst_97 : f32 to vector<8x128xf32>
    %423 = arith.mulf %422, %421 : vector<8x128xf32>
    %cst_98 = arith.constant 5.000000e-01 : f32
    %424 = vector.broadcast %cst_98 : f32 to vector<8x128xf32>
    %425 = arith.mulf %424, %421 : vector<8x128xf32>
    %426 = math.tanh %425 : vector<8x128xf32>
    %cst_99 = arith.constant 1.000000e+00 : f32
    %427 = vector.broadcast %cst_99 : f32 to vector<8x128xf32>
    %428 = arith.addf %426, %427 : vector<8x128xf32>
    %429 = arith.mulf %423, %428 : vector<8x128xf32>
    %c0_100 = arith.constant 0 : index
    %c1_101 = arith.constant 1 : index
    %430 = memref.load %arg3[%c0_100, %c1_101] : memref<2x4xf32, #tpu.memory_space<smem>>
    %431 = vector.broadcast %430 : f32 to vector<8x128xf32>
    %432 = arith.mulf %429, %431 : vector<8x128xf32>
    %433 = arith.addf %386, %432 : vector<8x128xf32>
    %c1_102 = arith.constant 1 : index
    %c1_103 = arith.constant 1 : index
    %434 = memref.load %arg3[%c1_102, %c1_103] : memref<2x4xf32, #tpu.memory_space<smem>>
    %435 = vector.broadcast %434 : f32 to vector<8x128xf32>
    %436 = arith.mulf %429, %435 : vector<8x128xf32>
    %437 = arith.addf %418, %436 : vector<8x128xf32>
    %c1_104 = arith.constant 1 : index
    %c0_105 = arith.constant 0 : index
    %438 = memref.load %arg1[%c1_104, %c0_105] : memref<4x12xf32, #tpu.memory_space<smem>>
    %c1_106 = arith.constant 1 : index
    %c1_107 = arith.constant 1 : index
    %439 = memref.load %arg1[%c1_106, %c1_107] : memref<4x12xf32, #tpu.memory_space<smem>>
    %c1_108 = arith.constant 1 : index
    %c2_109 = arith.constant 2 : index
    %440 = memref.load %arg1[%c1_108, %c2_109] : memref<4x12xf32, #tpu.memory_space<smem>>
    %c1_110 = arith.constant 1 : index
    %c3_111 = arith.constant 3 : index
    %441 = memref.load %arg1[%c1_110, %c3_111] : memref<4x12xf32, #tpu.memory_space<smem>>
    %c1_112 = arith.constant 1 : index
    %c4_113 = arith.constant 4 : index
    %442 = memref.load %arg1[%c1_112, %c4_113] : memref<4x12xf32, #tpu.memory_space<smem>>
    %c1_114 = arith.constant 1 : index
    %c5_115 = arith.constant 5 : index
    %443 = memref.load %arg1[%c1_114, %c5_115] : memref<4x12xf32, #tpu.memory_space<smem>>
    %c1_116 = arith.constant 1 : index
    %c6_117 = arith.constant 6 : index
    %444 = memref.load %arg1[%c1_116, %c6_117] : memref<4x12xf32, #tpu.memory_space<smem>>
    %c1_118 = arith.constant 1 : index
    %c7_119 = arith.constant 7 : index
    %445 = memref.load %arg1[%c1_118, %c7_119] : memref<4x12xf32, #tpu.memory_space<smem>>
    %c1_120 = arith.constant 1 : index
    %c8_121 = arith.constant 8 : index
    %446 = memref.load %arg1[%c1_120, %c8_121] : memref<4x12xf32, #tpu.memory_space<smem>>
    %c1_122 = arith.constant 1 : index
    %c9_123 = arith.constant 9 : index
    %447 = memref.load %arg1[%c1_122, %c9_123] : memref<4x12xf32, #tpu.memory_space<smem>>
    %c1_124 = arith.constant 1 : index
    %c10_125 = arith.constant 10 : index
    %448 = memref.load %arg1[%c1_124, %c10_125] : memref<4x12xf32, #tpu.memory_space<smem>>
    %c1_126 = arith.constant 1 : index
    %c11_127 = arith.constant 11 : index
    %449 = memref.load %arg1[%c1_126, %c11_127] : memref<4x12xf32, #tpu.memory_space<smem>>
    %450 = vector.broadcast %438 : f32 to vector<8x128xf32>
    %451 = arith.subf %421, %450 : vector<8x128xf32>
    %452 = vector.broadcast %439 : f32 to vector<8x128xf32>
    %453 = arith.subf %421, %452 : vector<8x128xf32>
    %454 = vector.broadcast %440 : f32 to vector<8x128xf32>
    %455 = arith.subf %421, %454 : vector<8x128xf32>
    %456 = vector.broadcast %441 : f32 to vector<8x128xf32>
    %457 = arith.subf %421, %456 : vector<8x128xf32>
    %458 = vector.broadcast %442 : f32 to vector<8x128xf32>
    %459 = arith.subf %421, %458 : vector<8x128xf32>
    %460 = vector.broadcast %443 : f32 to vector<8x128xf32>
    %461 = arith.subf %421, %460 : vector<8x128xf32>
    %462 = vector.broadcast %444 : f32 to vector<8x128xf32>
    %463 = arith.subf %421, %462 : vector<8x128xf32>
    %464 = vector.broadcast %445 : f32 to vector<8x128xf32>
    %465 = arith.subf %421, %464 : vector<8x128xf32>
    %466 = vector.broadcast %446 : f32 to vector<8x128xf32>
    %467 = arith.subf %421, %466 : vector<8x128xf32>
    %468 = vector.broadcast %447 : f32 to vector<8x128xf32>
    %469 = arith.subf %421, %468 : vector<8x128xf32>
    %470 = vector.broadcast %448 : f32 to vector<8x128xf32>
    %471 = arith.subf %421, %470 : vector<8x128xf32>
    %472 = vector.broadcast %449 : f32 to vector<8x128xf32>
    %473 = arith.subf %421, %472 : vector<8x128xf32>
    %474 = vector.broadcast %438 : f32 to vector<8x128xf32>
    %475 = arith.cmpf oge, %421, %474 : vector<8x128xf32>
    %476 = vector.broadcast %439 : f32 to vector<8x128xf32>
    %477 = arith.cmpf olt, %421, %476 : vector<8x128xf32>
    %478 = arith.andi %475, %477 : vector<8x128xi1>
    %479 = arith.extui %478 : vector<8x128xi1> to vector<8x128xi32>
    %480 = arith.sitofp %479 : vector<8x128xi32> to vector<8x128xf32>
    %481 = vector.broadcast %439 : f32 to vector<8x128xf32>
    %482 = arith.cmpf oge, %421, %481 : vector<8x128xf32>
    %483 = vector.broadcast %440 : f32 to vector<8x128xf32>
    %484 = arith.cmpf olt, %421, %483 : vector<8x128xf32>
    %485 = arith.andi %482, %484 : vector<8x128xi1>
    %486 = arith.extui %485 : vector<8x128xi1> to vector<8x128xi32>
    %487 = arith.sitofp %486 : vector<8x128xi32> to vector<8x128xf32>
    %488 = vector.broadcast %440 : f32 to vector<8x128xf32>
    %489 = arith.cmpf oge, %421, %488 : vector<8x128xf32>
    %490 = vector.broadcast %441 : f32 to vector<8x128xf32>
    %491 = arith.cmpf olt, %421, %490 : vector<8x128xf32>
    %492 = arith.andi %489, %491 : vector<8x128xi1>
    %493 = arith.extui %492 : vector<8x128xi1> to vector<8x128xi32>
    %494 = arith.sitofp %493 : vector<8x128xi32> to vector<8x128xf32>
    %495 = vector.broadcast %441 : f32 to vector<8x128xf32>
    %496 = arith.cmpf oge, %421, %495 : vector<8x128xf32>
    %497 = vector.broadcast %442 : f32 to vector<8x128xf32>
    %498 = arith.cmpf olt, %421, %497 : vector<8x128xf32>
    %499 = arith.andi %496, %498 : vector<8x128xi1>
    %500 = arith.extui %499 : vector<8x128xi1> to vector<8x128xi32>
    %501 = arith.sitofp %500 : vector<8x128xi32> to vector<8x128xf32>
    %502 = vector.broadcast %442 : f32 to vector<8x128xf32>
    %503 = arith.cmpf oge, %421, %502 : vector<8x128xf32>
    %504 = vector.broadcast %443 : f32 to vector<8x128xf32>
    %505 = arith.cmpf olt, %421, %504 : vector<8x128xf32>
    %506 = arith.andi %503, %505 : vector<8x128xi1>
    %507 = arith.extui %506 : vector<8x128xi1> to vector<8x128xi32>
    %508 = arith.sitofp %507 : vector<8x128xi32> to vector<8x128xf32>
    %509 = vector.broadcast %443 : f32 to vector<8x128xf32>
    %510 = arith.cmpf oge, %421, %509 : vector<8x128xf32>
    %511 = vector.broadcast %444 : f32 to vector<8x128xf32>
    %512 = arith.cmpf olt, %421, %511 : vector<8x128xf32>
    %513 = arith.andi %510, %512 : vector<8x128xi1>
    %514 = arith.extui %513 : vector<8x128xi1> to vector<8x128xi32>
    %515 = arith.sitofp %514 : vector<8x128xi32> to vector<8x128xf32>
    %516 = vector.broadcast %444 : f32 to vector<8x128xf32>
    %517 = arith.cmpf oge, %421, %516 : vector<8x128xf32>
    %518 = vector.broadcast %445 : f32 to vector<8x128xf32>
    %519 = arith.cmpf olt, %421, %518 : vector<8x128xf32>
    %520 = arith.andi %517, %519 : vector<8x128xi1>
    %521 = arith.extui %520 : vector<8x128xi1> to vector<8x128xi32>
    %522 = arith.sitofp %521 : vector<8x128xi32> to vector<8x128xf32>
    %523 = vector.broadcast %445 : f32 to vector<8x128xf32>
    %524 = arith.cmpf oge, %421, %523 : vector<8x128xf32>
    %525 = vector.broadcast %446 : f32 to vector<8x128xf32>
    %526 = arith.cmpf olt, %421, %525 : vector<8x128xf32>
    %527 = arith.andi %524, %526 : vector<8x128xi1>
    %528 = arith.extui %527 : vector<8x128xi1> to vector<8x128xi32>
    %529 = arith.sitofp %528 : vector<8x128xi32> to vector<8x128xf32>
    %530 = vector.broadcast %446 : f32 to vector<8x128xf32>
    %531 = arith.cmpf oge, %421, %530 : vector<8x128xf32>
    %532 = vector.broadcast %447 : f32 to vector<8x128xf32>
    %533 = arith.cmpf olt, %421, %532 : vector<8x128xf32>
    %534 = arith.andi %531, %533 : vector<8x128xi1>
    %535 = arith.extui %534 : vector<8x128xi1> to vector<8x128xi32>
    %536 = arith.sitofp %535 : vector<8x128xi32> to vector<8x128xf32>
    %537 = vector.broadcast %447 : f32 to vector<8x128xf32>
    %538 = arith.cmpf oge, %421, %537 : vector<8x128xf32>
    %539 = vector.broadcast %448 : f32 to vector<8x128xf32>
    %540 = arith.cmpf olt, %421, %539 : vector<8x128xf32>
    %541 = arith.andi %538, %540 : vector<8x128xi1>
    %542 = arith.extui %541 : vector<8x128xi1> to vector<8x128xi32>
    %543 = arith.sitofp %542 : vector<8x128xi32> to vector<8x128xf32>
    %544 = vector.broadcast %448 : f32 to vector<8x128xf32>
    %545 = arith.cmpf oge, %421, %544 : vector<8x128xf32>
    %546 = vector.broadcast %449 : f32 to vector<8x128xf32>
    %547 = arith.cmpf olt, %421, %546 : vector<8x128xf32>
    %548 = arith.andi %545, %547 : vector<8x128xi1>
    %549 = arith.extui %548 : vector<8x128xi1> to vector<8x128xi32>
    %550 = arith.sitofp %549 : vector<8x128xi32> to vector<8x128xf32>
    %c1_128 = arith.constant 1 : index
    %c0_129 = arith.constant 0 : index
    %551 = memref.load %arg2[%c1_128, %c0_129] : memref<4x36xf32, #tpu.memory_space<smem>>
    %c1_130 = arith.constant 1 : index
    %c1_131 = arith.constant 1 : index
    %552 = memref.load %arg2[%c1_130, %c1_131] : memref<4x36xf32, #tpu.memory_space<smem>>
    %c1_132 = arith.constant 1 : index
    %c2_133 = arith.constant 2 : index
    %553 = memref.load %arg2[%c1_132, %c2_133] : memref<4x36xf32, #tpu.memory_space<smem>>
    %c1_134 = arith.constant 1 : index
    %c3_135 = arith.constant 3 : index
    %554 = memref.load %arg2[%c1_134, %c3_135] : memref<4x36xf32, #tpu.memory_space<smem>>
    %c1_136 = arith.constant 1 : index
    %c4_137 = arith.constant 4 : index
    %555 = memref.load %arg2[%c1_136, %c4_137] : memref<4x36xf32, #tpu.memory_space<smem>>
    %c1_138 = arith.constant 1 : index
    %c5_139 = arith.constant 5 : index
    %556 = memref.load %arg2[%c1_138, %c5_139] : memref<4x36xf32, #tpu.memory_space<smem>>
    %c1_140 = arith.constant 1 : index
    %c6_141 = arith.constant 6 : index
    %557 = memref.load %arg2[%c1_140, %c6_141] : memref<4x36xf32, #tpu.memory_space<smem>>
    %c1_142 = arith.constant 1 : index
    %c7_143 = arith.constant 7 : index
    %558 = memref.load %arg2[%c1_142, %c7_143] : memref<4x36xf32, #tpu.memory_space<smem>>
    %c1_144 = arith.constant 1 : index
    %c8_145 = arith.constant 8 : index
    %559 = memref.load %arg2[%c1_144, %c8_145] : memref<4x36xf32, #tpu.memory_space<smem>>
    %c1_146 = arith.constant 1 : index
    %c9_147 = arith.constant 9 : index
    %560 = memref.load %arg2[%c1_146, %c9_147] : memref<4x36xf32, #tpu.memory_space<smem>>
    %c1_148 = arith.constant 1 : index
    %c10_149 = arith.constant 10 : index
    %561 = memref.load %arg2[%c1_148, %c10_149] : memref<4x36xf32, #tpu.memory_space<smem>>
    %562 = vector.broadcast %551 : f32 to vector<8x128xf32>
    %563 = arith.mulf %451, %562 : vector<8x128xf32>
    %564 = arith.mulf %563, %480 : vector<8x128xf32>
    %565 = vector.broadcast %552 : f32 to vector<8x128xf32>
    %566 = arith.mulf %455, %565 : vector<8x128xf32>
    %567 = arith.mulf %566, %487 : vector<8x128xf32>
    %568 = arith.subf %564, %567 : vector<8x128xf32>
    %569 = vector.broadcast %552 : f32 to vector<8x128xf32>
    %570 = arith.mulf %453, %569 : vector<8x128xf32>
    %571 = arith.mulf %570, %487 : vector<8x128xf32>
    %572 = vector.broadcast %553 : f32 to vector<8x128xf32>
    %573 = arith.mulf %457, %572 : vector<8x128xf32>
    %574 = arith.mulf %573, %494 : vector<8x128xf32>
    %575 = arith.subf %571, %574 : vector<8x128xf32>
    %576 = vector.broadcast %553 : f32 to vector<8x128xf32>
    %577 = arith.mulf %455, %576 : vector<8x128xf32>
    %578 = arith.mulf %577, %494 : vector<8x128xf32>
    %579 = vector.broadcast %554 : f32 to vector<8x128xf32>
    %580 = arith.mulf %459, %579 : vector<8x128xf32>
    %581 = arith.mulf %580, %501 : vector<8x128xf32>
    %582 = arith.subf %578, %581 : vector<8x128xf32>
    %583 = vector.broadcast %554 : f32 to vector<8x128xf32>
    %584 = arith.mulf %457, %583 : vector<8x128xf32>
    %585 = arith.mulf %584, %501 : vector<8x128xf32>
    %586 = vector.broadcast %555 : f32 to vector<8x128xf32>
    %587 = arith.mulf %461, %586 : vector<8x128xf32>
    %588 = arith.mulf %587, %508 : vector<8x128xf32>
    %589 = arith.subf %585, %588 : vector<8x128xf32>
    %590 = vector.broadcast %555 : f32 to vector<8x128xf32>
    %591 = arith.mulf %459, %590 : vector<8x128xf32>
    %592 = arith.mulf %591, %508 : vector<8x128xf32>
    %593 = vector.broadcast %556 : f32 to vector<8x128xf32>
    %594 = arith.mulf %463, %593 : vector<8x128xf32>
    %595 = arith.mulf %594, %515 : vector<8x128xf32>
    %596 = arith.subf %592, %595 : vector<8x128xf32>
    %597 = vector.broadcast %556 : f32 to vector<8x128xf32>
    %598 = arith.mulf %461, %597 : vector<8x128xf32>
    %599 = arith.mulf %598, %515 : vector<8x128xf32>
    %600 = vector.broadcast %557 : f32 to vector<8x128xf32>
    %601 = arith.mulf %465, %600 : vector<8x128xf32>
    %602 = arith.mulf %601, %522 : vector<8x128xf32>
    %603 = arith.subf %599, %602 : vector<8x128xf32>
    %604 = vector.broadcast %557 : f32 to vector<8x128xf32>
    %605 = arith.mulf %463, %604 : vector<8x128xf32>
    %606 = arith.mulf %605, %522 : vector<8x128xf32>
    %607 = vector.broadcast %558 : f32 to vector<8x128xf32>
    %608 = arith.mulf %467, %607 : vector<8x128xf32>
    %609 = arith.mulf %608, %529 : vector<8x128xf32>
    %610 = arith.subf %606, %609 : vector<8x128xf32>
    %611 = vector.broadcast %558 : f32 to vector<8x128xf32>
    %612 = arith.mulf %465, %611 : vector<8x128xf32>
    %613 = arith.mulf %612, %529 : vector<8x128xf32>
    %614 = vector.broadcast %559 : f32 to vector<8x128xf32>
    %615 = arith.mulf %469, %614 : vector<8x128xf32>
    %616 = arith.mulf %615, %536 : vector<8x128xf32>
    %617 = arith.subf %613, %616 : vector<8x128xf32>
    %618 = vector.broadcast %559 : f32 to vector<8x128xf32>
    %619 = arith.mulf %467, %618 : vector<8x128xf32>
    %620 = arith.mulf %619, %536 : vector<8x128xf32>
    %621 = vector.broadcast %560 : f32 to vector<8x128xf32>
    %622 = arith.mulf %471, %621 : vector<8x128xf32>
    %623 = arith.mulf %622, %543 : vector<8x128xf32>
    %624 = arith.subf %620, %623 : vector<8x128xf32>
    %625 = vector.broadcast %560 : f32 to vector<8x128xf32>
    %626 = arith.mulf %469, %625 : vector<8x128xf32>
    %627 = arith.mulf %626, %543 : vector<8x128xf32>
    %628 = vector.broadcast %561 : f32 to vector<8x128xf32>
    %629 = arith.mulf %473, %628 : vector<8x128xf32>
    %630 = arith.mulf %629, %550 : vector<8x128xf32>
    %631 = arith.subf %627, %630 : vector<8x128xf32>
    %c1_150 = arith.constant 1 : index
    %c12_151 = arith.constant 12 : index
    %632 = memref.load %arg2[%c1_150, %c12_151] : memref<4x36xf32, #tpu.memory_space<smem>>
    %c1_152 = arith.constant 1 : index
    %c13_153 = arith.constant 13 : index
    %633 = memref.load %arg2[%c1_152, %c13_153] : memref<4x36xf32, #tpu.memory_space<smem>>
    %c1_154 = arith.constant 1 : index
    %c14_155 = arith.constant 14 : index
    %634 = memref.load %arg2[%c1_154, %c14_155] : memref<4x36xf32, #tpu.memory_space<smem>>
    %c1_156 = arith.constant 1 : index
    %c15_157 = arith.constant 15 : index
    %635 = memref.load %arg2[%c1_156, %c15_157] : memref<4x36xf32, #tpu.memory_space<smem>>
    %c1_158 = arith.constant 1 : index
    %c16_159 = arith.constant 16 : index
    %636 = memref.load %arg2[%c1_158, %c16_159] : memref<4x36xf32, #tpu.memory_space<smem>>
    %c1_160 = arith.constant 1 : index
    %c17_161 = arith.constant 17 : index
    %637 = memref.load %arg2[%c1_160, %c17_161] : memref<4x36xf32, #tpu.memory_space<smem>>
    %c1_162 = arith.constant 1 : index
    %c18_163 = arith.constant 18 : index
    %638 = memref.load %arg2[%c1_162, %c18_163] : memref<4x36xf32, #tpu.memory_space<smem>>
    %c1_164 = arith.constant 1 : index
    %c19_165 = arith.constant 19 : index
    %639 = memref.load %arg2[%c1_164, %c19_165] : memref<4x36xf32, #tpu.memory_space<smem>>
    %c1_166 = arith.constant 1 : index
    %c20_167 = arith.constant 20 : index
    %640 = memref.load %arg2[%c1_166, %c20_167] : memref<4x36xf32, #tpu.memory_space<smem>>
    %c1_168 = arith.constant 1 : index
    %c21_169 = arith.constant 21 : index
    %641 = memref.load %arg2[%c1_168, %c21_169] : memref<4x36xf32, #tpu.memory_space<smem>>
    %642 = vector.broadcast %632 : f32 to vector<8x128xf32>
    %643 = arith.mulf %451, %642 : vector<8x128xf32>
    %644 = arith.mulf %643, %568 : vector<8x128xf32>
    %645 = vector.broadcast %633 : f32 to vector<8x128xf32>
    %646 = arith.mulf %457, %645 : vector<8x128xf32>
    %647 = arith.mulf %646, %575 : vector<8x128xf32>
    %648 = arith.subf %644, %647 : vector<8x128xf32>
    %649 = vector.broadcast %633 : f32 to vector<8x128xf32>
    %650 = arith.mulf %453, %649 : vector<8x128xf32>
    %651 = arith.mulf %650, %575 : vector<8x128xf32>
    %652 = vector.broadcast %634 : f32 to vector<8x128xf32>
    %653 = arith.mulf %459, %652 : vector<8x128xf32>
    %654 = arith.mulf %653, %582 : vector<8x128xf32>
    %655 = arith.subf %651, %654 : vector<8x128xf32>
    %656 = vector.broadcast %634 : f32 to vector<8x128xf32>
    %657 = arith.mulf %455, %656 : vector<8x128xf32>
    %658 = arith.mulf %657, %582 : vector<8x128xf32>
    %659 = vector.broadcast %635 : f32 to vector<8x128xf32>
    %660 = arith.mulf %461, %659 : vector<8x128xf32>
    %661 = arith.mulf %660, %589 : vector<8x128xf32>
    %662 = arith.subf %658, %661 : vector<8x128xf32>
    %663 = vector.broadcast %635 : f32 to vector<8x128xf32>
    %664 = arith.mulf %457, %663 : vector<8x128xf32>
    %665 = arith.mulf %664, %589 : vector<8x128xf32>
    %666 = vector.broadcast %636 : f32 to vector<8x128xf32>
    %667 = arith.mulf %463, %666 : vector<8x128xf32>
    %668 = arith.mulf %667, %596 : vector<8x128xf32>
    %669 = arith.subf %665, %668 : vector<8x128xf32>
    %670 = vector.broadcast %636 : f32 to vector<8x128xf32>
    %671 = arith.mulf %459, %670 : vector<8x128xf32>
    %672 = arith.mulf %671, %596 : vector<8x128xf32>
    %673 = vector.broadcast %637 : f32 to vector<8x128xf32>
    %674 = arith.mulf %465, %673 : vector<8x128xf32>
    %675 = arith.mulf %674, %603 : vector<8x128xf32>
    %676 = arith.subf %672, %675 : vector<8x128xf32>
    %677 = vector.broadcast %637 : f32 to vector<8x128xf32>
    %678 = arith.mulf %461, %677 : vector<8x128xf32>
    %679 = arith.mulf %678, %603 : vector<8x128xf32>
    %680 = vector.broadcast %638 : f32 to vector<8x128xf32>
    %681 = arith.mulf %467, %680 : vector<8x128xf32>
    %682 = arith.mulf %681, %610 : vector<8x128xf32>
    %683 = arith.subf %679, %682 : vector<8x128xf32>
    %684 = vector.broadcast %638 : f32 to vector<8x128xf32>
    %685 = arith.mulf %463, %684 : vector<8x128xf32>
    %686 = arith.mulf %685, %610 : vector<8x128xf32>
    %687 = vector.broadcast %639 : f32 to vector<8x128xf32>
    %688 = arith.mulf %469, %687 : vector<8x128xf32>
    %689 = arith.mulf %688, %617 : vector<8x128xf32>
    %690 = arith.subf %686, %689 : vector<8x128xf32>
    %691 = vector.broadcast %639 : f32 to vector<8x128xf32>
    %692 = arith.mulf %465, %691 : vector<8x128xf32>
    %693 = arith.mulf %692, %617 : vector<8x128xf32>
    %694 = vector.broadcast %640 : f32 to vector<8x128xf32>
    %695 = arith.mulf %471, %694 : vector<8x128xf32>
    %696 = arith.mulf %695, %624 : vector<8x128xf32>
    %697 = arith.subf %693, %696 : vector<8x128xf32>
    %698 = vector.broadcast %640 : f32 to vector<8x128xf32>
    %699 = arith.mulf %467, %698 : vector<8x128xf32>
    %700 = arith.mulf %699, %624 : vector<8x128xf32>
    %701 = vector.broadcast %641 : f32 to vector<8x128xf32>
    %702 = arith.mulf %473, %701 : vector<8x128xf32>
    %703 = arith.mulf %702, %631 : vector<8x128xf32>
    %704 = arith.subf %700, %703 : vector<8x128xf32>
    %c1_170 = arith.constant 1 : index
    %c24_171 = arith.constant 24 : index
    %705 = memref.load %arg2[%c1_170, %c24_171] : memref<4x36xf32, #tpu.memory_space<smem>>
    %c1_172 = arith.constant 1 : index
    %c25_173 = arith.constant 25 : index
    %706 = memref.load %arg2[%c1_172, %c25_173] : memref<4x36xf32, #tpu.memory_space<smem>>
    %c1_174 = arith.constant 1 : index
    %c26_175 = arith.constant 26 : index
    %707 = memref.load %arg2[%c1_174, %c26_175] : memref<4x36xf32, #tpu.memory_space<smem>>
    %c1_176 = arith.constant 1 : index
    %c27_177 = arith.constant 27 : index
    %708 = memref.load %arg2[%c1_176, %c27_177] : memref<4x36xf32, #tpu.memory_space<smem>>
    %c1_178 = arith.constant 1 : index
    %c28_179 = arith.constant 28 : index
    %709 = memref.load %arg2[%c1_178, %c28_179] : memref<4x36xf32, #tpu.memory_space<smem>>
    %c1_180 = arith.constant 1 : index
    %c29_181 = arith.constant 29 : index
    %710 = memref.load %arg2[%c1_180, %c29_181] : memref<4x36xf32, #tpu.memory_space<smem>>
    %c1_182 = arith.constant 1 : index
    %c30_183 = arith.constant 30 : index
    %711 = memref.load %arg2[%c1_182, %c30_183] : memref<4x36xf32, #tpu.memory_space<smem>>
    %c1_184 = arith.constant 1 : index
    %c31_185 = arith.constant 31 : index
    %712 = memref.load %arg2[%c1_184, %c31_185] : memref<4x36xf32, #tpu.memory_space<smem>>
    %c1_186 = arith.constant 1 : index
    %c32_187 = arith.constant 32 : index
    %713 = memref.load %arg2[%c1_186, %c32_187] : memref<4x36xf32, #tpu.memory_space<smem>>
    %714 = vector.broadcast %705 : f32 to vector<8x128xf32>
    %715 = arith.mulf %451, %714 : vector<8x128xf32>
    %716 = arith.mulf %715, %648 : vector<8x128xf32>
    %717 = vector.broadcast %706 : f32 to vector<8x128xf32>
    %718 = arith.mulf %459, %717 : vector<8x128xf32>
    %719 = arith.mulf %718, %655 : vector<8x128xf32>
    %720 = arith.subf %716, %719 : vector<8x128xf32>
    %721 = vector.broadcast %706 : f32 to vector<8x128xf32>
    %722 = arith.mulf %453, %721 : vector<8x128xf32>
    %723 = arith.mulf %722, %655 : vector<8x128xf32>
    %724 = vector.broadcast %707 : f32 to vector<8x128xf32>
    %725 = arith.mulf %461, %724 : vector<8x128xf32>
    %726 = arith.mulf %725, %662 : vector<8x128xf32>
    %727 = arith.subf %723, %726 : vector<8x128xf32>
    %728 = vector.broadcast %707 : f32 to vector<8x128xf32>
    %729 = arith.mulf %455, %728 : vector<8x128xf32>
    %730 = arith.mulf %729, %662 : vector<8x128xf32>
    %731 = vector.broadcast %708 : f32 to vector<8x128xf32>
    %732 = arith.mulf %463, %731 : vector<8x128xf32>
    %733 = arith.mulf %732, %669 : vector<8x128xf32>
    %734 = arith.subf %730, %733 : vector<8x128xf32>
    %735 = vector.broadcast %708 : f32 to vector<8x128xf32>
    %736 = arith.mulf %457, %735 : vector<8x128xf32>
    %737 = arith.mulf %736, %669 : vector<8x128xf32>
    %738 = vector.broadcast %709 : f32 to vector<8x128xf32>
    %739 = arith.mulf %465, %738 : vector<8x128xf32>
    %740 = arith.mulf %739, %676 : vector<8x128xf32>
    %741 = arith.subf %737, %740 : vector<8x128xf32>
    %742 = vector.broadcast %709 : f32 to vector<8x128xf32>
    %743 = arith.mulf %459, %742 : vector<8x128xf32>
    %744 = arith.mulf %743, %676 : vector<8x128xf32>
    %745 = vector.broadcast %710 : f32 to vector<8x128xf32>
    %746 = arith.mulf %467, %745 : vector<8x128xf32>
    %747 = arith.mulf %746, %683 : vector<8x128xf32>
    %748 = arith.subf %744, %747 : vector<8x128xf32>
    %749 = vector.broadcast %710 : f32 to vector<8x128xf32>
    %750 = arith.mulf %461, %749 : vector<8x128xf32>
    %751 = arith.mulf %750, %683 : vector<8x128xf32>
    %752 = vector.broadcast %711 : f32 to vector<8x128xf32>
    %753 = arith.mulf %469, %752 : vector<8x128xf32>
    %754 = arith.mulf %753, %690 : vector<8x128xf32>
    %755 = arith.subf %751, %754 : vector<8x128xf32>
    %756 = vector.broadcast %711 : f32 to vector<8x128xf32>
    %757 = arith.mulf %463, %756 : vector<8x128xf32>
    %758 = arith.mulf %757, %690 : vector<8x128xf32>
    %759 = vector.broadcast %712 : f32 to vector<8x128xf32>
    %760 = arith.mulf %471, %759 : vector<8x128xf32>
    %761 = arith.mulf %760, %697 : vector<8x128xf32>
    %762 = arith.subf %758, %761 : vector<8x128xf32>
    %763 = vector.broadcast %712 : f32 to vector<8x128xf32>
    %764 = arith.mulf %465, %763 : vector<8x128xf32>
    %765 = arith.mulf %764, %697 : vector<8x128xf32>
    %766 = vector.broadcast %713 : f32 to vector<8x128xf32>
    %767 = arith.mulf %473, %766 : vector<8x128xf32>
    %768 = arith.mulf %767, %704 : vector<8x128xf32>
    %769 = arith.subf %765, %768 : vector<8x128xf32>
    %c0_188 = arith.constant 0 : index
    %c8_189 = arith.constant 8 : index
    %770 = memref.load %arg4[%c0_188, %c8_189] : memref<2x32xf32, #tpu.memory_space<smem>>
    %771 = vector.broadcast %770 : f32 to vector<8x128xf32>
    %772 = arith.mulf %720, %771 : vector<8x128xf32>
    %c0_190 = arith.constant 0 : index
    %c9_191 = arith.constant 9 : index
    %773 = memref.load %arg4[%c0_190, %c9_191] : memref<2x32xf32, #tpu.memory_space<smem>>
    %774 = vector.broadcast %773 : f32 to vector<8x128xf32>
    %775 = arith.mulf %727, %774 : vector<8x128xf32>
    %776 = arith.addf %772, %775 : vector<8x128xf32>
    %c0_192 = arith.constant 0 : index
    %c10_193 = arith.constant 10 : index
    %777 = memref.load %arg4[%c0_192, %c10_193] : memref<2x32xf32, #tpu.memory_space<smem>>
    %778 = vector.broadcast %777 : f32 to vector<8x128xf32>
    %779 = arith.mulf %734, %778 : vector<8x128xf32>
    %780 = arith.addf %776, %779 : vector<8x128xf32>
    %c0_194 = arith.constant 0 : index
    %c11_195 = arith.constant 11 : index
    %781 = memref.load %arg4[%c0_194, %c11_195] : memref<2x32xf32, #tpu.memory_space<smem>>
    %782 = vector.broadcast %781 : f32 to vector<8x128xf32>
    %783 = arith.mulf %741, %782 : vector<8x128xf32>
    %784 = arith.addf %780, %783 : vector<8x128xf32>
    %c0_196 = arith.constant 0 : index
    %c12_197 = arith.constant 12 : index
    %785 = memref.load %arg4[%c0_196, %c12_197] : memref<2x32xf32, #tpu.memory_space<smem>>
    %786 = vector.broadcast %785 : f32 to vector<8x128xf32>
    %787 = arith.mulf %748, %786 : vector<8x128xf32>
    %788 = arith.addf %784, %787 : vector<8x128xf32>
    %c0_198 = arith.constant 0 : index
    %c13_199 = arith.constant 13 : index
    %789 = memref.load %arg4[%c0_198, %c13_199] : memref<2x32xf32, #tpu.memory_space<smem>>
    %790 = vector.broadcast %789 : f32 to vector<8x128xf32>
    %791 = arith.mulf %755, %790 : vector<8x128xf32>
    %792 = arith.addf %788, %791 : vector<8x128xf32>
    %c0_200 = arith.constant 0 : index
    %c14_201 = arith.constant 14 : index
    %793 = memref.load %arg4[%c0_200, %c14_201] : memref<2x32xf32, #tpu.memory_space<smem>>
    %794 = vector.broadcast %793 : f32 to vector<8x128xf32>
    %795 = arith.mulf %762, %794 : vector<8x128xf32>
    %796 = arith.addf %792, %795 : vector<8x128xf32>
    %c0_202 = arith.constant 0 : index
    %c15_203 = arith.constant 15 : index
    %797 = memref.load %arg4[%c0_202, %c15_203] : memref<2x32xf32, #tpu.memory_space<smem>>
    %798 = vector.broadcast %797 : f32 to vector<8x128xf32>
    %799 = arith.mulf %769, %798 : vector<8x128xf32>
    %800 = arith.addf %796, %799 : vector<8x128xf32>
    %801 = arith.addf %433, %800 : vector<8x128xf32>
    %c1_204 = arith.constant 1 : index
    %c8_205 = arith.constant 8 : index
    %802 = memref.load %arg4[%c1_204, %c8_205] : memref<2x32xf32, #tpu.memory_space<smem>>
    %803 = vector.broadcast %802 : f32 to vector<8x128xf32>
    %804 = arith.mulf %720, %803 : vector<8x128xf32>
    %c1_206 = arith.constant 1 : index
    %c9_207 = arith.constant 9 : index
    %805 = memref.load %arg4[%c1_206, %c9_207] : memref<2x32xf32, #tpu.memory_space<smem>>
    %806 = vector.broadcast %805 : f32 to vector<8x128xf32>
    %807 = arith.mulf %727, %806 : vector<8x128xf32>
    %808 = arith.addf %804, %807 : vector<8x128xf32>
    %c1_208 = arith.constant 1 : index
    %c10_209 = arith.constant 10 : index
    %809 = memref.load %arg4[%c1_208, %c10_209] : memref<2x32xf32, #tpu.memory_space<smem>>
    %810 = vector.broadcast %809 : f32 to vector<8x128xf32>
    %811 = arith.mulf %734, %810 : vector<8x128xf32>
    %812 = arith.addf %808, %811 : vector<8x128xf32>
    %c1_210 = arith.constant 1 : index
    %c11_211 = arith.constant 11 : index
    %813 = memref.load %arg4[%c1_210, %c11_211] : memref<2x32xf32, #tpu.memory_space<smem>>
    %814 = vector.broadcast %813 : f32 to vector<8x128xf32>
    %815 = arith.mulf %741, %814 : vector<8x128xf32>
    %816 = arith.addf %812, %815 : vector<8x128xf32>
    %c1_212 = arith.constant 1 : index
    %c12_213 = arith.constant 12 : index
    %817 = memref.load %arg4[%c1_212, %c12_213] : memref<2x32xf32, #tpu.memory_space<smem>>
    %818 = vector.broadcast %817 : f32 to vector<8x128xf32>
    %819 = arith.mulf %748, %818 : vector<8x128xf32>
    %820 = arith.addf %816, %819 : vector<8x128xf32>
    %c1_214 = arith.constant 1 : index
    %c13_215 = arith.constant 13 : index
    %821 = memref.load %arg4[%c1_214, %c13_215] : memref<2x32xf32, #tpu.memory_space<smem>>
    %822 = vector.broadcast %821 : f32 to vector<8x128xf32>
    %823 = arith.mulf %755, %822 : vector<8x128xf32>
    %824 = arith.addf %820, %823 : vector<8x128xf32>
    %c1_216 = arith.constant 1 : index
    %c14_217 = arith.constant 14 : index
    %825 = memref.load %arg4[%c1_216, %c14_217] : memref<2x32xf32, #tpu.memory_space<smem>>
    %826 = vector.broadcast %825 : f32 to vector<8x128xf32>
    %827 = arith.mulf %762, %826 : vector<8x128xf32>
    %828 = arith.addf %824, %827 : vector<8x128xf32>
    %c1_218 = arith.constant 1 : index
    %c15_219 = arith.constant 15 : index
    %829 = memref.load %arg4[%c1_218, %c15_219] : memref<2x32xf32, #tpu.memory_space<smem>>
    %830 = vector.broadcast %829 : f32 to vector<8x128xf32>
    %831 = arith.mulf %769, %830 : vector<8x128xf32>
    %832 = arith.addf %828, %831 : vector<8x128xf32>
    %833 = arith.addf %437, %832 : vector<8x128xf32>
    %c2_220 = arith.constant 2 : index
    %834 = arith.index_cast %1 : i32 to index
    %c0_221 = arith.constant 0 : index
    %835 = vector.load %arg5[%c2_220, %834, %c0_221] : memref<4x8x128xf32, #tpu.memory_space<vmem>>, vector<1x8x128xf32>
    %836 = vector.shape_cast %835 : vector<1x8x128xf32> to vector<8x128xf32>
    %cst_222 = arith.constant 5.000000e-01 : f32
    %837 = vector.broadcast %cst_222 : f32 to vector<8x128xf32>
    %838 = arith.mulf %837, %836 : vector<8x128xf32>
    %cst_223 = arith.constant 5.000000e-01 : f32
    %839 = vector.broadcast %cst_223 : f32 to vector<8x128xf32>
    %840 = arith.mulf %839, %836 : vector<8x128xf32>
    %841 = math.tanh %840 : vector<8x128xf32>
    %cst_224 = arith.constant 1.000000e+00 : f32
    %842 = vector.broadcast %cst_224 : f32 to vector<8x128xf32>
    %843 = arith.addf %841, %842 : vector<8x128xf32>
    %844 = arith.mulf %838, %843 : vector<8x128xf32>
    %c0_225 = arith.constant 0 : index
    %c2_226 = arith.constant 2 : index
    %845 = memref.load %arg3[%c0_225, %c2_226] : memref<2x4xf32, #tpu.memory_space<smem>>
    %846 = vector.broadcast %845 : f32 to vector<8x128xf32>
    %847 = arith.mulf %844, %846 : vector<8x128xf32>
    %848 = arith.addf %801, %847 : vector<8x128xf32>
    %c1_227 = arith.constant 1 : index
    %c2_228 = arith.constant 2 : index
    %849 = memref.load %arg3[%c1_227, %c2_228] : memref<2x4xf32, #tpu.memory_space<smem>>
    %850 = vector.broadcast %849 : f32 to vector<8x128xf32>
    %851 = arith.mulf %844, %850 : vector<8x128xf32>
    %852 = arith.addf %833, %851 : vector<8x128xf32>
    %c2_229 = arith.constant 2 : index
    %c0_230 = arith.constant 0 : index
    %853 = memref.load %arg1[%c2_229, %c0_230] : memref<4x12xf32, #tpu.memory_space<smem>>
    %c2_231 = arith.constant 2 : index
    %c1_232 = arith.constant 1 : index
    %854 = memref.load %arg1[%c2_231, %c1_232] : memref<4x12xf32, #tpu.memory_space<smem>>
    %c2_233 = arith.constant 2 : index
    %c2_234 = arith.constant 2 : index
    %855 = memref.load %arg1[%c2_233, %c2_234] : memref<4x12xf32, #tpu.memory_space<smem>>
    %c2_235 = arith.constant 2 : index
    %c3_236 = arith.constant 3 : index
    %856 = memref.load %arg1[%c2_235, %c3_236] : memref<4x12xf32, #tpu.memory_space<smem>>
    %c2_237 = arith.constant 2 : index
    %c4_238 = arith.constant 4 : index
    %857 = memref.load %arg1[%c2_237, %c4_238] : memref<4x12xf32, #tpu.memory_space<smem>>
    %c2_239 = arith.constant 2 : index
    %c5_240 = arith.constant 5 : index
    %858 = memref.load %arg1[%c2_239, %c5_240] : memref<4x12xf32, #tpu.memory_space<smem>>
    %c2_241 = arith.constant 2 : index
    %c6_242 = arith.constant 6 : index
    %859 = memref.load %arg1[%c2_241, %c6_242] : memref<4x12xf32, #tpu.memory_space<smem>>
    %c2_243 = arith.constant 2 : index
    %c7_244 = arith.constant 7 : index
    %860 = memref.load %arg1[%c2_243, %c7_244] : memref<4x12xf32, #tpu.memory_space<smem>>
    %c2_245 = arith.constant 2 : index
    %c8_246 = arith.constant 8 : index
    %861 = memref.load %arg1[%c2_245, %c8_246] : memref<4x12xf32, #tpu.memory_space<smem>>
    %c2_247 = arith.constant 2 : index
    %c9_248 = arith.constant 9 : index
    %862 = memref.load %arg1[%c2_247, %c9_248] : memref<4x12xf32, #tpu.memory_space<smem>>
    %c2_249 = arith.constant 2 : index
    %c10_250 = arith.constant 10 : index
    %863 = memref.load %arg1[%c2_249, %c10_250] : memref<4x12xf32, #tpu.memory_space<smem>>
    %c2_251 = arith.constant 2 : index
    %c11_252 = arith.constant 11 : index
    %864 = memref.load %arg1[%c2_251, %c11_252] : memref<4x12xf32, #tpu.memory_space<smem>>
    %865 = vector.broadcast %853 : f32 to vector<8x128xf32>
    %866 = arith.subf %836, %865 : vector<8x128xf32>
    %867 = vector.broadcast %854 : f32 to vector<8x128xf32>
    %868 = arith.subf %836, %867 : vector<8x128xf32>
    %869 = vector.broadcast %855 : f32 to vector<8x128xf32>
    %870 = arith.subf %836, %869 : vector<8x128xf32>
    %871 = vector.broadcast %856 : f32 to vector<8x128xf32>
    %872 = arith.subf %836, %871 : vector<8x128xf32>
    %873 = vector.broadcast %857 : f32 to vector<8x128xf32>
    %874 = arith.subf %836, %873 : vector<8x128xf32>
    %875 = vector.broadcast %858 : f32 to vector<8x128xf32>
    %876 = arith.subf %836, %875 : vector<8x128xf32>
    %877 = vector.broadcast %859 : f32 to vector<8x128xf32>
    %878 = arith.subf %836, %877 : vector<8x128xf32>
    %879 = vector.broadcast %860 : f32 to vector<8x128xf32>
    %880 = arith.subf %836, %879 : vector<8x128xf32>
    %881 = vector.broadcast %861 : f32 to vector<8x128xf32>
    %882 = arith.subf %836, %881 : vector<8x128xf32>
    %883 = vector.broadcast %862 : f32 to vector<8x128xf32>
    %884 = arith.subf %836, %883 : vector<8x128xf32>
    %885 = vector.broadcast %863 : f32 to vector<8x128xf32>
    %886 = arith.subf %836, %885 : vector<8x128xf32>
    %887 = vector.broadcast %864 : f32 to vector<8x128xf32>
    %888 = arith.subf %836, %887 : vector<8x128xf32>
    %889 = vector.broadcast %853 : f32 to vector<8x128xf32>
    %890 = arith.cmpf oge, %836, %889 : vector<8x128xf32>
    %891 = vector.broadcast %854 : f32 to vector<8x128xf32>
    %892 = arith.cmpf olt, %836, %891 : vector<8x128xf32>
    %893 = arith.andi %890, %892 : vector<8x128xi1>
    %894 = arith.extui %893 : vector<8x128xi1> to vector<8x128xi32>
    %895 = arith.sitofp %894 : vector<8x128xi32> to vector<8x128xf32>
    %896 = vector.broadcast %854 : f32 to vector<8x128xf32>
    %897 = arith.cmpf oge, %836, %896 : vector<8x128xf32>
    %898 = vector.broadcast %855 : f32 to vector<8x128xf32>
    %899 = arith.cmpf olt, %836, %898 : vector<8x128xf32>
    %900 = arith.andi %897, %899 : vector<8x128xi1>
    %901 = arith.extui %900 : vector<8x128xi1> to vector<8x128xi32>
    %902 = arith.sitofp %901 : vector<8x128xi32> to vector<8x128xf32>
    %903 = vector.broadcast %855 : f32 to vector<8x128xf32>
    %904 = arith.cmpf oge, %836, %903 : vector<8x128xf32>
    %905 = vector.broadcast %856 : f32 to vector<8x128xf32>
    %906 = arith.cmpf olt, %836, %905 : vector<8x128xf32>
    %907 = arith.andi %904, %906 : vector<8x128xi1>
    %908 = arith.extui %907 : vector<8x128xi1> to vector<8x128xi32>
    %909 = arith.sitofp %908 : vector<8x128xi32> to vector<8x128xf32>
    %910 = vector.broadcast %856 : f32 to vector<8x128xf32>
    %911 = arith.cmpf oge, %836, %910 : vector<8x128xf32>
    %912 = vector.broadcast %857 : f32 to vector<8x128xf32>
    %913 = arith.cmpf olt, %836, %912 : vector<8x128xf32>
    %914 = arith.andi %911, %913 : vector<8x128xi1>
    %915 = arith.extui %914 : vector<8x128xi1> to vector<8x128xi32>
    %916 = arith.sitofp %915 : vector<8x128xi32> to vector<8x128xf32>
    %917 = vector.broadcast %857 : f32 to vector<8x128xf32>
    %918 = arith.cmpf oge, %836, %917 : vector<8x128xf32>
    %919 = vector.broadcast %858 : f32 to vector<8x128xf32>
    %920 = arith.cmpf olt, %836, %919 : vector<8x128xf32>
    %921 = arith.andi %918, %920 : vector<8x128xi1>
    %922 = arith.extui %921 : vector<8x128xi1> to vector<8x128xi32>
    %923 = arith.sitofp %922 : vector<8x128xi32> to vector<8x128xf32>
    %924 = vector.broadcast %858 : f32 to vector<8x128xf32>
    %925 = arith.cmpf oge, %836, %924 : vector<8x128xf32>
    %926 = vector.broadcast %859 : f32 to vector<8x128xf32>
    %927 = arith.cmpf olt, %836, %926 : vector<8x128xf32>
    %928 = arith.andi %925, %927 : vector<8x128xi1>
    %929 = arith.extui %928 : vector<8x128xi1> to vector<8x128xi32>
    %930 = arith.sitofp %929 : vector<8x128xi32> to vector<8x128xf32>
    %931 = vector.broadcast %859 : f32 to vector<8x128xf32>
    %932 = arith.cmpf oge, %836, %931 : vector<8x128xf32>
    %933 = vector.broadcast %860 : f32 to vector<8x128xf32>
    %934 = arith.cmpf olt, %836, %933 : vector<8x128xf32>
    %935 = arith.andi %932, %934 : vector<8x128xi1>
    %936 = arith.extui %935 : vector<8x128xi1> to vector<8x128xi32>
    %937 = arith.sitofp %936 : vector<8x128xi32> to vector<8x128xf32>
    %938 = vector.broadcast %860 : f32 to vector<8x128xf32>
    %939 = arith.cmpf oge, %836, %938 : vector<8x128xf32>
    %940 = vector.broadcast %861 : f32 to vector<8x128xf32>
    %941 = arith.cmpf olt, %836, %940 : vector<8x128xf32>
    %942 = arith.andi %939, %941 : vector<8x128xi1>
    %943 = arith.extui %942 : vector<8x128xi1> to vector<8x128xi32>
    %944 = arith.sitofp %943 : vector<8x128xi32> to vector<8x128xf32>
    %945 = vector.broadcast %861 : f32 to vector<8x128xf32>
    %946 = arith.cmpf oge, %836, %945 : vector<8x128xf32>
    %947 = vector.broadcast %862 : f32 to vector<8x128xf32>
    %948 = arith.cmpf olt, %836, %947 : vector<8x128xf32>
    %949 = arith.andi %946, %948 : vector<8x128xi1>
    %950 = arith.extui %949 : vector<8x128xi1> to vector<8x128xi32>
    %951 = arith.sitofp %950 : vector<8x128xi32> to vector<8x128xf32>
    %952 = vector.broadcast %862 : f32 to vector<8x128xf32>
    %953 = arith.cmpf oge, %836, %952 : vector<8x128xf32>
    %954 = vector.broadcast %863 : f32 to vector<8x128xf32>
    %955 = arith.cmpf olt, %836, %954 : vector<8x128xf32>
    %956 = arith.andi %953, %955 : vector<8x128xi1>
    %957 = arith.extui %956 : vector<8x128xi1> to vector<8x128xi32>
    %958 = arith.sitofp %957 : vector<8x128xi32> to vector<8x128xf32>
    %959 = vector.broadcast %863 : f32 to vector<8x128xf32>
    %960 = arith.cmpf oge, %836, %959 : vector<8x128xf32>
    %961 = vector.broadcast %864 : f32 to vector<8x128xf32>
    %962 = arith.cmpf olt, %836, %961 : vector<8x128xf32>
    %963 = arith.andi %960, %962 : vector<8x128xi1>
    %964 = arith.extui %963 : vector<8x128xi1> to vector<8x128xi32>
    %965 = arith.sitofp %964 : vector<8x128xi32> to vector<8x128xf32>
    %c2_253 = arith.constant 2 : index
    %c0_254 = arith.constant 0 : index
    %966 = memref.load %arg2[%c2_253, %c0_254] : memref<4x36xf32, #tpu.memory_space<smem>>
    %c2_255 = arith.constant 2 : index
    %c1_256 = arith.constant 1 : index
    %967 = memref.load %arg2[%c2_255, %c1_256] : memref<4x36xf32, #tpu.memory_space<smem>>
    %c2_257 = arith.constant 2 : index
    %c2_258 = arith.constant 2 : index
    %968 = memref.load %arg2[%c2_257, %c2_258] : memref<4x36xf32, #tpu.memory_space<smem>>
    %c2_259 = arith.constant 2 : index
    %c3_260 = arith.constant 3 : index
    %969 = memref.load %arg2[%c2_259, %c3_260] : memref<4x36xf32, #tpu.memory_space<smem>>
    %c2_261 = arith.constant 2 : index
    %c4_262 = arith.constant 4 : index
    %970 = memref.load %arg2[%c2_261, %c4_262] : memref<4x36xf32, #tpu.memory_space<smem>>
    %c2_263 = arith.constant 2 : index
    %c5_264 = arith.constant 5 : index
    %971 = memref.load %arg2[%c2_263, %c5_264] : memref<4x36xf32, #tpu.memory_space<smem>>
    %c2_265 = arith.constant 2 : index
    %c6_266 = arith.constant 6 : index
    %972 = memref.load %arg2[%c2_265, %c6_266] : memref<4x36xf32, #tpu.memory_space<smem>>
    %c2_267 = arith.constant 2 : index
    %c7_268 = arith.constant 7 : index
    %973 = memref.load %arg2[%c2_267, %c7_268] : memref<4x36xf32, #tpu.memory_space<smem>>
    %c2_269 = arith.constant 2 : index
    %c8_270 = arith.constant 8 : index
    %974 = memref.load %arg2[%c2_269, %c8_270] : memref<4x36xf32, #tpu.memory_space<smem>>
    %c2_271 = arith.constant 2 : index
    %c9_272 = arith.constant 9 : index
    %975 = memref.load %arg2[%c2_271, %c9_272] : memref<4x36xf32, #tpu.memory_space<smem>>
    %c2_273 = arith.constant 2 : index
    %c10_274 = arith.constant 10 : index
    %976 = memref.load %arg2[%c2_273, %c10_274] : memref<4x36xf32, #tpu.memory_space<smem>>
    %977 = vector.broadcast %966 : f32 to vector<8x128xf32>
    %978 = arith.mulf %866, %977 : vector<8x128xf32>
    %979 = arith.mulf %978, %895 : vector<8x128xf32>
    %980 = vector.broadcast %967 : f32 to vector<8x128xf32>
    %981 = arith.mulf %870, %980 : vector<8x128xf32>
    %982 = arith.mulf %981, %902 : vector<8x128xf32>
    %983 = arith.subf %979, %982 : vector<8x128xf32>
    %984 = vector.broadcast %967 : f32 to vector<8x128xf32>
    %985 = arith.mulf %868, %984 : vector<8x128xf32>
    %986 = arith.mulf %985, %902 : vector<8x128xf32>
    %987 = vector.broadcast %968 : f32 to vector<8x128xf32>
    %988 = arith.mulf %872, %987 : vector<8x128xf32>
    %989 = arith.mulf %988, %909 : vector<8x128xf32>
    %990 = arith.subf %986, %989 : vector<8x128xf32>
    %991 = vector.broadcast %968 : f32 to vector<8x128xf32>
    %992 = arith.mulf %870, %991 : vector<8x128xf32>
    %993 = arith.mulf %992, %909 : vector<8x128xf32>
    %994 = vector.broadcast %969 : f32 to vector<8x128xf32>
    %995 = arith.mulf %874, %994 : vector<8x128xf32>
    %996 = arith.mulf %995, %916 : vector<8x128xf32>
    %997 = arith.subf %993, %996 : vector<8x128xf32>
    %998 = vector.broadcast %969 : f32 to vector<8x128xf32>
    %999 = arith.mulf %872, %998 : vector<8x128xf32>
    %1000 = arith.mulf %999, %916 : vector<8x128xf32>
    %1001 = vector.broadcast %970 : f32 to vector<8x128xf32>
    %1002 = arith.mulf %876, %1001 : vector<8x128xf32>
    %1003 = arith.mulf %1002, %923 : vector<8x128xf32>
    %1004 = arith.subf %1000, %1003 : vector<8x128xf32>
    %1005 = vector.broadcast %970 : f32 to vector<8x128xf32>
    %1006 = arith.mulf %874, %1005 : vector<8x128xf32>
    %1007 = arith.mulf %1006, %923 : vector<8x128xf32>
    %1008 = vector.broadcast %971 : f32 to vector<8x128xf32>
    %1009 = arith.mulf %878, %1008 : vector<8x128xf32>
    %1010 = arith.mulf %1009, %930 : vector<8x128xf32>
    %1011 = arith.subf %1007, %1010 : vector<8x128xf32>
    %1012 = vector.broadcast %971 : f32 to vector<8x128xf32>
    %1013 = arith.mulf %876, %1012 : vector<8x128xf32>
    %1014 = arith.mulf %1013, %930 : vector<8x128xf32>
    %1015 = vector.broadcast %972 : f32 to vector<8x128xf32>
    %1016 = arith.mulf %880, %1015 : vector<8x128xf32>
    %1017 = arith.mulf %1016, %937 : vector<8x128xf32>
    %1018 = arith.subf %1014, %1017 : vector<8x128xf32>
    %1019 = vector.broadcast %972 : f32 to vector<8x128xf32>
    %1020 = arith.mulf %878, %1019 : vector<8x128xf32>
    %1021 = arith.mulf %1020, %937 : vector<8x128xf32>
    %1022 = vector.broadcast %973 : f32 to vector<8x128xf32>
    %1023 = arith.mulf %882, %1022 : vector<8x128xf32>
    %1024 = arith.mulf %1023, %944 : vector<8x128xf32>
    %1025 = arith.subf %1021, %1024 : vector<8x128xf32>
    %1026 = vector.broadcast %973 : f32 to vector<8x128xf32>
    %1027 = arith.mulf %880, %1026 : vector<8x128xf32>
    %1028 = arith.mulf %1027, %944 : vector<8x128xf32>
    %1029 = vector.broadcast %974 : f32 to vector<8x128xf32>
    %1030 = arith.mulf %884, %1029 : vector<8x128xf32>
    %1031 = arith.mulf %1030, %951 : vector<8x128xf32>
    %1032 = arith.subf %1028, %1031 : vector<8x128xf32>
    %1033 = vector.broadcast %974 : f32 to vector<8x128xf32>
    %1034 = arith.mulf %882, %1033 : vector<8x128xf32>
    %1035 = arith.mulf %1034, %951 : vector<8x128xf32>
    %1036 = vector.broadcast %975 : f32 to vector<8x128xf32>
    %1037 = arith.mulf %886, %1036 : vector<8x128xf32>
    %1038 = arith.mulf %1037, %958 : vector<8x128xf32>
    %1039 = arith.subf %1035, %1038 : vector<8x128xf32>
    %1040 = vector.broadcast %975 : f32 to vector<8x128xf32>
    %1041 = arith.mulf %884, %1040 : vector<8x128xf32>
    %1042 = arith.mulf %1041, %958 : vector<8x128xf32>
    %1043 = vector.broadcast %976 : f32 to vector<8x128xf32>
    %1044 = arith.mulf %888, %1043 : vector<8x128xf32>
    %1045 = arith.mulf %1044, %965 : vector<8x128xf32>
    %1046 = arith.subf %1042, %1045 : vector<8x128xf32>
    %c2_275 = arith.constant 2 : index
    %c12_276 = arith.constant 12 : index
    %1047 = memref.load %arg2[%c2_275, %c12_276] : memref<4x36xf32, #tpu.memory_space<smem>>
    %c2_277 = arith.constant 2 : index
    %c13_278 = arith.constant 13 : index
    %1048 = memref.load %arg2[%c2_277, %c13_278] : memref<4x36xf32, #tpu.memory_space<smem>>
    %c2_279 = arith.constant 2 : index
    %c14_280 = arith.constant 14 : index
    %1049 = memref.load %arg2[%c2_279, %c14_280] : memref<4x36xf32, #tpu.memory_space<smem>>
    %c2_281 = arith.constant 2 : index
    %c15_282 = arith.constant 15 : index
    %1050 = memref.load %arg2[%c2_281, %c15_282] : memref<4x36xf32, #tpu.memory_space<smem>>
    %c2_283 = arith.constant 2 : index
    %c16_284 = arith.constant 16 : index
    %1051 = memref.load %arg2[%c2_283, %c16_284] : memref<4x36xf32, #tpu.memory_space<smem>>
    %c2_285 = arith.constant 2 : index
    %c17_286 = arith.constant 17 : index
    %1052 = memref.load %arg2[%c2_285, %c17_286] : memref<4x36xf32, #tpu.memory_space<smem>>
    %c2_287 = arith.constant 2 : index
    %c18_288 = arith.constant 18 : index
    %1053 = memref.load %arg2[%c2_287, %c18_288] : memref<4x36xf32, #tpu.memory_space<smem>>
    %c2_289 = arith.constant 2 : index
    %c19_290 = arith.constant 19 : index
    %1054 = memref.load %arg2[%c2_289, %c19_290] : memref<4x36xf32, #tpu.memory_space<smem>>
    %c2_291 = arith.constant 2 : index
    %c20_292 = arith.constant 20 : index
    %1055 = memref.load %arg2[%c2_291, %c20_292] : memref<4x36xf32, #tpu.memory_space<smem>>
    %c2_293 = arith.constant 2 : index
    %c21_294 = arith.constant 21 : index
    %1056 = memref.load %arg2[%c2_293, %c21_294] : memref<4x36xf32, #tpu.memory_space<smem>>
    %1057 = vector.broadcast %1047 : f32 to vector<8x128xf32>
    %1058 = arith.mulf %866, %1057 : vector<8x128xf32>
    %1059 = arith.mulf %1058, %983 : vector<8x128xf32>
    %1060 = vector.broadcast %1048 : f32 to vector<8x128xf32>
    %1061 = arith.mulf %872, %1060 : vector<8x128xf32>
    %1062 = arith.mulf %1061, %990 : vector<8x128xf32>
    %1063 = arith.subf %1059, %1062 : vector<8x128xf32>
    %1064 = vector.broadcast %1048 : f32 to vector<8x128xf32>
    %1065 = arith.mulf %868, %1064 : vector<8x128xf32>
    %1066 = arith.mulf %1065, %990 : vector<8x128xf32>
    %1067 = vector.broadcast %1049 : f32 to vector<8x128xf32>
    %1068 = arith.mulf %874, %1067 : vector<8x128xf32>
    %1069 = arith.mulf %1068, %997 : vector<8x128xf32>
    %1070 = arith.subf %1066, %1069 : vector<8x128xf32>
    %1071 = vector.broadcast %1049 : f32 to vector<8x128xf32>
    %1072 = arith.mulf %870, %1071 : vector<8x128xf32>
    %1073 = arith.mulf %1072, %997 : vector<8x128xf32>
    %1074 = vector.broadcast %1050 : f32 to vector<8x128xf32>
    %1075 = arith.mulf %876, %1074 : vector<8x128xf32>
    %1076 = arith.mulf %1075, %1004 : vector<8x128xf32>
    %1077 = arith.subf %1073, %1076 : vector<8x128xf32>
    %1078 = vector.broadcast %1050 : f32 to vector<8x128xf32>
    %1079 = arith.mulf %872, %1078 : vector<8x128xf32>
    %1080 = arith.mulf %1079, %1004 : vector<8x128xf32>
    %1081 = vector.broadcast %1051 : f32 to vector<8x128xf32>
    %1082 = arith.mulf %878, %1081 : vector<8x128xf32>
    %1083 = arith.mulf %1082, %1011 : vector<8x128xf32>
    %1084 = arith.subf %1080, %1083 : vector<8x128xf32>
    %1085 = vector.broadcast %1051 : f32 to vector<8x128xf32>
    %1086 = arith.mulf %874, %1085 : vector<8x128xf32>
    %1087 = arith.mulf %1086, %1011 : vector<8x128xf32>
    %1088 = vector.broadcast %1052 : f32 to vector<8x128xf32>
    %1089 = arith.mulf %880, %1088 : vector<8x128xf32>
    %1090 = arith.mulf %1089, %1018 : vector<8x128xf32>
    %1091 = arith.subf %1087, %1090 : vector<8x128xf32>
    %1092 = vector.broadcast %1052 : f32 to vector<8x128xf32>
    %1093 = arith.mulf %876, %1092 : vector<8x128xf32>
    %1094 = arith.mulf %1093, %1018 : vector<8x128xf32>
    %1095 = vector.broadcast %1053 : f32 to vector<8x128xf32>
    %1096 = arith.mulf %882, %1095 : vector<8x128xf32>
    %1097 = arith.mulf %1096, %1025 : vector<8x128xf32>
    %1098 = arith.subf %1094, %1097 : vector<8x128xf32>
    %1099 = vector.broadcast %1053 : f32 to vector<8x128xf32>
    %1100 = arith.mulf %878, %1099 : vector<8x128xf32>
    %1101 = arith.mulf %1100, %1025 : vector<8x128xf32>
    %1102 = vector.broadcast %1054 : f32 to vector<8x128xf32>
    %1103 = arith.mulf %884, %1102 : vector<8x128xf32>
    %1104 = arith.mulf %1103, %1032 : vector<8x128xf32>
    %1105 = arith.subf %1101, %1104 : vector<8x128xf32>
    %1106 = vector.broadcast %1054 : f32 to vector<8x128xf32>
    %1107 = arith.mulf %880, %1106 : vector<8x128xf32>
    %1108 = arith.mulf %1107, %1032 : vector<8x128xf32>
    %1109 = vector.broadcast %1055 : f32 to vector<8x128xf32>
    %1110 = arith.mulf %886, %1109 : vector<8x128xf32>
    %1111 = arith.mulf %1110, %1039 : vector<8x128xf32>
    %1112 = arith.subf %1108, %1111 : vector<8x128xf32>
    %1113 = vector.broadcast %1055 : f32 to vector<8x128xf32>
    %1114 = arith.mulf %882, %1113 : vector<8x128xf32>
    %1115 = arith.mulf %1114, %1039 : vector<8x128xf32>
    %1116 = vector.broadcast %1056 : f32 to vector<8x128xf32>
    %1117 = arith.mulf %888, %1116 : vector<8x128xf32>
    %1118 = arith.mulf %1117, %1046 : vector<8x128xf32>
    %1119 = arith.subf %1115, %1118 : vector<8x128xf32>
    %c2_295 = arith.constant 2 : index
    %c24_296 = arith.constant 24 : index
    %1120 = memref.load %arg2[%c2_295, %c24_296] : memref<4x36xf32, #tpu.memory_space<smem>>
    %c2_297 = arith.constant 2 : index
    %c25_298 = arith.constant 25 : index
    %1121 = memref.load %arg2[%c2_297, %c25_298] : memref<4x36xf32, #tpu.memory_space<smem>>
    %c2_299 = arith.constant 2 : index
    %c26_300 = arith.constant 26 : index
    %1122 = memref.load %arg2[%c2_299, %c26_300] : memref<4x36xf32, #tpu.memory_space<smem>>
    %c2_301 = arith.constant 2 : index
    %c27_302 = arith.constant 27 : index
    %1123 = memref.load %arg2[%c2_301, %c27_302] : memref<4x36xf32, #tpu.memory_space<smem>>
    %c2_303 = arith.constant 2 : index
    %c28_304 = arith.constant 28 : index
    %1124 = memref.load %arg2[%c2_303, %c28_304] : memref<4x36xf32, #tpu.memory_space<smem>>
    %c2_305 = arith.constant 2 : index
    %c29_306 = arith.constant 29 : index
    %1125 = memref.load %arg2[%c2_305, %c29_306] : memref<4x36xf32, #tpu.memory_space<smem>>
    %c2_307 = arith.constant 2 : index
    %c30_308 = arith.constant 30 : index
    %1126 = memref.load %arg2[%c2_307, %c30_308] : memref<4x36xf32, #tpu.memory_space<smem>>
    %c2_309 = arith.constant 2 : index
    %c31_310 = arith.constant 31 : index
    %1127 = memref.load %arg2[%c2_309, %c31_310] : memref<4x36xf32, #tpu.memory_space<smem>>
    %c2_311 = arith.constant 2 : index
    %c32_312 = arith.constant 32 : index
    %1128 = memref.load %arg2[%c2_311, %c32_312] : memref<4x36xf32, #tpu.memory_space<smem>>
    %1129 = vector.broadcast %1120 : f32 to vector<8x128xf32>
    %1130 = arith.mulf %866, %1129 : vector<8x128xf32>
    %1131 = arith.mulf %1130, %1063 : vector<8x128xf32>
    %1132 = vector.broadcast %1121 : f32 to vector<8x128xf32>
    %1133 = arith.mulf %874, %1132 : vector<8x128xf32>
    %1134 = arith.mulf %1133, %1070 : vector<8x128xf32>
    %1135 = arith.subf %1131, %1134 : vector<8x128xf32>
    %1136 = vector.broadcast %1121 : f32 to vector<8x128xf32>
    %1137 = arith.mulf %868, %1136 : vector<8x128xf32>
    %1138 = arith.mulf %1137, %1070 : vector<8x128xf32>
    %1139 = vector.broadcast %1122 : f32 to vector<8x128xf32>
    %1140 = arith.mulf %876, %1139 : vector<8x128xf32>
    %1141 = arith.mulf %1140, %1077 : vector<8x128xf32>
    %1142 = arith.subf %1138, %1141 : vector<8x128xf32>
    %1143 = vector.broadcast %1122 : f32 to vector<8x128xf32>
    %1144 = arith.mulf %870, %1143 : vector<8x128xf32>
    %1145 = arith.mulf %1144, %1077 : vector<8x128xf32>
    %1146 = vector.broadcast %1123 : f32 to vector<8x128xf32>
    %1147 = arith.mulf %878, %1146 : vector<8x128xf32>
    %1148 = arith.mulf %1147, %1084 : vector<8x128xf32>
    %1149 = arith.subf %1145, %1148 : vector<8x128xf32>
    %1150 = vector.broadcast %1123 : f32 to vector<8x128xf32>
    %1151 = arith.mulf %872, %1150 : vector<8x128xf32>
    %1152 = arith.mulf %1151, %1084 : vector<8x128xf32>
    %1153 = vector.broadcast %1124 : f32 to vector<8x128xf32>
    %1154 = arith.mulf %880, %1153 : vector<8x128xf32>
    %1155 = arith.mulf %1154, %1091 : vector<8x128xf32>
    %1156 = arith.subf %1152, %1155 : vector<8x128xf32>
    %1157 = vector.broadcast %1124 : f32 to vector<8x128xf32>
    %1158 = arith.mulf %874, %1157 : vector<8x128xf32>
    %1159 = arith.mulf %1158, %1091 : vector<8x128xf32>
    %1160 = vector.broadcast %1125 : f32 to vector<8x128xf32>
    %1161 = arith.mulf %882, %1160 : vector<8x128xf32>
    %1162 = arith.mulf %1161, %1098 : vector<8x128xf32>
    %1163 = arith.subf %1159, %1162 : vector<8x128xf32>
    %1164 = vector.broadcast %1125 : f32 to vector<8x128xf32>
    %1165 = arith.mulf %876, %1164 : vector<8x128xf32>
    %1166 = arith.mulf %1165, %1098 : vector<8x128xf32>
    %1167 = vector.broadcast %1126 : f32 to vector<8x128xf32>
    %1168 = arith.mulf %884, %1167 : vector<8x128xf32>
    %1169 = arith.mulf %1168, %1105 : vector<8x128xf32>
    %1170 = arith.subf %1166, %1169 : vector<8x128xf32>
    %1171 = vector.broadcast %1126 : f32 to vector<8x128xf32>
    %1172 = arith.mulf %878, %1171 : vector<8x128xf32>
    %1173 = arith.mulf %1172, %1105 : vector<8x128xf32>
    %1174 = vector.broadcast %1127 : f32 to vector<8x128xf32>
    %1175 = arith.mulf %886, %1174 : vector<8x128xf32>
    %1176 = arith.mulf %1175, %1112 : vector<8x128xf32>
    %1177 = arith.subf %1173, %1176 : vector<8x128xf32>
    %1178 = vector.broadcast %1127 : f32 to vector<8x128xf32>
    %1179 = arith.mulf %880, %1178 : vector<8x128xf32>
    %1180 = arith.mulf %1179, %1112 : vector<8x128xf32>
    %1181 = vector.broadcast %1128 : f32 to vector<8x128xf32>
    %1182 = arith.mulf %888, %1181 : vector<8x128xf32>
    %1183 = arith.mulf %1182, %1119 : vector<8x128xf32>
    %1184 = arith.subf %1180, %1183 : vector<8x128xf32>
    %c0_313 = arith.constant 0 : index
    %c16_314 = arith.constant 16 : index
    %1185 = memref.load %arg4[%c0_313, %c16_314] : memref<2x32xf32, #tpu.memory_space<smem>>
    %1186 = vector.broadcast %1185 : f32 to vector<8x128xf32>
    %1187 = arith.mulf %1135, %1186 : vector<8x128xf32>
    %c0_315 = arith.constant 0 : index
    %c17_316 = arith.constant 17 : index
    %1188 = memref.load %arg4[%c0_315, %c17_316] : memref<2x32xf32, #tpu.memory_space<smem>>
    %1189 = vector.broadcast %1188 : f32 to vector<8x128xf32>
    %1190 = arith.mulf %1142, %1189 : vector<8x128xf32>
    %1191 = arith.addf %1187, %1190 : vector<8x128xf32>
    %c0_317 = arith.constant 0 : index
    %c18_318 = arith.constant 18 : index
    %1192 = memref.load %arg4[%c0_317, %c18_318] : memref<2x32xf32, #tpu.memory_space<smem>>
    %1193 = vector.broadcast %1192 : f32 to vector<8x128xf32>
    %1194 = arith.mulf %1149, %1193 : vector<8x128xf32>
    %1195 = arith.addf %1191, %1194 : vector<8x128xf32>
    %c0_319 = arith.constant 0 : index
    %c19_320 = arith.constant 19 : index
    %1196 = memref.load %arg4[%c0_319, %c19_320] : memref<2x32xf32, #tpu.memory_space<smem>>
    %1197 = vector.broadcast %1196 : f32 to vector<8x128xf32>
    %1198 = arith.mulf %1156, %1197 : vector<8x128xf32>
    %1199 = arith.addf %1195, %1198 : vector<8x128xf32>
    %c0_321 = arith.constant 0 : index
    %c20_322 = arith.constant 20 : index
    %1200 = memref.load %arg4[%c0_321, %c20_322] : memref<2x32xf32, #tpu.memory_space<smem>>
    %1201 = vector.broadcast %1200 : f32 to vector<8x128xf32>
    %1202 = arith.mulf %1163, %1201 : vector<8x128xf32>
    %1203 = arith.addf %1199, %1202 : vector<8x128xf32>
    %c0_323 = arith.constant 0 : index
    %c21_324 = arith.constant 21 : index
    %1204 = memref.load %arg4[%c0_323, %c21_324] : memref<2x32xf32, #tpu.memory_space<smem>>
    %1205 = vector.broadcast %1204 : f32 to vector<8x128xf32>
    %1206 = arith.mulf %1170, %1205 : vector<8x128xf32>
    %1207 = arith.addf %1203, %1206 : vector<8x128xf32>
    %c0_325 = arith.constant 0 : index
    %c22 = arith.constant 22 : index
    %1208 = memref.load %arg4[%c0_325, %c22] : memref<2x32xf32, #tpu.memory_space<smem>>
    %1209 = vector.broadcast %1208 : f32 to vector<8x128xf32>
    %1210 = arith.mulf %1177, %1209 : vector<8x128xf32>
    %1211 = arith.addf %1207, %1210 : vector<8x128xf32>
    %c0_326 = arith.constant 0 : index
    %c23 = arith.constant 23 : index
    %1212 = memref.load %arg4[%c0_326, %c23] : memref<2x32xf32, #tpu.memory_space<smem>>
    %1213 = vector.broadcast %1212 : f32 to vector<8x128xf32>
    %1214 = arith.mulf %1184, %1213 : vector<8x128xf32>
    %1215 = arith.addf %1211, %1214 : vector<8x128xf32>
    %1216 = arith.addf %848, %1215 : vector<8x128xf32>
    %c1_327 = arith.constant 1 : index
    %c16_328 = arith.constant 16 : index
    %1217 = memref.load %arg4[%c1_327, %c16_328] : memref<2x32xf32, #tpu.memory_space<smem>>
    %1218 = vector.broadcast %1217 : f32 to vector<8x128xf32>
    %1219 = arith.mulf %1135, %1218 : vector<8x128xf32>
    %c1_329 = arith.constant 1 : index
    %c17_330 = arith.constant 17 : index
    %1220 = memref.load %arg4[%c1_329, %c17_330] : memref<2x32xf32, #tpu.memory_space<smem>>
    %1221 = vector.broadcast %1220 : f32 to vector<8x128xf32>
    %1222 = arith.mulf %1142, %1221 : vector<8x128xf32>
    %1223 = arith.addf %1219, %1222 : vector<8x128xf32>
    %c1_331 = arith.constant 1 : index
    %c18_332 = arith.constant 18 : index
    %1224 = memref.load %arg4[%c1_331, %c18_332] : memref<2x32xf32, #tpu.memory_space<smem>>
    %1225 = vector.broadcast %1224 : f32 to vector<8x128xf32>
    %1226 = arith.mulf %1149, %1225 : vector<8x128xf32>
    %1227 = arith.addf %1223, %1226 : vector<8x128xf32>
    %c1_333 = arith.constant 1 : index
    %c19_334 = arith.constant 19 : index
    %1228 = memref.load %arg4[%c1_333, %c19_334] : memref<2x32xf32, #tpu.memory_space<smem>>
    %1229 = vector.broadcast %1228 : f32 to vector<8x128xf32>
    %1230 = arith.mulf %1156, %1229 : vector<8x128xf32>
    %1231 = arith.addf %1227, %1230 : vector<8x128xf32>
    %c1_335 = arith.constant 1 : index
    %c20_336 = arith.constant 20 : index
    %1232 = memref.load %arg4[%c1_335, %c20_336] : memref<2x32xf32, #tpu.memory_space<smem>>
    %1233 = vector.broadcast %1232 : f32 to vector<8x128xf32>
    %1234 = arith.mulf %1163, %1233 : vector<8x128xf32>
    %1235 = arith.addf %1231, %1234 : vector<8x128xf32>
    %c1_337 = arith.constant 1 : index
    %c21_338 = arith.constant 21 : index
    %1236 = memref.load %arg4[%c1_337, %c21_338] : memref<2x32xf32, #tpu.memory_space<smem>>
    %1237 = vector.broadcast %1236 : f32 to vector<8x128xf32>
    %1238 = arith.mulf %1170, %1237 : vector<8x128xf32>
    %1239 = arith.addf %1235, %1238 : vector<8x128xf32>
    %c1_339 = arith.constant 1 : index
    %c22_340 = arith.constant 22 : index
    %1240 = memref.load %arg4[%c1_339, %c22_340] : memref<2x32xf32, #tpu.memory_space<smem>>
    %1241 = vector.broadcast %1240 : f32 to vector<8x128xf32>
    %1242 = arith.mulf %1177, %1241 : vector<8x128xf32>
    %1243 = arith.addf %1239, %1242 : vector<8x128xf32>
    %c1_341 = arith.constant 1 : index
    %c23_342 = arith.constant 23 : index
    %1244 = memref.load %arg4[%c1_341, %c23_342] : memref<2x32xf32, #tpu.memory_space<smem>>
    %1245 = vector.broadcast %1244 : f32 to vector<8x128xf32>
    %1246 = arith.mulf %1184, %1245 : vector<8x128xf32>
    %1247 = arith.addf %1243, %1246 : vector<8x128xf32>
    %1248 = arith.addf %852, %1247 : vector<8x128xf32>
    %c3_343 = arith.constant 3 : index
    %1249 = arith.index_cast %1 : i32 to index
    %c0_344 = arith.constant 0 : index
    %1250 = vector.load %arg5[%c3_343, %1249, %c0_344] : memref<4x8x128xf32, #tpu.memory_space<vmem>>, vector<1x8x128xf32>
    %1251 = vector.shape_cast %1250 : vector<1x8x128xf32> to vector<8x128xf32>
    %cst_345 = arith.constant 5.000000e-01 : f32
    %1252 = vector.broadcast %cst_345 : f32 to vector<8x128xf32>
    %1253 = arith.mulf %1252, %1251 : vector<8x128xf32>
    %cst_346 = arith.constant 5.000000e-01 : f32
    %1254 = vector.broadcast %cst_346 : f32 to vector<8x128xf32>
    %1255 = arith.mulf %1254, %1251 : vector<8x128xf32>
    %1256 = math.tanh %1255 : vector<8x128xf32>
    %cst_347 = arith.constant 1.000000e+00 : f32
    %1257 = vector.broadcast %cst_347 : f32 to vector<8x128xf32>
    %1258 = arith.addf %1256, %1257 : vector<8x128xf32>
    %1259 = arith.mulf %1253, %1258 : vector<8x128xf32>
    %c0_348 = arith.constant 0 : index
    %c3_349 = arith.constant 3 : index
    %1260 = memref.load %arg3[%c0_348, %c3_349] : memref<2x4xf32, #tpu.memory_space<smem>>
    %1261 = vector.broadcast %1260 : f32 to vector<8x128xf32>
    %1262 = arith.mulf %1259, %1261 : vector<8x128xf32>
    %1263 = arith.addf %1216, %1262 : vector<8x128xf32>
    %c1_350 = arith.constant 1 : index
    %c3_351 = arith.constant 3 : index
    %1264 = memref.load %arg3[%c1_350, %c3_351] : memref<2x4xf32, #tpu.memory_space<smem>>
    %1265 = vector.broadcast %1264 : f32 to vector<8x128xf32>
    %1266 = arith.mulf %1259, %1265 : vector<8x128xf32>
    %1267 = arith.addf %1248, %1266 : vector<8x128xf32>
    %c3_352 = arith.constant 3 : index
    %c0_353 = arith.constant 0 : index
    %1268 = memref.load %arg1[%c3_352, %c0_353] : memref<4x12xf32, #tpu.memory_space<smem>>
    %c3_354 = arith.constant 3 : index
    %c1_355 = arith.constant 1 : index
    %1269 = memref.load %arg1[%c3_354, %c1_355] : memref<4x12xf32, #tpu.memory_space<smem>>
    %c3_356 = arith.constant 3 : index
    %c2_357 = arith.constant 2 : index
    %1270 = memref.load %arg1[%c3_356, %c2_357] : memref<4x12xf32, #tpu.memory_space<smem>>
    %c3_358 = arith.constant 3 : index
    %c3_359 = arith.constant 3 : index
    %1271 = memref.load %arg1[%c3_358, %c3_359] : memref<4x12xf32, #tpu.memory_space<smem>>
    %c3_360 = arith.constant 3 : index
    %c4_361 = arith.constant 4 : index
    %1272 = memref.load %arg1[%c3_360, %c4_361] : memref<4x12xf32, #tpu.memory_space<smem>>
    %c3_362 = arith.constant 3 : index
    %c5_363 = arith.constant 5 : index
    %1273 = memref.load %arg1[%c3_362, %c5_363] : memref<4x12xf32, #tpu.memory_space<smem>>
    %c3_364 = arith.constant 3 : index
    %c6_365 = arith.constant 6 : index
    %1274 = memref.load %arg1[%c3_364, %c6_365] : memref<4x12xf32, #tpu.memory_space<smem>>
    %c3_366 = arith.constant 3 : index
    %c7_367 = arith.constant 7 : index
    %1275 = memref.load %arg1[%c3_366, %c7_367] : memref<4x12xf32, #tpu.memory_space<smem>>
    %c3_368 = arith.constant 3 : index
    %c8_369 = arith.constant 8 : index
    %1276 = memref.load %arg1[%c3_368, %c8_369] : memref<4x12xf32, #tpu.memory_space<smem>>
    %c3_370 = arith.constant 3 : index
    %c9_371 = arith.constant 9 : index
    %1277 = memref.load %arg1[%c3_370, %c9_371] : memref<4x12xf32, #tpu.memory_space<smem>>
    %c3_372 = arith.constant 3 : index
    %c10_373 = arith.constant 10 : index
    %1278 = memref.load %arg1[%c3_372, %c10_373] : memref<4x12xf32, #tpu.memory_space<smem>>
    %c3_374 = arith.constant 3 : index
    %c11_375 = arith.constant 11 : index
    %1279 = memref.load %arg1[%c3_374, %c11_375] : memref<4x12xf32, #tpu.memory_space<smem>>
    %1280 = vector.broadcast %1268 : f32 to vector<8x128xf32>
    %1281 = arith.subf %1251, %1280 : vector<8x128xf32>
    %1282 = vector.broadcast %1269 : f32 to vector<8x128xf32>
    %1283 = arith.subf %1251, %1282 : vector<8x128xf32>
    %1284 = vector.broadcast %1270 : f32 to vector<8x128xf32>
    %1285 = arith.subf %1251, %1284 : vector<8x128xf32>
    %1286 = vector.broadcast %1271 : f32 to vector<8x128xf32>
    %1287 = arith.subf %1251, %1286 : vector<8x128xf32>
    %1288 = vector.broadcast %1272 : f32 to vector<8x128xf32>
    %1289 = arith.subf %1251, %1288 : vector<8x128xf32>
    %1290 = vector.broadcast %1273 : f32 to vector<8x128xf32>
    %1291 = arith.subf %1251, %1290 : vector<8x128xf32>
    %1292 = vector.broadcast %1274 : f32 to vector<8x128xf32>
    %1293 = arith.subf %1251, %1292 : vector<8x128xf32>
    %1294 = vector.broadcast %1275 : f32 to vector<8x128xf32>
    %1295 = arith.subf %1251, %1294 : vector<8x128xf32>
    %1296 = vector.broadcast %1276 : f32 to vector<8x128xf32>
    %1297 = arith.subf %1251, %1296 : vector<8x128xf32>
    %1298 = vector.broadcast %1277 : f32 to vector<8x128xf32>
    %1299 = arith.subf %1251, %1298 : vector<8x128xf32>
    %1300 = vector.broadcast %1278 : f32 to vector<8x128xf32>
    %1301 = arith.subf %1251, %1300 : vector<8x128xf32>
    %1302 = vector.broadcast %1279 : f32 to vector<8x128xf32>
    %1303 = arith.subf %1251, %1302 : vector<8x128xf32>
    %1304 = vector.broadcast %1268 : f32 to vector<8x128xf32>
    %1305 = arith.cmpf oge, %1251, %1304 : vector<8x128xf32>
    %1306 = vector.broadcast %1269 : f32 to vector<8x128xf32>
    %1307 = arith.cmpf olt, %1251, %1306 : vector<8x128xf32>
    %1308 = arith.andi %1305, %1307 : vector<8x128xi1>
    %1309 = arith.extui %1308 : vector<8x128xi1> to vector<8x128xi32>
    %1310 = arith.sitofp %1309 : vector<8x128xi32> to vector<8x128xf32>
    %1311 = vector.broadcast %1269 : f32 to vector<8x128xf32>
    %1312 = arith.cmpf oge, %1251, %1311 : vector<8x128xf32>
    %1313 = vector.broadcast %1270 : f32 to vector<8x128xf32>
    %1314 = arith.cmpf olt, %1251, %1313 : vector<8x128xf32>
    %1315 = arith.andi %1312, %1314 : vector<8x128xi1>
    %1316 = arith.extui %1315 : vector<8x128xi1> to vector<8x128xi32>
    %1317 = arith.sitofp %1316 : vector<8x128xi32> to vector<8x128xf32>
    %1318 = vector.broadcast %1270 : f32 to vector<8x128xf32>
    %1319 = arith.cmpf oge, %1251, %1318 : vector<8x128xf32>
    %1320 = vector.broadcast %1271 : f32 to vector<8x128xf32>
    %1321 = arith.cmpf olt, %1251, %1320 : vector<8x128xf32>
    %1322 = arith.andi %1319, %1321 : vector<8x128xi1>
    %1323 = arith.extui %1322 : vector<8x128xi1> to vector<8x128xi32>
    %1324 = arith.sitofp %1323 : vector<8x128xi32> to vector<8x128xf32>
    %1325 = vector.broadcast %1271 : f32 to vector<8x128xf32>
    %1326 = arith.cmpf oge, %1251, %1325 : vector<8x128xf32>
    %1327 = vector.broadcast %1272 : f32 to vector<8x128xf32>
    %1328 = arith.cmpf olt, %1251, %1327 : vector<8x128xf32>
    %1329 = arith.andi %1326, %1328 : vector<8x128xi1>
    %1330 = arith.extui %1329 : vector<8x128xi1> to vector<8x128xi32>
    %1331 = arith.sitofp %1330 : vector<8x128xi32> to vector<8x128xf32>
    %1332 = vector.broadcast %1272 : f32 to vector<8x128xf32>
    %1333 = arith.cmpf oge, %1251, %1332 : vector<8x128xf32>
    %1334 = vector.broadcast %1273 : f32 to vector<8x128xf32>
    %1335 = arith.cmpf olt, %1251, %1334 : vector<8x128xf32>
    %1336 = arith.andi %1333, %1335 : vector<8x128xi1>
    %1337 = arith.extui %1336 : vector<8x128xi1> to vector<8x128xi32>
    %1338 = arith.sitofp %1337 : vector<8x128xi32> to vector<8x128xf32>
    %1339 = vector.broadcast %1273 : f32 to vector<8x128xf32>
    %1340 = arith.cmpf oge, %1251, %1339 : vector<8x128xf32>
    %1341 = vector.broadcast %1274 : f32 to vector<8x128xf32>
    %1342 = arith.cmpf olt, %1251, %1341 : vector<8x128xf32>
    %1343 = arith.andi %1340, %1342 : vector<8x128xi1>
    %1344 = arith.extui %1343 : vector<8x128xi1> to vector<8x128xi32>
    %1345 = arith.sitofp %1344 : vector<8x128xi32> to vector<8x128xf32>
    %1346 = vector.broadcast %1274 : f32 to vector<8x128xf32>
    %1347 = arith.cmpf oge, %1251, %1346 : vector<8x128xf32>
    %1348 = vector.broadcast %1275 : f32 to vector<8x128xf32>
    %1349 = arith.cmpf olt, %1251, %1348 : vector<8x128xf32>
    %1350 = arith.andi %1347, %1349 : vector<8x128xi1>
    %1351 = arith.extui %1350 : vector<8x128xi1> to vector<8x128xi32>
    %1352 = arith.sitofp %1351 : vector<8x128xi32> to vector<8x128xf32>
    %1353 = vector.broadcast %1275 : f32 to vector<8x128xf32>
    %1354 = arith.cmpf oge, %1251, %1353 : vector<8x128xf32>
    %1355 = vector.broadcast %1276 : f32 to vector<8x128xf32>
    %1356 = arith.cmpf olt, %1251, %1355 : vector<8x128xf32>
    %1357 = arith.andi %1354, %1356 : vector<8x128xi1>
    %1358 = arith.extui %1357 : vector<8x128xi1> to vector<8x128xi32>
    %1359 = arith.sitofp %1358 : vector<8x128xi32> to vector<8x128xf32>
    %1360 = vector.broadcast %1276 : f32 to vector<8x128xf32>
    %1361 = arith.cmpf oge, %1251, %1360 : vector<8x128xf32>
    %1362 = vector.broadcast %1277 : f32 to vector<8x128xf32>
    %1363 = arith.cmpf olt, %1251, %1362 : vector<8x128xf32>
    %1364 = arith.andi %1361, %1363 : vector<8x128xi1>
    %1365 = arith.extui %1364 : vector<8x128xi1> to vector<8x128xi32>
    %1366 = arith.sitofp %1365 : vector<8x128xi32> to vector<8x128xf32>
    %1367 = vector.broadcast %1277 : f32 to vector<8x128xf32>
    %1368 = arith.cmpf oge, %1251, %1367 : vector<8x128xf32>
    %1369 = vector.broadcast %1278 : f32 to vector<8x128xf32>
    %1370 = arith.cmpf olt, %1251, %1369 : vector<8x128xf32>
    %1371 = arith.andi %1368, %1370 : vector<8x128xi1>
    %1372 = arith.extui %1371 : vector<8x128xi1> to vector<8x128xi32>
    %1373 = arith.sitofp %1372 : vector<8x128xi32> to vector<8x128xf32>
    %1374 = vector.broadcast %1278 : f32 to vector<8x128xf32>
    %1375 = arith.cmpf oge, %1251, %1374 : vector<8x128xf32>
    %1376 = vector.broadcast %1279 : f32 to vector<8x128xf32>
    %1377 = arith.cmpf olt, %1251, %1376 : vector<8x128xf32>
    %1378 = arith.andi %1375, %1377 : vector<8x128xi1>
    %1379 = arith.extui %1378 : vector<8x128xi1> to vector<8x128xi32>
    %1380 = arith.sitofp %1379 : vector<8x128xi32> to vector<8x128xf32>
    %c3_376 = arith.constant 3 : index
    %c0_377 = arith.constant 0 : index
    %1381 = memref.load %arg2[%c3_376, %c0_377] : memref<4x36xf32, #tpu.memory_space<smem>>
    %c3_378 = arith.constant 3 : index
    %c1_379 = arith.constant 1 : index
    %1382 = memref.load %arg2[%c3_378, %c1_379] : memref<4x36xf32, #tpu.memory_space<smem>>
    %c3_380 = arith.constant 3 : index
    %c2_381 = arith.constant 2 : index
    %1383 = memref.load %arg2[%c3_380, %c2_381] : memref<4x36xf32, #tpu.memory_space<smem>>
    %c3_382 = arith.constant 3 : index
    %c3_383 = arith.constant 3 : index
    %1384 = memref.load %arg2[%c3_382, %c3_383] : memref<4x36xf32, #tpu.memory_space<smem>>
    %c3_384 = arith.constant 3 : index
    %c4_385 = arith.constant 4 : index
    %1385 = memref.load %arg2[%c3_384, %c4_385] : memref<4x36xf32, #tpu.memory_space<smem>>
    %c3_386 = arith.constant 3 : index
    %c5_387 = arith.constant 5 : index
    %1386 = memref.load %arg2[%c3_386, %c5_387] : memref<4x36xf32, #tpu.memory_space<smem>>
    %c3_388 = arith.constant 3 : index
    %c6_389 = arith.constant 6 : index
    %1387 = memref.load %arg2[%c3_388, %c6_389] : memref<4x36xf32, #tpu.memory_space<smem>>
    %c3_390 = arith.constant 3 : index
    %c7_391 = arith.constant 7 : index
    %1388 = memref.load %arg2[%c3_390, %c7_391] : memref<4x36xf32, #tpu.memory_space<smem>>
    %c3_392 = arith.constant 3 : index
    %c8_393 = arith.constant 8 : index
    %1389 = memref.load %arg2[%c3_392, %c8_393] : memref<4x36xf32, #tpu.memory_space<smem>>
    %c3_394 = arith.constant 3 : index
    %c9_395 = arith.constant 9 : index
    %1390 = memref.load %arg2[%c3_394, %c9_395] : memref<4x36xf32, #tpu.memory_space<smem>>
    %c3_396 = arith.constant 3 : index
    %c10_397 = arith.constant 10 : index
    %1391 = memref.load %arg2[%c3_396, %c10_397] : memref<4x36xf32, #tpu.memory_space<smem>>
    %1392 = vector.broadcast %1381 : f32 to vector<8x128xf32>
    %1393 = arith.mulf %1281, %1392 : vector<8x128xf32>
    %1394 = arith.mulf %1393, %1310 : vector<8x128xf32>
    %1395 = vector.broadcast %1382 : f32 to vector<8x128xf32>
    %1396 = arith.mulf %1285, %1395 : vector<8x128xf32>
    %1397 = arith.mulf %1396, %1317 : vector<8x128xf32>
    %1398 = arith.subf %1394, %1397 : vector<8x128xf32>
    %1399 = vector.broadcast %1382 : f32 to vector<8x128xf32>
    %1400 = arith.mulf %1283, %1399 : vector<8x128xf32>
    %1401 = arith.mulf %1400, %1317 : vector<8x128xf32>
    %1402 = vector.broadcast %1383 : f32 to vector<8x128xf32>
    %1403 = arith.mulf %1287, %1402 : vector<8x128xf32>
    %1404 = arith.mulf %1403, %1324 : vector<8x128xf32>
    %1405 = arith.subf %1401, %1404 : vector<8x128xf32>
    %1406 = vector.broadcast %1383 : f32 to vector<8x128xf32>
    %1407 = arith.mulf %1285, %1406 : vector<8x128xf32>
    %1408 = arith.mulf %1407, %1324 : vector<8x128xf32>
    %1409 = vector.broadcast %1384 : f32 to vector<8x128xf32>
    %1410 = arith.mulf %1289, %1409 : vector<8x128xf32>
    %1411 = arith.mulf %1410, %1331 : vector<8x128xf32>
    %1412 = arith.subf %1408, %1411 : vector<8x128xf32>
    %1413 = vector.broadcast %1384 : f32 to vector<8x128xf32>
    %1414 = arith.mulf %1287, %1413 : vector<8x128xf32>
    %1415 = arith.mulf %1414, %1331 : vector<8x128xf32>
    %1416 = vector.broadcast %1385 : f32 to vector<8x128xf32>
    %1417 = arith.mulf %1291, %1416 : vector<8x128xf32>
    %1418 = arith.mulf %1417, %1338 : vector<8x128xf32>
    %1419 = arith.subf %1415, %1418 : vector<8x128xf32>
    %1420 = vector.broadcast %1385 : f32 to vector<8x128xf32>
    %1421 = arith.mulf %1289, %1420 : vector<8x128xf32>
    %1422 = arith.mulf %1421, %1338 : vector<8x128xf32>
    %1423 = vector.broadcast %1386 : f32 to vector<8x128xf32>
    %1424 = arith.mulf %1293, %1423 : vector<8x128xf32>
    %1425 = arith.mulf %1424, %1345 : vector<8x128xf32>
    %1426 = arith.subf %1422, %1425 : vector<8x128xf32>
    %1427 = vector.broadcast %1386 : f32 to vector<8x128xf32>
    %1428 = arith.mulf %1291, %1427 : vector<8x128xf32>
    %1429 = arith.mulf %1428, %1345 : vector<8x128xf32>
    %1430 = vector.broadcast %1387 : f32 to vector<8x128xf32>
    %1431 = arith.mulf %1295, %1430 : vector<8x128xf32>
    %1432 = arith.mulf %1431, %1352 : vector<8x128xf32>
    %1433 = arith.subf %1429, %1432 : vector<8x128xf32>
    %1434 = vector.broadcast %1387 : f32 to vector<8x128xf32>
    %1435 = arith.mulf %1293, %1434 : vector<8x128xf32>
    %1436 = arith.mulf %1435, %1352 : vector<8x128xf32>
    %1437 = vector.broadcast %1388 : f32 to vector<8x128xf32>
    %1438 = arith.mulf %1297, %1437 : vector<8x128xf32>
    %1439 = arith.mulf %1438, %1359 : vector<8x128xf32>
    %1440 = arith.subf %1436, %1439 : vector<8x128xf32>
    %1441 = vector.broadcast %1388 : f32 to vector<8x128xf32>
    %1442 = arith.mulf %1295, %1441 : vector<8x128xf32>
    %1443 = arith.mulf %1442, %1359 : vector<8x128xf32>
    %1444 = vector.broadcast %1389 : f32 to vector<8x128xf32>
    %1445 = arith.mulf %1299, %1444 : vector<8x128xf32>
    %1446 = arith.mulf %1445, %1366 : vector<8x128xf32>
    %1447 = arith.subf %1443, %1446 : vector<8x128xf32>
    %1448 = vector.broadcast %1389 : f32 to vector<8x128xf32>
    %1449 = arith.mulf %1297, %1448 : vector<8x128xf32>
    %1450 = arith.mulf %1449, %1366 : vector<8x128xf32>
    %1451 = vector.broadcast %1390 : f32 to vector<8x128xf32>
    %1452 = arith.mulf %1301, %1451 : vector<8x128xf32>
    %1453 = arith.mulf %1452, %1373 : vector<8x128xf32>
    %1454 = arith.subf %1450, %1453 : vector<8x128xf32>
    %1455 = vector.broadcast %1390 : f32 to vector<8x128xf32>
    %1456 = arith.mulf %1299, %1455 : vector<8x128xf32>
    %1457 = arith.mulf %1456, %1373 : vector<8x128xf32>
    %1458 = vector.broadcast %1391 : f32 to vector<8x128xf32>
    %1459 = arith.mulf %1303, %1458 : vector<8x128xf32>
    %1460 = arith.mulf %1459, %1380 : vector<8x128xf32>
    %1461 = arith.subf %1457, %1460 : vector<8x128xf32>
    %c3_398 = arith.constant 3 : index
    %c12_399 = arith.constant 12 : index
    %1462 = memref.load %arg2[%c3_398, %c12_399] : memref<4x36xf32, #tpu.memory_space<smem>>
    %c3_400 = arith.constant 3 : index
    %c13_401 = arith.constant 13 : index
    %1463 = memref.load %arg2[%c3_400, %c13_401] : memref<4x36xf32, #tpu.memory_space<smem>>
    %c3_402 = arith.constant 3 : index
    %c14_403 = arith.constant 14 : index
    %1464 = memref.load %arg2[%c3_402, %c14_403] : memref<4x36xf32, #tpu.memory_space<smem>>
    %c3_404 = arith.constant 3 : index
    %c15_405 = arith.constant 15 : index
    %1465 = memref.load %arg2[%c3_404, %c15_405] : memref<4x36xf32, #tpu.memory_space<smem>>
    %c3_406 = arith.constant 3 : index
    %c16_407 = arith.constant 16 : index
    %1466 = memref.load %arg2[%c3_406, %c16_407] : memref<4x36xf32, #tpu.memory_space<smem>>
    %c3_408 = arith.constant 3 : index
    %c17_409 = arith.constant 17 : index
    %1467 = memref.load %arg2[%c3_408, %c17_409] : memref<4x36xf32, #tpu.memory_space<smem>>
    %c3_410 = arith.constant 3 : index
    %c18_411 = arith.constant 18 : index
    %1468 = memref.load %arg2[%c3_410, %c18_411] : memref<4x36xf32, #tpu.memory_space<smem>>
    %c3_412 = arith.constant 3 : index
    %c19_413 = arith.constant 19 : index
    %1469 = memref.load %arg2[%c3_412, %c19_413] : memref<4x36xf32, #tpu.memory_space<smem>>
    %c3_414 = arith.constant 3 : index
    %c20_415 = arith.constant 20 : index
    %1470 = memref.load %arg2[%c3_414, %c20_415] : memref<4x36xf32, #tpu.memory_space<smem>>
    %c3_416 = arith.constant 3 : index
    %c21_417 = arith.constant 21 : index
    %1471 = memref.load %arg2[%c3_416, %c21_417] : memref<4x36xf32, #tpu.memory_space<smem>>
    %1472 = vector.broadcast %1462 : f32 to vector<8x128xf32>
    %1473 = arith.mulf %1281, %1472 : vector<8x128xf32>
    %1474 = arith.mulf %1473, %1398 : vector<8x128xf32>
    %1475 = vector.broadcast %1463 : f32 to vector<8x128xf32>
    %1476 = arith.mulf %1287, %1475 : vector<8x128xf32>
    %1477 = arith.mulf %1476, %1405 : vector<8x128xf32>
    %1478 = arith.subf %1474, %1477 : vector<8x128xf32>
    %1479 = vector.broadcast %1463 : f32 to vector<8x128xf32>
    %1480 = arith.mulf %1283, %1479 : vector<8x128xf32>
    %1481 = arith.mulf %1480, %1405 : vector<8x128xf32>
    %1482 = vector.broadcast %1464 : f32 to vector<8x128xf32>
    %1483 = arith.mulf %1289, %1482 : vector<8x128xf32>
    %1484 = arith.mulf %1483, %1412 : vector<8x128xf32>
    %1485 = arith.subf %1481, %1484 : vector<8x128xf32>
    %1486 = vector.broadcast %1464 : f32 to vector<8x128xf32>
    %1487 = arith.mulf %1285, %1486 : vector<8x128xf32>
    %1488 = arith.mulf %1487, %1412 : vector<8x128xf32>
    %1489 = vector.broadcast %1465 : f32 to vector<8x128xf32>
    %1490 = arith.mulf %1291, %1489 : vector<8x128xf32>
    %1491 = arith.mulf %1490, %1419 : vector<8x128xf32>
    %1492 = arith.subf %1488, %1491 : vector<8x128xf32>
    %1493 = vector.broadcast %1465 : f32 to vector<8x128xf32>
    %1494 = arith.mulf %1287, %1493 : vector<8x128xf32>
    %1495 = arith.mulf %1494, %1419 : vector<8x128xf32>
    %1496 = vector.broadcast %1466 : f32 to vector<8x128xf32>
    %1497 = arith.mulf %1293, %1496 : vector<8x128xf32>
    %1498 = arith.mulf %1497, %1426 : vector<8x128xf32>
    %1499 = arith.subf %1495, %1498 : vector<8x128xf32>
    %1500 = vector.broadcast %1466 : f32 to vector<8x128xf32>
    %1501 = arith.mulf %1289, %1500 : vector<8x128xf32>
    %1502 = arith.mulf %1501, %1426 : vector<8x128xf32>
    %1503 = vector.broadcast %1467 : f32 to vector<8x128xf32>
    %1504 = arith.mulf %1295, %1503 : vector<8x128xf32>
    %1505 = arith.mulf %1504, %1433 : vector<8x128xf32>
    %1506 = arith.subf %1502, %1505 : vector<8x128xf32>
    %1507 = vector.broadcast %1467 : f32 to vector<8x128xf32>
    %1508 = arith.mulf %1291, %1507 : vector<8x128xf32>
    %1509 = arith.mulf %1508, %1433 : vector<8x128xf32>
    %1510 = vector.broadcast %1468 : f32 to vector<8x128xf32>
    %1511 = arith.mulf %1297, %1510 : vector<8x128xf32>
    %1512 = arith.mulf %1511, %1440 : vector<8x128xf32>
    %1513 = arith.subf %1509, %1512 : vector<8x128xf32>
    %1514 = vector.broadcast %1468 : f32 to vector<8x128xf32>
    %1515 = arith.mulf %1293, %1514 : vector<8x128xf32>
    %1516 = arith.mulf %1515, %1440 : vector<8x128xf32>
    %1517 = vector.broadcast %1469 : f32 to vector<8x128xf32>
    %1518 = arith.mulf %1299, %1517 : vector<8x128xf32>
    %1519 = arith.mulf %1518, %1447 : vector<8x128xf32>
    %1520 = arith.subf %1516, %1519 : vector<8x128xf32>
    %1521 = vector.broadcast %1469 : f32 to vector<8x128xf32>
    %1522 = arith.mulf %1295, %1521 : vector<8x128xf32>
    %1523 = arith.mulf %1522, %1447 : vector<8x128xf32>
    %1524 = vector.broadcast %1470 : f32 to vector<8x128xf32>
    %1525 = arith.mulf %1301, %1524 : vector<8x128xf32>
    %1526 = arith.mulf %1525, %1454 : vector<8x128xf32>
    %1527 = arith.subf %1523, %1526 : vector<8x128xf32>
    %1528 = vector.broadcast %1470 : f32 to vector<8x128xf32>
    %1529 = arith.mulf %1297, %1528 : vector<8x128xf32>
    %1530 = arith.mulf %1529, %1454 : vector<8x128xf32>
    %1531 = vector.broadcast %1471 : f32 to vector<8x128xf32>
    %1532 = arith.mulf %1303, %1531 : vector<8x128xf32>
    %1533 = arith.mulf %1532, %1461 : vector<8x128xf32>
    %1534 = arith.subf %1530, %1533 : vector<8x128xf32>
    %c3_418 = arith.constant 3 : index
    %c24_419 = arith.constant 24 : index
    %1535 = memref.load %arg2[%c3_418, %c24_419] : memref<4x36xf32, #tpu.memory_space<smem>>
    %c3_420 = arith.constant 3 : index
    %c25_421 = arith.constant 25 : index
    %1536 = memref.load %arg2[%c3_420, %c25_421] : memref<4x36xf32, #tpu.memory_space<smem>>
    %c3_422 = arith.constant 3 : index
    %c26_423 = arith.constant 26 : index
    %1537 = memref.load %arg2[%c3_422, %c26_423] : memref<4x36xf32, #tpu.memory_space<smem>>
    %c3_424 = arith.constant 3 : index
    %c27_425 = arith.constant 27 : index
    %1538 = memref.load %arg2[%c3_424, %c27_425] : memref<4x36xf32, #tpu.memory_space<smem>>
    %c3_426 = arith.constant 3 : index
    %c28_427 = arith.constant 28 : index
    %1539 = memref.load %arg2[%c3_426, %c28_427] : memref<4x36xf32, #tpu.memory_space<smem>>
    %c3_428 = arith.constant 3 : index
    %c29_429 = arith.constant 29 : index
    %1540 = memref.load %arg2[%c3_428, %c29_429] : memref<4x36xf32, #tpu.memory_space<smem>>
    %c3_430 = arith.constant 3 : index
    %c30_431 = arith.constant 30 : index
    %1541 = memref.load %arg2[%c3_430, %c30_431] : memref<4x36xf32, #tpu.memory_space<smem>>
    %c3_432 = arith.constant 3 : index
    %c31_433 = arith.constant 31 : index
    %1542 = memref.load %arg2[%c3_432, %c31_433] : memref<4x36xf32, #tpu.memory_space<smem>>
    %c3_434 = arith.constant 3 : index
    %c32_435 = arith.constant 32 : index
    %1543 = memref.load %arg2[%c3_434, %c32_435] : memref<4x36xf32, #tpu.memory_space<smem>>
    %1544 = vector.broadcast %1535 : f32 to vector<8x128xf32>
    %1545 = arith.mulf %1281, %1544 : vector<8x128xf32>
    %1546 = arith.mulf %1545, %1478 : vector<8x128xf32>
    %1547 = vector.broadcast %1536 : f32 to vector<8x128xf32>
    %1548 = arith.mulf %1289, %1547 : vector<8x128xf32>
    %1549 = arith.mulf %1548, %1485 : vector<8x128xf32>
    %1550 = arith.subf %1546, %1549 : vector<8x128xf32>
    %1551 = vector.broadcast %1536 : f32 to vector<8x128xf32>
    %1552 = arith.mulf %1283, %1551 : vector<8x128xf32>
    %1553 = arith.mulf %1552, %1485 : vector<8x128xf32>
    %1554 = vector.broadcast %1537 : f32 to vector<8x128xf32>
    %1555 = arith.mulf %1291, %1554 : vector<8x128xf32>
    %1556 = arith.mulf %1555, %1492 : vector<8x128xf32>
    %1557 = arith.subf %1553, %1556 : vector<8x128xf32>
    %1558 = vector.broadcast %1537 : f32 to vector<8x128xf32>
    %1559 = arith.mulf %1285, %1558 : vector<8x128xf32>
    %1560 = arith.mulf %1559, %1492 : vector<8x128xf32>
    %1561 = vector.broadcast %1538 : f32 to vector<8x128xf32>
    %1562 = arith.mulf %1293, %1561 : vector<8x128xf32>
    %1563 = arith.mulf %1562, %1499 : vector<8x128xf32>
    %1564 = arith.subf %1560, %1563 : vector<8x128xf32>
    %1565 = vector.broadcast %1538 : f32 to vector<8x128xf32>
    %1566 = arith.mulf %1287, %1565 : vector<8x128xf32>
    %1567 = arith.mulf %1566, %1499 : vector<8x128xf32>
    %1568 = vector.broadcast %1539 : f32 to vector<8x128xf32>
    %1569 = arith.mulf %1295, %1568 : vector<8x128xf32>
    %1570 = arith.mulf %1569, %1506 : vector<8x128xf32>
    %1571 = arith.subf %1567, %1570 : vector<8x128xf32>
    %1572 = vector.broadcast %1539 : f32 to vector<8x128xf32>
    %1573 = arith.mulf %1289, %1572 : vector<8x128xf32>
    %1574 = arith.mulf %1573, %1506 : vector<8x128xf32>
    %1575 = vector.broadcast %1540 : f32 to vector<8x128xf32>
    %1576 = arith.mulf %1297, %1575 : vector<8x128xf32>
    %1577 = arith.mulf %1576, %1513 : vector<8x128xf32>
    %1578 = arith.subf %1574, %1577 : vector<8x128xf32>
    %1579 = vector.broadcast %1540 : f32 to vector<8x128xf32>
    %1580 = arith.mulf %1291, %1579 : vector<8x128xf32>
    %1581 = arith.mulf %1580, %1513 : vector<8x128xf32>
    %1582 = vector.broadcast %1541 : f32 to vector<8x128xf32>
    %1583 = arith.mulf %1299, %1582 : vector<8x128xf32>
    %1584 = arith.mulf %1583, %1520 : vector<8x128xf32>
    %1585 = arith.subf %1581, %1584 : vector<8x128xf32>
    %1586 = vector.broadcast %1541 : f32 to vector<8x128xf32>
    %1587 = arith.mulf %1293, %1586 : vector<8x128xf32>
    %1588 = arith.mulf %1587, %1520 : vector<8x128xf32>
    %1589 = vector.broadcast %1542 : f32 to vector<8x128xf32>
    %1590 = arith.mulf %1301, %1589 : vector<8x128xf32>
    %1591 = arith.mulf %1590, %1527 : vector<8x128xf32>
    %1592 = arith.subf %1588, %1591 : vector<8x128xf32>
    %1593 = vector.broadcast %1542 : f32 to vector<8x128xf32>
    %1594 = arith.mulf %1295, %1593 : vector<8x128xf32>
    %1595 = arith.mulf %1594, %1527 : vector<8x128xf32>
    %1596 = vector.broadcast %1543 : f32 to vector<8x128xf32>
    %1597 = arith.mulf %1303, %1596 : vector<8x128xf32>
    %1598 = arith.mulf %1597, %1534 : vector<8x128xf32>
    %1599 = arith.subf %1595, %1598 : vector<8x128xf32>
    %c0_436 = arith.constant 0 : index
    %c24_437 = arith.constant 24 : index
    %1600 = memref.load %arg4[%c0_436, %c24_437] : memref<2x32xf32, #tpu.memory_space<smem>>
    %1601 = vector.broadcast %1600 : f32 to vector<8x128xf32>
    %1602 = arith.mulf %1550, %1601 : vector<8x128xf32>
    %c0_438 = arith.constant 0 : index
    %c25_439 = arith.constant 25 : index
    %1603 = memref.load %arg4[%c0_438, %c25_439] : memref<2x32xf32, #tpu.memory_space<smem>>
    %1604 = vector.broadcast %1603 : f32 to vector<8x128xf32>
    %1605 = arith.mulf %1557, %1604 : vector<8x128xf32>
    %1606 = arith.addf %1602, %1605 : vector<8x128xf32>
    %c0_440 = arith.constant 0 : index
    %c26_441 = arith.constant 26 : index
    %1607 = memref.load %arg4[%c0_440, %c26_441] : memref<2x32xf32, #tpu.memory_space<smem>>
    %1608 = vector.broadcast %1607 : f32 to vector<8x128xf32>
    %1609 = arith.mulf %1564, %1608 : vector<8x128xf32>
    %1610 = arith.addf %1606, %1609 : vector<8x128xf32>
    %c0_442 = arith.constant 0 : index
    %c27_443 = arith.constant 27 : index
    %1611 = memref.load %arg4[%c0_442, %c27_443] : memref<2x32xf32, #tpu.memory_space<smem>>
    %1612 = vector.broadcast %1611 : f32 to vector<8x128xf32>
    %1613 = arith.mulf %1571, %1612 : vector<8x128xf32>
    %1614 = arith.addf %1610, %1613 : vector<8x128xf32>
    %c0_444 = arith.constant 0 : index
    %c28_445 = arith.constant 28 : index
    %1615 = memref.load %arg4[%c0_444, %c28_445] : memref<2x32xf32, #tpu.memory_space<smem>>
    %1616 = vector.broadcast %1615 : f32 to vector<8x128xf32>
    %1617 = arith.mulf %1578, %1616 : vector<8x128xf32>
    %1618 = arith.addf %1614, %1617 : vector<8x128xf32>
    %c0_446 = arith.constant 0 : index
    %c29_447 = arith.constant 29 : index
    %1619 = memref.load %arg4[%c0_446, %c29_447] : memref<2x32xf32, #tpu.memory_space<smem>>
    %1620 = vector.broadcast %1619 : f32 to vector<8x128xf32>
    %1621 = arith.mulf %1585, %1620 : vector<8x128xf32>
    %1622 = arith.addf %1618, %1621 : vector<8x128xf32>
    %c0_448 = arith.constant 0 : index
    %c30_449 = arith.constant 30 : index
    %1623 = memref.load %arg4[%c0_448, %c30_449] : memref<2x32xf32, #tpu.memory_space<smem>>
    %1624 = vector.broadcast %1623 : f32 to vector<8x128xf32>
    %1625 = arith.mulf %1592, %1624 : vector<8x128xf32>
    %1626 = arith.addf %1622, %1625 : vector<8x128xf32>
    %c0_450 = arith.constant 0 : index
    %c31_451 = arith.constant 31 : index
    %1627 = memref.load %arg4[%c0_450, %c31_451] : memref<2x32xf32, #tpu.memory_space<smem>>
    %1628 = vector.broadcast %1627 : f32 to vector<8x128xf32>
    %1629 = arith.mulf %1599, %1628 : vector<8x128xf32>
    %1630 = arith.addf %1626, %1629 : vector<8x128xf32>
    %1631 = arith.addf %1263, %1630 : vector<8x128xf32>
    %c1_452 = arith.constant 1 : index
    %c24_453 = arith.constant 24 : index
    %1632 = memref.load %arg4[%c1_452, %c24_453] : memref<2x32xf32, #tpu.memory_space<smem>>
    %1633 = vector.broadcast %1632 : f32 to vector<8x128xf32>
    %1634 = arith.mulf %1550, %1633 : vector<8x128xf32>
    %c1_454 = arith.constant 1 : index
    %c25_455 = arith.constant 25 : index
    %1635 = memref.load %arg4[%c1_454, %c25_455] : memref<2x32xf32, #tpu.memory_space<smem>>
    %1636 = vector.broadcast %1635 : f32 to vector<8x128xf32>
    %1637 = arith.mulf %1557, %1636 : vector<8x128xf32>
    %1638 = arith.addf %1634, %1637 : vector<8x128xf32>
    %c1_456 = arith.constant 1 : index
    %c26_457 = arith.constant 26 : index
    %1639 = memref.load %arg4[%c1_456, %c26_457] : memref<2x32xf32, #tpu.memory_space<smem>>
    %1640 = vector.broadcast %1639 : f32 to vector<8x128xf32>
    %1641 = arith.mulf %1564, %1640 : vector<8x128xf32>
    %1642 = arith.addf %1638, %1641 : vector<8x128xf32>
    %c1_458 = arith.constant 1 : index
    %c27_459 = arith.constant 27 : index
    %1643 = memref.load %arg4[%c1_458, %c27_459] : memref<2x32xf32, #tpu.memory_space<smem>>
    %1644 = vector.broadcast %1643 : f32 to vector<8x128xf32>
    %1645 = arith.mulf %1571, %1644 : vector<8x128xf32>
    %1646 = arith.addf %1642, %1645 : vector<8x128xf32>
    %c1_460 = arith.constant 1 : index
    %c28_461 = arith.constant 28 : index
    %1647 = memref.load %arg4[%c1_460, %c28_461] : memref<2x32xf32, #tpu.memory_space<smem>>
    %1648 = vector.broadcast %1647 : f32 to vector<8x128xf32>
    %1649 = arith.mulf %1578, %1648 : vector<8x128xf32>
    %1650 = arith.addf %1646, %1649 : vector<8x128xf32>
    %c1_462 = arith.constant 1 : index
    %c29_463 = arith.constant 29 : index
    %1651 = memref.load %arg4[%c1_462, %c29_463] : memref<2x32xf32, #tpu.memory_space<smem>>
    %1652 = vector.broadcast %1651 : f32 to vector<8x128xf32>
    %1653 = arith.mulf %1585, %1652 : vector<8x128xf32>
    %1654 = arith.addf %1650, %1653 : vector<8x128xf32>
    %c1_464 = arith.constant 1 : index
    %c30_465 = arith.constant 30 : index
    %1655 = memref.load %arg4[%c1_464, %c30_465] : memref<2x32xf32, #tpu.memory_space<smem>>
    %1656 = vector.broadcast %1655 : f32 to vector<8x128xf32>
    %1657 = arith.mulf %1592, %1656 : vector<8x128xf32>
    %1658 = arith.addf %1654, %1657 : vector<8x128xf32>
    %c1_466 = arith.constant 1 : index
    %c31_467 = arith.constant 31 : index
    %1659 = memref.load %arg4[%c1_466, %c31_467] : memref<2x32xf32, #tpu.memory_space<smem>>
    %1660 = vector.broadcast %1659 : f32 to vector<8x128xf32>
    %1661 = arith.mulf %1599, %1660 : vector<8x128xf32>
    %1662 = arith.addf %1658, %1661 : vector<8x128xf32>
    %1663 = arith.addf %1267, %1662 : vector<8x128xf32>
    %c0_468 = arith.constant 0 : index
    %1664 = arith.index_cast %1 : i32 to index
    %c0_469 = arith.constant 0 : index
    %1665 = vector.load %arg6[%c0_468, %1664, %c0_469] : memref<2x8x128xf32, #tpu.memory_space<vmem>>, vector<1x8x128xf32>
    %1666 = vector.shape_cast %1665 : vector<1x8x128xf32> to vector<8x128xf32>
    %1667 = vector.shape_cast %1631 : vector<8x128xf32> to vector<1x8x128xf32>
    tpu.vector_store %arg6[%c0_468, %1664, %c0_469], %1667 {strides = array<i32>} : memref<2x8x128xf32, #tpu.memory_space<vmem>>, vector<1x8x128xf32>,
    %c1_470 = arith.constant 1 : index
    %1668 = arith.index_cast %1 : i32 to index
    %c0_471 = arith.constant 0 : index
    %1669 = vector.load %arg6[%c1_470, %1668, %c0_471] : memref<2x8x128xf32, #tpu.memory_space<vmem>>, vector<1x8x128xf32>
    %1670 = vector.shape_cast %1669 : vector<1x8x128xf32> to vector<8x128xf32>
    %1671 = vector.shape_cast %1663 : vector<8x128xf32> to vector<1x8x128xf32>
    tpu.vector_store %arg6[%c1_470, %1668, %c0_471], %1671 {strides = array<i32>} : memref<2x8x128xf32, #tpu.memory_space<vmem>>, vector<1x8x128xf32>,
    %c1_i32 = arith.constant 1 : i32
    return
  }
  func.func @transform_0(%arg0: i32) -> (i32, i32) {
    %c0_i32 = arith.constant 0 : i32
    %c0_i32_0 = arith.constant 0 : i32
    %c0_i32_1 = arith.constant 0 : i32
    return %c0_i32, %c0_i32_0 : i32, i32
  }
  func.func @transform_1(%arg0: i32) -> (i32, i32) {
    %c0_i32 = arith.constant 0 : i32
    %c0_i32_0 = arith.constant 0 : i32
    %c0_i32_1 = arith.constant 0 : i32
    return %c0_i32, %c0_i32_0 : i32, i32
  }
  func.func @transform_2(%arg0: i32) -> (i32, i32) {
    %c0_i32 = arith.constant 0 : i32
    %c0_i32_0 = arith.constant 0 : i32
    %c0_i32_1 = arith.constant 0 : i32
    return %c0_i32, %c0_i32_0 : i32, i32
  }
  func.func @transform_3(%arg0: i32) -> (i32, i32) {
    %c0_i32 = arith.constant 0 : i32
    %c0_i32_0 = arith.constant 0 : i32
    %c0_i32_1 = arith.constant 0 : i32
    return %c0_i32, %c0_i32_0 : i32, i32
  }
  func.func @transform_4(%arg0: i32) -> (i32, i32, i32) {
    %c0_i32 = arith.constant 0 : i32
    %c0_i32_0 = arith.constant 0 : i32
    %c0_i32_1 = arith.constant 0 : i32
    return %c0_i32, %arg0, %c0_i32_0 : i32, i32, i32
  }
  func.func @transform_5(%arg0: i32) -> (i32, i32, i32) {
    %c0_i32 = arith.constant 0 : i32
    %c0_i32_0 = arith.constant 0 : i32
    %c0_i32_1 = arith.constant 0 : i32
    return %c0_i32, %arg0, %c0_i32_0 : i32, i32, i32
  }
}

</mosaic_0001>

<llo_original>
// kernel: kan_convolutional_layer.1
$region0: #{kan_convolutional_layer.1}
  #allocation0 [shape = 'u32[]', space=smem, size = 0x4, offset = 0x4, fixed_abs, tag = 'smem constant byte address 0x4 - core index']
  #allocation1 [shape = 'u32[72,128]{1,0:T(1,128)}', space=vmem, size = 0x9000, scoped, tag = 'internal scratch']
  %s0 = inlined_call_operand.vmem [shape: f32[4,12], index: 0, kind: input, shape index: {}]
  %s1 = inlined_call_operand.vmem [shape: f32[4,36], index: 1, kind: input, shape index: {}]
  %s2 = inlined_call_operand.vmem [shape: f32[2,4], index: 2, kind: input, shape index: {}]
  %s3 = inlined_call_operand.vmem [shape: f32[2,32], index: 3, kind: input, shape index: {}]
  %s4 = inlined_call_operand.vmem [shape: f32[4,16,128], index: 4, kind: input, shape index: {}]
  %s5 = inlined_call_operand.vmem [shape: f32[2,16,128], index: 5, kind: output, shape index: {}]
  %s6 = sld [smem:[#allocation0]]
  $region141: #{kan_convolutional_layer.1} parent=0
    _
  %s8 = ssub.s32 1, %s6
  %s9 = scalar_select 0, %s8, %s6
  $region1: #{kan_convolutional_layer.1} parent=0
    #allocation2 [shape = 'u8[2048]{0}', space=smem, size = 0x800, scoped, tag = 'input window, operand 0, single buffered']
    #allocation3 [shape = 's32[2]{0}', space=sflag, size = 0x8, scoped, tag = 'scoped memory for kan_convolutional_layer.1']
    #allocation4 [shape = 'u8[2048]{0}', space=smem, size = 0x800, scoped, tag = 'input window, operand 1, single buffered']
    #allocation5 [shape = 's32[1]{0}', space=sflag, size = 0x4, scoped, tag = 'scoped memory for kan_convolutional_layer.1']
    #allocation6 [shape = 'u8[1024]{0}', space=smem, size = 0x400, scoped, tag = 'input window, operand 2, single buffered']
    #allocation7 [shape = 'u8[1024]{0}', space=smem, size = 0x400, scoped, tag = 'input window, operand 3, single buffered']
    #allocation8 [shape = 's32[1]{0}', space=sflag, size = 0x4, scoped, tag = 'scoped memory for kan_convolutional_layer.1']
    #allocation9 [shape = 'u8[32768]{0}', space=vmem, size = 0x8000, scoped, tag = 'input window, operand 4']
    #allocation10 [shape = 'u8[16384]{0}', space=vmem, size = 0x4000, scoped, tag = 'output window, operand 0']
    %10 = vsyncpa [#allocation3], 0
    %11 = vsyncpa [#allocation5], 0
    %12 = vsyncpa [#allocation8], 0
    loop: start=0, step=1, limit=4
    $region2: #{kan_convolutional_layer.1} parent=1 // loop_pre_header
      _
    $region3: #{kan_convolutional_layer.1} parent=1 // loop_header
      %s14 = sphi 0, %s18
      %p15 = scmp.ge.s32.totalorder %s14, 4
      %s22 = sphi 0, %s22
      %s24 = sphi 0, %s22
      %s25 = sphi 0, %s24
      %s39 = sphi 0, %s25
      %s43 = sphi 0, %s43
      %s45 = sphi 0, %s43
      %s46 = sphi 0, %s45
      %s60 = sphi 0, %s46
      %s64 = sphi 0, %s64
      %s66 = sphi 0, %s64
      %s67 = sphi 0, %s66
      %s81 = sphi 0, %s67
      %s85 = sphi 0, %s85
      %s87 = sphi 0, %s85
      %s88 = sphi 0, %s87
      %s102 = sphi 0, %s88
      %s108 = sphi 0, %s110
      %s111 = sphi 0, %s108
      %s112 = sphi 0, %s111
      %s128 = sphi 0, %s112
      %s134 = sphi 0, %s136
      %s137 = sphi 0, %s134
      %s138 = sphi 0, %s137
      %s154 = sphi 0, %s138
    $region4: #{kan_convolutional_layer.1} parent=1 // loop_header_branch
      %17 = sbr.rel (%p15) target = $region8
    $region5: #{kan_convolutional_layer.1} parent=1 // loop_body
      %s19 = ssub.s32 %s14, 1
      %s20 = ssub.s32 %s14, 2
      %s21 = sadd.s32 %s14, 1
      %s23 = sadd.s32 %s22, 1
      %p26 = scmp.eq.s32.totalorder %s14, 1
      %p27 = scmp.ne.s32.totalorder %s22, %s24
      %p28 = scmp.eq.s32.totalorder %s14, 0
      %p29 = por %p27, %p28
      %p30 = scmp.ne.s32.totalorder %s22, %s24
      %p31 = scmp.eq.s32.totalorder %s19, 1
      %p32 = por %p30, %p31
      %p33 = scmp.ne.s32.totalorder %s24, %s25
      %p34 = scmp.eq.s32.totalorder %s19, 0
      %p35 = por %p33, %p34
      %p36 = scmp.ne.s32.totalorder %s24, %s25
      %p37 = scmp.eq.s32.totalorder %s20, 1
      %p38 = por %p36, %p37
      %p40 = scmp.ne.s32.totalorder %s25, %s39
      %p41 = scmp.eq.s32.totalorder %s20, 0
      %p42 = por %p40, %p41
      %s44 = sadd.s32 %s43, 1
      %p47 = scmp.eq.s32.totalorder %s14, 1
      %p48 = scmp.ne.s32.totalorder %s43, %s45
      %p49 = scmp.eq.s32.totalorder %s14, 0
      %p50 = por %p48, %p49
      %p51 = scmp.ne.s32.totalorder %s43, %s45
      %p52 = scmp.eq.s32.totalorder %s19, 1
      %p53 = por %p51, %p52
      %p54 = scmp.ne.s32.totalorder %s45, %s46
      %p55 = scmp.eq.s32.totalorder %s19, 0
      %p56 = por %p54, %p55
      %p57 = scmp.ne.s32.totalorder %s45, %s46
      %p58 = scmp.eq.s32.totalorder %s20, 1
      %p59 = por %p57, %p58
      %p61 = scmp.ne.s32.totalorder %s46, %s60
      %p62 = scmp.eq.s32.totalorder %s20, 0
      %p63 = por %p61, %p62
      %s65 = sadd.s32 %s64, 1
      %p68 = scmp.eq.s32.totalorder %s14, 1
      %p69 = scmp.ne.s32.totalorder %s64, %s66
      %p70 = scmp.eq.s32.totalorder %s14, 0
      %p71 = por %p69, %p70
      %p72 = scmp.ne.s32.totalorder %s64, %s66
      %p73 = scmp.eq.s32.totalorder %s19, 1
      %p74 = por %p72, %p73
      %p75 = scmp.ne.s32.totalorder %s66, %s67
      %p76 = scmp.eq.s32.totalorder %s19, 0
      %p77 = por %p75, %p76
      %p78 = scmp.ne.s32.totalorder %s66, %s67
      %p79 = scmp.eq.s32.totalorder %s20, 1
      %p80 = por %p78, %p79
      %p82 = scmp.ne.s32.totalorder %s67, %s81
      %p83 = scmp.eq.s32.totalorder %s20, 0
      %p84 = por %p82, %p83
      %s86 = sadd.s32 %s85, 1
      %p89 = scmp.eq.s32.totalorder %s14, 1
      %p90 = scmp.ne.s32.totalorder %s85, %s87
      %p91 = scmp.eq.s32.totalorder %s14, 0
      %p92 = por %p90, %p91
      %p93 = scmp.ne.s32.totalorder %s85, %s87
      %p94 = scmp.eq.s32.totalorder %s19, 1
      %p95 = por %p93, %p94
      %p96 = scmp.ne.s32.totalorder %s87, %s88
      %p97 = scmp.eq.s32.totalorder %s19, 0
      %p98 = por %p96, %p97
      %p99 = scmp.ne.s32.totalorder %s87, %s88
      %p100 = scmp.eq.s32.totalorder %s20, 1
      %p101 = por %p99, %p100
      %p103 = scmp.ne.s32.totalorder %s88, %s102
      %p104 = scmp.eq.s32.totalorder %s20, 0
      %p105 = por %p103, %p104
      %s106 = ssub.s32 %s14, %s21
      %p107 = scmp.eq.s32.totalorder %s106, 0
      %s109 = sadd.s32 %s108, 1
      %s110 = scalar_select %p107, %s108, %s109
      %p113 = pneg %p107
      %p114 = scmp.eq.s32.totalorder %s14, 1
      %p115 = por %p113, %p114
      %p116 = scmp.ne.s32.totalorder %s108, %s111
      %p117 = scmp.eq.s32.totalorder %s14, 0
      %p118 = por %p116, %p117
      %p119 = scmp.ne.s32.totalorder %s108, %s111
      %p120 = scmp.eq.s32.totalorder %s19, 1
      %p121 = por %p119, %p120
      %p122 = scmp.ne.s32.totalorder %s111, %s112
      %p123 = scmp.eq.s32.totalorder %s19, 0
      %p124 = por %p122, %p123
      %p125 = scmp.ne.s32.totalorder %s111, %s112
      %p126 = scmp.eq.s32.totalorder %s20, 1
      %p127 = por %p125, %p126
      %p129 = scmp.ne.s32.totalorder %s112, %s128
      %p130 = scmp.eq.s32.totalorder %s20, 0
      %p131 = por %p129, %p130
      %s132 = ssub.s32 %s14, %s21
      %p133 = scmp.eq.s32.totalorder %s132, 0
      %s135 = sadd.s32 %s134, 1
      %s136 = scalar_select %p133, %s134, %s135
      %p139 = pneg %p133
      %p140 = scmp.eq.s32.totalorder %s14, 1
      %p141 = por %p139, %p140
      %p142 = scmp.ne.s32.totalorder %s134, %s137
      %p143 = scmp.eq.s32.totalorder %s14, 0
      %p144 = por %p142, %p143
      %p145 = scmp.ne.s32.totalorder %s134, %s137
      %p146 = scmp.eq.s32.totalorder %s19, 1
      %p147 = por %p145, %p146
      %p148 = scmp.ne.s32.totalorder %s137, %s138
      %p149 = scmp.eq.s32.totalorder %s19, 0
      %p150 = por %p148, %p149
      %p151 = scmp.ne.s32.totalorder %s137, %s138
      %p152 = scmp.eq.s32.totalorder %s20, 1
      %p153 = por %p151, %p152
      %p155 = scmp.ne.s32.totalorder %s138, %s154
      %p156 = scmp.eq.s32.totalorder %s20, 0
      %p157 = por %p155, %p156
      %p158 = scmp.le.s32.totalorder 1, %s14
      %p159 = scmp.lt.s32.totalorder %s14, 3
      %p160 = pnand %p158, %p159
      %p161 = pneg %p160
      // Predicated region
      $region9: #{kan_convolutional_layer.1} parent=5 // pred_check
        _
      $region10: #{kan_convolutional_layer.1} parent=5 // pred_check_branch
        %163 = sbr.rel (%p160) target = $region12
      $region11: #{kan_convolutional_layer.1} parent=5 // pred_region
        %s164 = ssub.s32 %s14, 1
        // Predicated region
        $region13: #{kan_convolutional_layer.1} parent=11 // pred_check
          %p165 = pneg %p35
        $region14: #{kan_convolutional_layer.1} parent=11 // pred_check_branch
          %167 = sbr.rel (%p165) target = $region16
        $region15: #{kan_convolutional_layer.1} parent=11 // pred_region
          %169 = vsyncadd [#allocation3], 0
          %s171 = sshll.u32 %s0, 4
          %s172 = int_to_ptr.vmem [resolvable:$true] %s171
          %174 = dma.vmem_to_smem %s172, 64, [#allocation2], [#allocation3]
        $region16: #{kan_convolutional_layer.1} parent=11 // pred_fallthru
          _
        // Predicated region
        $region17: #{kan_convolutional_layer.1} parent=11 // pred_check
          %p175 = pneg %p56
        $region18: #{kan_convolutional_layer.1} parent=11 // pred_check_branch
          %177 = sbr.rel (%p175) target = $region20
        $region19: #{kan_convolutional_layer.1} parent=11 // pred_region
          %179 = vsyncadd [#allocation5], 0
          %s181 = sshll.u32 %s1, 4
          %s182 = int_to_ptr.vmem [resolvable:$true] %s181
          %184 = dma.vmem_to_smem %s182, 64, [#allocation4], [#allocation5]
        $region20: #{kan_convolutional_layer.1} parent=11 // pred_fallthru
          _
        // Predicated region
        $region21: #{kan_convolutional_layer.1} parent=11 // pred_check
          %p185 = pneg %p77
        $region22: #{kan_convolutional_layer.1} parent=11 // pred_check_branch
          %187 = sbr.rel (%p185) target = $region24
        $region23: #{kan_convolutional_layer.1} parent=11 // pred_region
          %189 = vsyncadd [#allocation5], 0
          %s191 = sshll.u32 %s2, 4
          %s192 = int_to_ptr.vmem [resolvable:$true] %s191
          %194 = dma.vmem_to_smem %s192, 32, [#allocation6], [#allocation5]
        $region24: #{kan_convolutional_layer.1} parent=11 // pred_fallthru
          _
        // Predicated region
        $region25: #{kan_convolutional_layer.1} parent=11 // pred_check
          %p195 = pneg %p98
        $region26: #{kan_convolutional_layer.1} parent=11 // pred_check_branch
          %197 = sbr.rel (%p195) target = $region28
        $region27: #{kan_convolutional_layer.1} parent=11 // pred_region
          %199 = vsyncadd [#allocation8], 0
          %s201 = sshll.u32 %s3, 4
          %s202 = int_to_ptr.vmem [resolvable:$true] %s201
          %204 = dma.vmem_to_smem %s202, 32, [#allocation7], [#allocation8]
        $region28: #{kan_convolutional_layer.1} parent=11 // pred_fallthru
          _
      $region12: #{kan_convolutional_layer.1} parent=5 // pred_fallthru
        _
      %p205 = scmp.lt.s32.totalorder %s14, 2
      // Predicated region
      $region29: #{kan_convolutional_layer.1} parent=5 // pred_check
        %p206 = pneg %p205
      $region30: #{kan_convolutional_layer.1} parent=5 // pred_check_branch
        %208 = sbr.rel (%p206) target = $region32
      $region31: #{kan_convolutional_layer.1} parent=5 // pred_region
        // Predicated region
        $region33: #{kan_convolutional_layer.1} parent=31 // pred_check
          %p209 = pneg %p118
        $region34: #{kan_convolutional_layer.1} parent=31 // pred_check_branch
          %211 = sbr.rel (%p209) target = $region36
        $region35: #{kan_convolutional_layer.1} parent=31 // pred_region
          %s212 = sand.u32 %s108, 1
          %s213 = sand.u32 %s108, 1
          %s214 = smul.addr %s213, 32
          %s215 = scalar_lea.vmem [#allocation9], %s214
          %s216 = smul.addr %s14, 8
          %s217 = scalar_lea.vmem %s4, %s216
          // Predicated region
          $region37: #{kan_convolutional_layer.1} parent=35 // pred_check
            _
          $region38: #{kan_convolutional_layer.1} parent=35 // pred_check_branch
            %219 = sbr.rel (0) target = $region40
          $region39: #{kan_convolutional_layer.1} parent=35 // pred_region
            // Predicated region
            $region41: #{kan_convolutional_layer.1} parent=39 // pred_check
              _
            $region42: #{kan_convolutional_layer.1} parent=39 // pred_check_branch
              %221 = sbr.rel (0) target = $region44
            $region43: #{kan_convolutional_layer.1} parent=39 // pred_region
              // Predicated region
              $region56: #{kan_convolutional_layer.1} parent=43 // pred_check
                _
              $region57: #{kan_convolutional_layer.1} parent=43 // pred_check_branch
                %243 = sbr.rel (0) target = $region59
              $region58: #{kan_convolutional_layer.1} parent=43 // pred_region
                loop: start=0, step=1, limit=1
                $region60: #{kan_convolutional_layer.1} parent=58 // loop_pre_header
                  _
                $region61: #{kan_convolutional_layer.1} parent=58 // loop_header
                  %s245 = sphi 0, %s249
                  %p246 = scmp.ge.s32.totalorder %s245, 1
                  %s250 = sphi %s217, %s217
                  %s251 = sphi %s215, %s215
                $region62: #{kan_convolutional_layer.1} parent=58 // loop_header_branch
                  %248 = sbr.rel (%p246) target = $region66
                $region63: #{kan_convolutional_layer.1} parent=58 // loop_body
                  %v252 = vld [vmem:[%s250] sm:$0xff]
                  %253 = vst [vmem:[%s251] sm:$0xff] %v252
                  %v254 = vld [vmem:[%s250 + $0x10] sm:$0xff]
                  %255 = vst [vmem:[%s251 + $0x8] sm:$0xff] %v254
                  %v256 = vld [vmem:[%s250 + $0x20] sm:$0xff]
                  %257 = vst [vmem:[%s251 + $0x10] sm:$0xff] %v256
                  %v258 = vld [vmem:[%s250 + $0x30] sm:$0xff]
                  %259 = vst [vmem:[%s251 + $0x18] sm:$0xff] %v258
                $region64: #{kan_convolutional_layer.1} parent=58 // loop_footer
                  %s249 = sadd.s32 1, %s245
                $region65: #{kan_convolutional_layer.1} parent=58 // loop_footer_branch
                  %244 = sbr.rel target = $region61
                $region66: #{kan_convolutional_layer.1} parent=58 // loop_exit
                  _
              $region59: #{kan_convolutional_layer.1} parent=43 // pred_fallthru
                _
              // Predicated region
              $region67: #{kan_convolutional_layer.1} parent=43 // pred_check
                _
              $region68: #{kan_convolutional_layer.1} parent=43 // pred_check_branch
                %261 = sbr.rel target = $region70
              $region69: #{kan_convolutional_layer.1} parent=43 // pred_region
                _
              $region70: #{kan_convolutional_layer.1} parent=43 // pred_fallthru
                _
            $region44: #{kan_convolutional_layer.1} parent=39 // pred_fallthru
              _
            // Predicated region
            $region45: #{kan_convolutional_layer.1} parent=39 // pred_check
              _
            $region46: #{kan_convolutional_layer.1} parent=39 // pred_check_branch
              %223 = sbr.rel target = $region48
            $region47: #{kan_convolutional_layer.1} parent=39 // pred_region
              %s225 = ssub.s32 256, 1
              loop: start=0, step=1, limit=1
              $region49: #{kan_convolutional_layer.1} parent=47 // loop_pre_header
                _
              $region50: #{kan_convolutional_layer.1} parent=47 // loop_header
                %s227 = sphi 0, %s231
                %p228 = scmp.ge.s32.totalorder %s227, 1
                %s232 = sphi %s217, %s217
                %s233 = sphi %s215, %s215
              $region51: #{kan_convolutional_layer.1} parent=47 // loop_header_branch
                %230 = sbr.rel (%p228) target = $region55
              $region52: #{kan_convolutional_layer.1} parent=47 // loop_body
                %v234 = vld [vmem:[%s232] sm:%s225]
                %235 = vst [vmem:[%s233] sm:%s225] %v234
                %v236 = vld [vmem:[%s232 + $0x10] sm:%s225]
                %237 = vst [vmem:[%s233 + $0x8] sm:%s225] %v236
                %v238 = vld [vmem:[%s232 + $0x20] sm:%s225]
                %239 = vst [vmem:[%s233 + $0x10] sm:%s225] %v238
                %v240 = vld [vmem:[%s232 + $0x30] sm:%s225]
                %241 = vst [vmem:[%s233 + $0x18] sm:%s225] %v240
              $region53: #{kan_convolutional_layer.1} parent=47 // loop_footer
                %s231 = sadd.s32 1, %s227
              $region54: #{kan_convolutional_layer.1} parent=47 // loop_footer_branch
                %226 = sbr.rel target = $region50
              $region55: #{kan_convolutional_layer.1} parent=47 // loop_exit
                _
            $region48: #{kan_convolutional_layer.1} parent=39 // pred_fallthru
              _
          $region40: #{kan_convolutional_layer.1} parent=35 // pred_fallthru
            _
          %262 = vnop
        $region36: #{kan_convolutional_layer.1} parent=31 // pred_fallthru
          _
      $region32: #{kan_convolutional_layer.1} parent=5 // pred_fallthru
        _
      %p263 = scmp.le.s32.totalorder 1, %s14
      %p264 = scmp.lt.s32.totalorder %s14, 3
      %p265 = pnand %p263, %p264
      %p266 = pneg %p265
      // Predicated region
      $region71: #{kan_convolutional_layer.1} parent=5 // pred_check
        _
      $region72: #{kan_convolutional_layer.1} parent=5 // pred_check_branch
        %268 = sbr.rel (%p265) target = $region74
      $region73: #{kan_convolutional_layer.1} parent=5 // pred_region
        %s269 = ssub.s32 %s14, 1
        // Predicated region
        $region75: #{kan_convolutional_layer.1} parent=73 // pred_check
          %p270 = pneg %p35
        $region76: #{kan_convolutional_layer.1} parent=73 // pred_check_branch
          %272 = sbr.rel (%p270) target = $region78
        $region77: #{kan_convolutional_layer.1} parent=73 // pred_region
          %274 = dma.done [#allocation3], 64
        $region78: #{kan_convolutional_layer.1} parent=73 // pred_fallthru
          _
        // Predicated region
        $region79: #{kan_convolutional_layer.1} parent=73 // pred_check
          %p275 = pneg %p56
        $region80: #{kan_convolutional_layer.1} parent=73 // pred_check_branch
          %277 = sbr.rel (%p275) target = $region82
        $region81: #{kan_convolutional_layer.1} parent=73 // pred_region
          %279 = dma.done [#allocation5], 64
        $region82: #{kan_convolutional_layer.1} parent=73 // pred_fallthru
          _
        // Predicated region
        $region83: #{kan_convolutional_layer.1} parent=73 // pred_check
          %p280 = pneg %p77
        $region84: #{kan_convolutional_layer.1} parent=73 // pred_check_branch
          %282 = sbr.rel (%p280) target = $region86
        $region85: #{kan_convolutional_layer.1} parent=73 // pred_region
          %284 = dma.done [#allocation5], 32
        $region86: #{kan_convolutional_layer.1} parent=73 // pred_fallthru
          _
        // Predicated region
        $region87: #{kan_convolutional_layer.1} parent=73 // pred_check
          %p285 = pneg %p98
        $region88: #{kan_convolutional_layer.1} parent=73 // pred_check_branch
          %287 = sbr.rel (%p285) target = $region90
        $region89: #{kan_convolutional_layer.1} parent=73 // pred_region
          %289 = dma.done [#allocation8], 32
        $region90: #{kan_convolutional_layer.1} parent=73 // pred_fallthru
          _
        %s290 = sand.u32 %s111, 1
        %s291 = sand.u32 %s111, 1
        %s292 = smul.addr %s291, 32
        %s293 = scalar_lea.vmem [#allocation9], %s292
        // Predicated region
        $region91: #{kan_convolutional_layer.1} parent=73 // pred_check
          %p294 = pneg %p124
        $region92: #{kan_convolutional_layer.1} parent=73 // pred_check_branch
          %296 = sbr.rel (%p294) target = $region94
        $region93: #{kan_convolutional_layer.1} parent=73 // pred_region
          _
        $region94: #{kan_convolutional_layer.1} parent=73 // pred_fallthru
          _
        %297 = sfence
        %p298 = pneg %p35
        %p299 = pneg %p32
        %p300 = pneg %p56
        %p301 = pneg %p53
        %p302 = pneg %p77
        %p303 = pneg %p74
        %p304 = pneg %p98
        %p305 = pneg %p95
        %s306 = sand.u32 %s111, 1
        %s307 = sand.u32 %s111, 1
        %s308 = smul.addr %s307, 32
        %s309 = scalar_lea.vmem [#allocation9], %s308
        %p310 = pneg %p124
        %p311 = pneg %p121
        %p312 = pneg %p150
        %p313 = pneg %p147
        %s314 = sand.u32 %s137, 1
        %s315 = sand.u32 %s137, 1
        %s316 = smul.addr %s315, 16
        %s317 = scalar_lea.vmem [#allocation10], %s316
        %v318 = vld [vmem:[%s293] sm:$0xff]
        %v319 = vmul.f32 %v318, 0.5
        %v320 = vtanh.pop %v319
        %v321 = vadd.f32 %v320, 1.0
        %v322 = vmul.f32 %v319, %v321
        %s323 = sld [smem:[#allocation6]]
        %v324 = vstv %s323
        %v325 = vmul.f32 %v322, %v324
        %v326 = vadd.f32 %v325, 0.0
        %s327 = sld [smem:[#allocation6 + $0x80]]
        %v328 = vstv %s327
        %v329 = vmul.f32 %v322, %v328
        %v330 = vadd.f32 %v329, 0.0
        %s331 = sld [smem:[#allocation2]]
        %s332 = sld [smem:[#allocation2 + $0x1]]
        %s333 = sld [smem:[#allocation2 + $0x2]]
        %s334 = sld [smem:[#allocation2 + $0x3]]
        %s335 = sld [smem:[#allocation2 + $0x4]]
        %s336 = sld [smem:[#allocation2 + $0x5]]
        %s337 = sld [smem:[#allocation2 + $0x6]]
        %s338 = sld [smem:[#allocation2 + $0x7]]
        %s339 = sld [smem:[#allocation2 + $0x8]]
        %s340 = sld [smem:[#allocation2 + $0x9]]
        %s341 = sld [smem:[#allocation2 + $0xa]]
        %s342 = sld [smem:[#allocation2 + $0xb]]
        %v343 = vstv %s331
        %v344 = vsub.f32 %v318, %v343
        %v345 = vstv %s332
        %v346 = vsub.f32 %v318, %v345
        %v347 = vstv %s333
        %v348 = vsub.f32 %v318, %v347
        %v349 = vstv %s334
        %v350 = vsub.f32 %v318, %v349
        %v351 = vstv %s335
        %v352 = vsub.f32 %v318, %v351
        %v353 = vstv %s336
        %v354 = vsub.f32 %v318, %v353
        %v355 = vstv %s337
        %v356 = vsub.f32 %v318, %v355
        %v357 = vstv %s338
        %v358 = vsub.f32 %v318, %v357
        %v359 = vstv %s339
        %v360 = vsub.f32 %v318, %v359
        %v361 = vstv %s340
        %v362 = vsub.f32 %v318, %v361
        %v363 = vstv %s341
        %v364 = vsub.f32 %v318, %v363
        %v365 = vstv %s342
        %v366 = vsub.f32 %v318, %v365
        %vm367 = vcmp.ge.f32.partialorder %v318, %v343
        %vm368 = vcmp.lt.f32.partialorder %v318, %v345
        %vm369 = vmand %vm367, %vm368
        %v370 = vsel %vm369, 1, 0
        %v371 = vcvt.s32.f32 %v370
        %vm372 = vcmp.ge.f32.partialorder %v318, %v345
        %vm373 = vcmp.lt.f32.partialorder %v318, %v347
        %vm374 = vmand %vm372, %vm373
        %v375 = vsel %vm374, 1, 0
        %v376 = vcvt.s32.f32 %v375
        %vm377 = vcmp.ge.f32.partialorder %v318, %v347
        %vm378 = vcmp.lt.f32.partialorder %v318, %v349
        %vm379 = vmand %vm377, %vm378
        %v380 = vsel %vm379, 1, 0
        %v381 = vcvt.s32.f32 %v380
        %vm382 = vcmp.ge.f32.partialorder %v318, %v349
        %vm383 = vcmp.lt.f32.partialorder %v318, %v351
        %vm384 = vmand %vm382, %vm383
        %v385 = vsel %vm384, 1, 0
        %v386 = vcvt.s32.f32 %v385
        %vm387 = vcmp.ge.f32.partialorder %v318, %v351
        %vm388 = vcmp.lt.f32.partialorder %v318, %v353
        %vm389 = vmand %vm387, %vm388
        %v390 = vsel %vm389, 1, 0
        %v391 = vcvt.s32.f32 %v390
        %vm392 = vcmp.ge.f32.partialorder %v318, %v353
        %vm393 = vcmp.lt.f32.partialorder %v318, %v355
        %vm394 = vmand %vm392, %vm393
        %v395 = vsel %vm394, 1, 0
        %v396 = vcvt.s32.f32 %v395
        %vm397 = vcmp.ge.f32.partialorder %v318, %v355
        %vm398 = vcmp.lt.f32.partialorder %v318, %v357
        %vm399 = vmand %vm397, %vm398
        %v400 = vsel %vm399, 1, 0
        %v401 = vcvt.s32.f32 %v400
        %vm402 = vcmp.ge.f32.partialorder %v318, %v357
        %vm403 = vcmp.lt.f32.partialorder %v318, %v359
        %vm404 = vmand %vm402, %vm403
        %v405 = vsel %vm404, 1, 0
        %v406 = vcvt.s32.f32 %v405
        %vm407 = vcmp.ge.f32.partialorder %v318, %v359
        %vm408 = vcmp.lt.f32.partialorder %v318, %v361
        %vm409 = vmand %vm407, %vm408
        %v410 = vsel %vm409, 1, 0
        %v411 = vcvt.s32.f32 %v410
        %vm412 = vcmp.ge.f32.partialorder %v318, %v361
        %vm413 = vcmp.lt.f32.partialorder %v318, %v363
        %vm414 = vmand %vm412, %vm413
        %v415 = vsel %vm414, 1, 0
        %v416 = vcvt.s32.f32 %v415
        %vm417 = vcmp.ge.f32.partialorder %v318, %v363
        %vm418 = vcmp.lt.f32.partialorder %v318, %v365
        %vm419 = vmand %vm417, %vm418
        %v420 = vsel %vm419, 1, 0
        %v421 = vcvt.s32.f32 %v420
        %s422 = sld [smem:[#allocation4]]
        %s423 = sld [smem:[#allocation4 + $0x1]]
        %s424 = sld [smem:[#allocation4 + $0x2]]
        %s425 = sld [smem:[#allocation4 + $0x3]]
        %s426 = sld [smem:[#allocation4 + $0x4]]
        %s427 = sld [smem:[#allocation4 + $0x5]]
        %s428 = sld [smem:[#allocation4 + $0x6]]
        %s429 = sld [smem:[#allocation4 + $0x7]]
        %s430 = sld [smem:[#allocation4 + $0x8]]
        %s431 = sld [smem:[#allocation4 + $0x9]]
        %s432 = sld [smem:[#allocation4 + $0xa]]
        %v433 = vstv %s422
        %v434 = vmul.f32 %v344, %v433
        %v435 = vmul.f32 %v434, %v371
        %v436 = vstv %s423
        %v437 = vmul.f32 %v348, %v436
        %v438 = vmul.f32 %v437, %v376
        %v439 = vsub.f32 %v435, %v438
        %v440 = vmul.f32 %v346, %v436
        %v441 = vmul.f32 %v440, %v376
        %v442 = vstv %s424
        %v443 = vmul.f32 %v350, %v442
        %v444 = vmul.f32 %v443, %v381
        %v445 = vsub.f32 %v441, %v444
        %v446 = vmul.f32 %v348, %v442
        %v447 = vmul.f32 %v446, %v381
        %v448 = vstv %s425
        %v449 = vmul.f32 %v352, %v448
        %v450 = vmul.f32 %v449, %v386
        %v451 = vsub.f32 %v447, %v450
        %v452 = vmul.f32 %v350, %v448
        %v453 = vmul.f32 %v452, %v386
        %v454 = vstv %s426
        %v455 = vmul.f32 %v354, %v454
        %v456 = vmul.f32 %v455, %v391
        %v457 = vsub.f32 %v453, %v456
        %v458 = vmul.f32 %v352, %v454
        %v459 = vmul.f32 %v458, %v391
        %v460 = vstv %s427
        %v461 = vmul.f32 %v356, %v460
        %v462 = vmul.f32 %v461, %v396
        %v463 = vsub.f32 %v459, %v462
        %v464 = vmul.f32 %v354, %v460
        %v465 = vmul.f32 %v464, %v396
        %v466 = vstv %s428
        %v467 = vmul.f32 %v358, %v466
        %v468 = vmul.f32 %v467, %v401
        %v469 = vsub.f32 %v465, %v468
        %v470 = vmul.f32 %v356, %v466
        %v471 = vmul.f32 %v470, %v401
        %v472 = vstv %s429
        %v473 = vmul.f32 %v360, %v472
        %v474 = vmul.f32 %v473, %v406
        %v475 = vsub.f32 %v471, %v474
        %v476 = vmul.f32 %v358, %v472
        %v477 = vmul.f32 %v476, %v406
        %v478 = vstv %s430
        %v479 = vmul.f32 %v362, %v478
        %v480 = vmul.f32 %v479, %v411
        %v481 = vsub.f32 %v477, %v480
        %v482 = vmul.f32 %v360, %v478
        %v483 = vmul.f32 %v482, %v411
        %v484 = vstv %s431
        %v485 = vmul.f32 %v364, %v484
        %v486 = vmul.f32 %v485, %v416
        %v487 = vsub.f32 %v483, %v486
        %v488 = vmul.f32 %v362, %v484
        %v489 = vmul.f32 %v488, %v416
        %v490 = vstv %s432
        %v491 = vmul.f32 %v366, %v490
        %v492 = vmul.f32 %v491, %v421
        %v493 = vsub.f32 %v489, %v492
        %s494 = sld [smem:[#allocation4 + $0xc]]
        %s495 = sld [smem:[#allocation4 + $0xd]]
        %s496 = sld [smem:[#allocation4 + $0xe]]
        %s497 = sld [smem:[#allocation4 + $0xf]]
        %s498 = sld [smem:[#allocation4 + $0x10]]
        %s499 = sld [smem:[#allocation4 + $0x11]]
        %s500 = sld [smem:[#allocation4 + $0x12]]
        %s501 = sld [smem:[#allocation4 + $0x13]]
        %s502 = sld [smem:[#allocation4 + $0x14]]
        %s503 = sld [smem:[#allocation4 + $0x15]]
        %v504 = vstv %s494
        %v505 = vmul.f32 %v344, %v504
        %v506 = vmul.f32 %v505, %v439
        %v507 = vstv %s495
        %v508 = vmul.f32 %v350, %v507
        %v509 = vmul.f32 %v508, %v445
        %v510 = vsub.f32 %v506, %v509
        %v511 = vmul.f32 %v346, %v507
        %v512 = vmul.f32 %v511, %v445
        %v513 = vstv %s496
        %v514 = vmul.f32 %v352, %v513
        %v515 = vmul.f32 %v514, %v451
        %v516 = vsub.f32 %v512, %v515
        %v517 = vmul.f32 %v348, %v513
        %v518 = vmul.f32 %v517, %v451
        %v519 = vstv %s497
        %v520 = vmul.f32 %v354, %v519
        %v521 = vmul.f32 %v520, %v457
        %v522 = vsub.f32 %v518, %v521
        %v523 = vmul.f32 %v350, %v519
        %v524 = vmul.f32 %v523, %v457
        %v525 = vstv %s498
        %v526 = vmul.f32 %v356, %v525
        %v527 = vmul.f32 %v526, %v463
        %v528 = vsub.f32 %v524, %v527
        %v529 = vmul.f32 %v352, %v525
        %v530 = vmul.f32 %v529, %v463
        %v531 = vstv %s499
        %v532 = vmul.f32 %v358, %v531
        %v533 = vmul.f32 %v532, %v469
        %v534 = vsub.f32 %v530, %v533
        %v535 = vmul.f32 %v354, %v531
        %v536 = vmul.f32 %v535, %v469
        %v537 = vstv %s500
        %v538 = vmul.f32 %v360, %v537
        %v539 = vmul.f32 %v538, %v475
        %v540 = vsub.f32 %v536, %v539
        %v541 = vmul.f32 %v356, %v537
        %v542 = vmul.f32 %v541, %v475
        %v543 = vstv %s501
        %v544 = vmul.f32 %v362, %v543
        %v545 = vmul.f32 %v544, %v481
        %v546 = vsub.f32 %v542, %v545
        %v547 = vmul.f32 %v358, %v543
        %v548 = vmul.f32 %v547, %v481
        %v549 = vstv %s502
        %v550 = vmul.f32 %v364, %v549
        %v551 = vmul.f32 %v550, %v487
        %v552 = vsub.f32 %v548, %v551
        %v553 = vmul.f32 %v360, %v549
        %v554 = vmul.f32 %v553, %v487
        %v555 = vstv %s503
        %v556 = vmul.f32 %v366, %v555
        %v557 = vmul.f32 %v556, %v493
        %v558 = vsub.f32 %v554, %v557
        %s559 = sld [smem:[#allocation4 + $0x18]]
        %s560 = sld [smem:[#allocation4 + $0x19]]
        %s561 = sld [smem:[#allocation4 + $0x1a]]
        %s562 = sld [smem:[#allocation4 + $0x1b]]
        %s563 = sld [smem:[#allocation4 + $0x1c]]
        %s564 = sld [smem:[#allocation4 + $0x1d]]
        %s565 = sld [smem:[#allocation4 + $0x1e]]
        %s566 = sld [smem:[#allocation4 + $0x1f]]
        %s567 = sld [smem:[#allocation4 + $0x20]]
        %v568 = vstv %s559
        %v569 = vmul.f32 %v344, %v568
        %v570 = vmul.f32 %v569, %v510
        %v571 = vstv %s560
        %v572 = vmul.f32 %v352, %v571
        %v573 = vmul.f32 %v572, %v516
        %v574 = vsub.f32 %v570, %v573
        %v575 = vmul.f32 %v346, %v571
        %v576 = vmul.f32 %v575, %v516
        %v577 = vstv %s561
        %v578 = vmul.f32 %v354, %v577
        %v579 = vmul.f32 %v578, %v522
        %v580 = vsub.f32 %v576, %v579
        %v581 = vmul.f32 %v348, %v577
        %v582 = vmul.f32 %v581, %v522
        %v583 = vstv %s562
        %v584 = vmul.f32 %v356, %v583
        %v585 = vmul.f32 %v584, %v528
        %v586 = vsub.f32 %v582, %v585
        %v587 = vmul.f32 %v350, %v583
        %v588 = vmul.f32 %v587, %v528
        %v589 = vstv %s563
        %v590 = vmul.f32 %v358, %v589
        %v591 = vmul.f32 %v590, %v534
        %v592 = vsub.f32 %v588, %v591
        %v593 = vmul.f32 %v352, %v589
        %v594 = vmul.f32 %v593, %v534
        %v595 = vstv %s564
        %v596 = vmul.f32 %v360, %v595
        %v597 = vmul.f32 %v596, %v540
        %v598 = vsub.f32 %v594, %v597
        %v599 = vmul.f32 %v354, %v595
        %v600 = vmul.f32 %v599, %v540
        %v601 = vstv %s565
        %v602 = vmul.f32 %v362, %v601
        %v603 = vmul.f32 %v602, %v546
        %v604 = vsub.f32 %v600, %v603
        %v605 = vmul.f32 %v356, %v601
        %v606 = vmul.f32 %v605, %v546
        %v607 = vstv %s566
        %v608 = vmul.f32 %v364, %v607
        %v609 = vmul.f32 %v608, %v552
        %v610 = vsub.f32 %v606, %v609
        %v611 = vmul.f32 %v358, %v607
        %v612 = vmul.f32 %v611, %v552
        %v613 = vstv %s567
        %v614 = vmul.f32 %v366, %v613
        %v615 = vmul.f32 %v614, %v558
        %v616 = vsub.f32 %v612, %v615
        %s617 = sld [smem:[#allocation7]]
        %v618 = vstv %s617
        %v619 = vmul.f32 %v574, %v618
        %s620 = sld [smem:[#allocation7 + $0x1]]
        %v621 = vstv %s620
        %v622 = vmul.f32 %v580, %v621
        %v623 = vadd.f32 %v619, %v622
        %s624 = sld [smem:[#allocation7 + $0x2]]
        %v625 = vstv %s624
        %v626 = vmul.f32 %v586, %v625
        %v627 = vadd.f32 %v623, %v626
        %s628 = sld [smem:[#allocation7 + $0x3]]
        %v629 = vstv %s628
        %v630 = vmul.f32 %v592, %v629
        %v631 = vadd.f32 %v627, %v630
        %s632 = sld [smem:[#allocation7 + $0x4]]
        %v633 = vstv %s632
        %v634 = vmul.f32 %v598, %v633
        %v635 = vadd.f32 %v631, %v634
        %s636 = sld [smem:[#allocation7 + $0x5]]
        %v637 = vstv %s636
        %v638 = vmul.f32 %v604, %v637
        %v639 = vadd.f32 %v635, %v638
        %s640 = sld [smem:[#allocation7 + $0x6]]
        %v641 = vstv %s640
        %v642 = vmul.f32 %v610, %v641
        %v643 = vadd.f32 %v639, %v642
        %s644 = sld [smem:[#allocation7 + $0x7]]
        %v645 = vstv %s644
        %v646 = vmul.f32 %v616, %v645
        %v647 = vadd.f32 %v643, %v646
        %v648 = vadd.f32 %v326, %v647
        %s649 = sld [smem:[#allocation7 + $0x80]]
        %v650 = vstv %s649
        %v651 = vmul.f32 %v574, %v650
        %s652 = sld [smem:[#allocation7 + $0x81]]
        %v653 = vstv %s652
        %v654 = vmul.f32 %v580, %v653
        %v655 = vadd.f32 %v651, %v654
        %s656 = sld [smem:[#allocation7 + $0x82]]
        %v657 = vstv %s656
        %v658 = vmul.f32 %v586, %v657
        %v659 = vadd.f32 %v655, %v658
        %s660 = sld [smem:[#allocation7 + $0x83]]
        %v661 = vstv %s660
        %v662 = vmul.f32 %v592, %v661
        %v663 = vadd.f32 %v659, %v662
        %s664 = sld [smem:[#allocation7 + $0x84]]
        %v665 = vstv %s664
        %v666 = vmul.f32 %v598, %v665
        %v667 = vadd.f32 %v663, %v666
        %s668 = sld [smem:[#allocation7 + $0x85]]
        %v669 = vstv %s668
        %v670 = vmul.f32 %v604, %v669
        %v671 = vadd.f32 %v667, %v670
        %s672 = sld [smem:[#allocation7 + $0x86]]
        %v673 = vstv %s672
        %v674 = vmul.f32 %v610, %v673
        %v675 = vadd.f32 %v671, %v674
        %s676 = sld [smem:[#allocation7 + $0x87]]
        %v677 = vstv %s676
        %v678 = vmul.f32 %v616, %v677
        %v679 = vadd.f32 %v675, %v678
        %v680 = vadd.f32 %v330, %v679
        %s681 = sadd.s32 0, 8
        %s682 = scalar_lea.vmem %s293, %s681 [#allocation9]
        %v683 = vld [vmem:[%s682] sm:$0xff]
        %v684 = vmul.f32 %v683, 0.5
        %v685 = vtanh.pop %v684
        %v686 = vadd.f32 %v685, 1.0
        %v687 = vmul.f32 %v684, %v686
        %s688 = sld [smem:[#allocation6 + $0x1]]
        %v689 = vstv %s688
        %v690 = vmul.f32 %v687, %v689
        %v691 = vadd.f32 %v648, %v690
        %s692 = sld [smem:[#allocation6 + $0x81]]
        %v693 = vstv %s692
        %v694 = vmul.f32 %v687, %v693
        %v695 = vadd.f32 %v680, %v694
        %s696 = sld [smem:[#allocation2 + $0x80]]
        %s697 = sld [smem:[#allocation2 + $0x81]]
        %s698 = sld [smem:[#allocation2 + $0x82]]
        %s699 = sld [smem:[#allocation2 + $0x83]]
        %s700 = sld [smem:[#allocation2 + $0x84]]
        %s701 = sld [smem:[#allocation2 + $0x85]]
        %s702 = sld [smem:[#allocation2 + $0x86]]
        %s703 = sld [smem:[#allocation2 + $0x87]]
        %s704 = sld [smem:[#allocation2 + $0x88]]
        %s705 = sld [smem:[#allocation2 + $0x89]]
        %s706 = sld [smem:[#allocation2 + $0x8a]]
        %s707 = sld [smem:[#allocation2 + $0x8b]]
        %v708 = vstv %s696
        %v709 = vsub.f32 %v683, %v708
        %v710 = vstv %s697
        %v711 = vsub.f32 %v683, %v710
        %v712 = vstv %s698
        %v713 = vsub.f32 %v683, %v712
        %v714 = vstv %s699
        %v715 = vsub.f32 %v683, %v714
        %v716 = vstv %s700
        %v717 = vsub.f32 %v683, %v716
        %v718 = vstv %s701
        %v719 = vsub.f32 %v683, %v718
        %v720 = vstv %s702
        %v721 = vsub.f32 %v683, %v720
        %v722 = vstv %s703
        %v723 = vsub.f32 %v683, %v722
        %v724 = vstv %s704
        %v725 = vsub.f32 %v683, %v724
        %v726 = vstv %s705
        %v727 = vsub.f32 %v683, %v726
        %v728 = vstv %s706
        %v729 = vsub.f32 %v683, %v728
        %v730 = vstv %s707
        %v731 = vsub.f32 %v683, %v730
        %vm732 = vcmp.ge.f32.partialorder %v683, %v708
        %vm733 = vcmp.lt.f32.partialorder %v683, %v710
        %vm734 = vmand %vm732, %vm733
        %v735 = vsel %vm734, 1, 0
        %v736 = vcvt.s32.f32 %v735
        %vm737 = vcmp.ge.f32.partialorder %v683, %v710
        %vm738 = vcmp.lt.f32.partialorder %v683, %v712
        %vm739 = vmand %vm737, %vm738
        %v740 = vsel %vm739, 1, 0
        %v741 = vcvt.s32.f32 %v740
        %vm742 = vcmp.ge.f32.partialorder %v683, %v712
        %vm743 = vcmp.lt.f32.partialorder %v683, %v714
        %vm744 = vmand %vm742, %vm743
        %v745 = vsel %vm744, 1, 0
        %v746 = vcvt.s32.f32 %v745
        %vm747 = vcmp.ge.f32.partialorder %v683, %v714
        %vm748 = vcmp.lt.f32.partialorder %v683, %v716
        %vm749 = vmand %vm747, %vm748
        %v750 = vsel %vm749, 1, 0
        %v751 = vcvt.s32.f32 %v750
        %vm752 = vcmp.ge.f32.partialorder %v683, %v716
        %vm753 = vcmp.lt.f32.partialorder %v683, %v718
        %vm754 = vmand %vm752, %vm753
        %v755 = vsel %vm754, 1, 0
        %v756 = vcvt.s32.f32 %v755
        %vm757 = vcmp.ge.f32.partialorder %v683, %v718
        %vm758 = vcmp.lt.f32.partialorder %v683, %v720
        %vm759 = vmand %vm757, %vm758
        %v760 = vsel %vm759, 1, 0
        %v761 = vcvt.s32.f32 %v760
        %vm762 = vcmp.ge.f32.partialorder %v683, %v720
        %vm763 = vcmp.lt.f32.partialorder %v683, %v722
        %vm764 = vmand %vm762, %vm763
        %v765 = vsel %vm764, 1, 0
        %v766 = vcvt.s32.f32 %v765
        %vm767 = vcmp.ge.f32.partialorder %v683, %v722
        %vm768 = vcmp.lt.f32.partialorder %v683, %v724
        %vm769 = vmand %vm767, %vm768
        %v770 = vsel %vm769, 1, 0
        %v771 = vcvt.s32.f32 %v770
        %vm772 = vcmp.ge.f32.partialorder %v683, %v724
        %vm773 = vcmp.lt.f32.partialorder %v683, %v726
        %vm774 = vmand %vm772, %vm773
        %v775 = vsel %vm774, 1, 0
        %v776 = vcvt.s32.f32 %v775
        %vm777 = vcmp.ge.f32.partialorder %v683, %v726
        %vm778 = vcmp.lt.f32.partialorder %v683, %v728
        %vm779 = vmand %vm777, %vm778
        %v780 = vsel %vm779, 1, 0
        %v781 = vcvt.s32.f32 %v780
        %vm782 = vcmp.ge.f32.partialorder %v683, %v728
        %vm783 = vcmp.lt.f32.partialorder %v683, %v730
        %vm784 = vmand %vm782, %vm783
        %v785 = vsel %vm784, 1, 0
        %v786 = vcvt.s32.f32 %v785
        %s787 = sld [smem:[#allocation4 + $0x80]]
        %s788 = sld [smem:[#allocation4 + $0x81]]
        %s789 = sld [smem:[#allocation4 + $0x82]]
        %s790 = sld [smem:[#allocation4 + $0x83]]
        %s791 = sld [smem:[#allocation4 + $0x84]]
        %s792 = sld [smem:[#allocation4 + $0x85]]
        %s793 = sld [smem:[#allocation4 + $0x86]]
        %s794 = sld [smem:[#allocation4 + $0x87]]
        %s795 = sld [smem:[#allocation4 + $0x88]]
        %s796 = sld [smem:[#allocation4 + $0x89]]
        %s797 = sld [smem:[#allocation4 + $0x8a]]
        %v798 = vstv %s787
        %v799 = vmul.f32 %v709, %v798
        %v800 = vmul.f32 %v799, %v736
        %v801 = vstv %s788
        %v802 = vmul.f32 %v713, %v801
        %v803 = vmul.f32 %v802, %v741
        %v804 = vsub.f32 %v800, %v803
        %v805 = vmul.f32 %v711, %v801
        %v806 = vmul.f32 %v805, %v741
        %v807 = vstv %s789
        %v808 = vmul.f32 %v715, %v807
        %v809 = vmul.f32 %v808, %v746
        %v810 = vsub.f32 %v806, %v809
        %v811 = vmul.f32 %v713, %v807
        %v812 = vmul.f32 %v811, %v746
        %v813 = vstv %s790
        %v814 = vmul.f32 %v717, %v813
        %v815 = vmul.f32 %v814, %v751
        %v816 = vsub.f32 %v812, %v815
        %v817 = vmul.f32 %v715, %v813
        %v818 = vmul.f32 %v817, %v751
        %v819 = vstv %s791
        %v820 = vmul.f32 %v719, %v819
        %v821 = vmul.f32 %v820, %v756
        %v822 = vsub.f32 %v818, %v821
        %v823 = vmul.f32 %v717, %v819
        %v824 = vmul.f32 %v823, %v756
        %v825 = vstv %s792
        %v826 = vmul.f32 %v721, %v825
        %v827 = vmul.f32 %v826, %v761
        %v828 = vsub.f32 %v824, %v827
        %v829 = vmul.f32 %v719, %v825
        %v830 = vmul.f32 %v829, %v761
        %v831 = vstv %s793
        %v832 = vmul.f32 %v723, %v831
        %v833 = vmul.f32 %v832, %v766
        %v834 = vsub.f32 %v830, %v833
        %v835 = vmul.f32 %v721, %v831
        %v836 = vmul.f32 %v835, %v766
        %v837 = vstv %s794
        %v838 = vmul.f32 %v725, %v837
        %v839 = vmul.f32 %v838, %v771
        %v840 = vsub.f32 %v836, %v839
        %v841 = vmul.f32 %v723, %v837
        %v842 = vmul.f32 %v841, %v771
        %v843 = vstv %s795
        %v844 = vmul.f32 %v727, %v843
        %v845 = vmul.f32 %v844, %v776
        %v846 = vsub.f32 %v842, %v845
        %v847 = vmul.f32 %v725, %v843
        %v848 = vmul.f32 %v847, %v776
        %v849 = vstv %s796
        %v850 = vmul.f32 %v729, %v849
        %v851 = vmul.f32 %v850, %v781
        %v852 = vsub.f32 %v848, %v851
        %v853 = vmul.f32 %v727, %v849
        %v854 = vmul.f32 %v853, %v781
        %v855 = vstv %s797
        %v856 = vmul.f32 %v731, %v855
        %v857 = vmul.f32 %v856, %v786
        %v858 = vsub.f32 %v854, %v857
        %s859 = sld [smem:[#allocation4 + $0x8c]]
        %s860 = sld [smem:[#allocation4 + $0x8d]]
        %s861 = sld [smem:[#allocation4 + $0x8e]]
        %s862 = sld [smem:[#allocation4 + $0x8f]]
        %s863 = sld [smem:[#allocation4 + $0x90]]
        %s864 = sld [smem:[#allocation4 + $0x91]]
        %s865 = sld [smem:[#allocation4 + $0x92]]
        %s866 = sld [smem:[#allocation4 + $0x93]]
        %s867 = sld [smem:[#allocation4 + $0x94]]
        %s868 = sld [smem:[#allocation4 + $0x95]]
        %v869 = vstv %s859
        %v870 = vmul.f32 %v709, %v869
        %v871 = vmul.f32 %v870, %v804
        %v872 = vstv %s860
        %v873 = vmul.f32 %v715, %v872
        %v874 = vmul.f32 %v873, %v810
        %v875 = vsub.f32 %v871, %v874
        %v876 = vmul.f32 %v711, %v872
        %v877 = vmul.f32 %v876, %v810
        %v878 = vstv %s861
        %v879 = vmul.f32 %v717, %v878
        %v880 = vmul.f32 %v879, %v816
        %v881 = vsub.f32 %v877, %v880
        %v882 = vmul.f32 %v713, %v878
        %v883 = vmul.f32 %v882, %v816
        %v884 = vstv %s862
        %v885 = vmul.f32 %v719, %v884
        %v886 = vmul.f32 %v885, %v822
        %v887 = vsub.f32 %v883, %v886
        %v888 = vmul.f32 %v715, %v884
        %v889 = vmul.f32 %v888, %v822
        %v890 = vstv %s863
        %v891 = vmul.f32 %v721, %v890
        %v892 = vmul.f32 %v891, %v828
        %v893 = vsub.f32 %v889, %v892
        %v894 = vmul.f32 %v717, %v890
        %v895 = vmul.f32 %v894, %v828
        %v896 = vstv %s864
        %v897 = vmul.f32 %v723, %v896
        %v898 = vmul.f32 %v897, %v834
        %v899 = vsub.f32 %v895, %v898
        %v900 = vmul.f32 %v719, %v896
        %v901 = vmul.f32 %v900, %v834
        %v902 = vstv %s865
        %v903 = vmul.f32 %v725, %v902
        %v904 = vmul.f32 %v903, %v840
        %v905 = vsub.f32 %v901, %v904
        %v906 = vmul.f32 %v721, %v902
        %v907 = vmul.f32 %v906, %v840
        %v908 = vstv %s866
        %v909 = vmul.f32 %v727, %v908
        %v910 = vmul.f32 %v909, %v846
        %v911 = vsub.f32 %v907, %v910
        %v912 = vmul.f32 %v723, %v908
        %v913 = vmul.f32 %v912, %v846
        %v914 = vstv %s867
        %v915 = vmul.f32 %v729, %v914
        %v916 = vmul.f32 %v915, %v852
        %v917 = vsub.f32 %v913, %v916
        %v918 = vmul.f32 %v725, %v914
        %v919 = vmul.f32 %v918, %v852
        %v920 = vstv %s868
        %v921 = vmul.f32 %v731, %v920
        %v922 = vmul.f32 %v921, %v858
        %v923 = vsub.f32 %v919, %v922
        %s924 = sld [smem:[#allocation4 + $0x98]]
        %s925 = sld [smem:[#allocation4 + $0x99]]
        %s926 = sld [smem:[#allocation4 + $0x9a]]
        %s927 = sld [smem:[#allocation4 + $0x9b]]
        %s928 = sld [smem:[#allocation4 + $0x9c]]
        %s929 = sld [smem:[#allocation4 + $0x9d]]
        %s930 = sld [smem:[#allocation4 + $0x9e]]
        %s931 = sld [smem:[#allocation4 + $0x9f]]
        %s932 = sld [smem:[#allocation4 + $0xa0]]
        %v933 = vstv %s924
        %v934 = vmul.f32 %v709, %v933
        %v935 = vmul.f32 %v934, %v875
        %v936 = vstv %s925
        %v937 = vmul.f32 %v717, %v936
        %v938 = vmul.f32 %v937, %v881
        %v939 = vsub.f32 %v935, %v938
        %v940 = vmul.f32 %v711, %v936
        %v941 = vmul.f32 %v940, %v881
        %v942 = vstv %s926
        %v943 = vmul.f32 %v719, %v942
        %v944 = vmul.f32 %v943, %v887
        %v945 = vsub.f32 %v941, %v944
        %v946 = vmul.f32 %v713, %v942
        %v947 = vmul.f32 %v946, %v887
        %v948 = vstv %s927
        %v949 = vmul.f32 %v721, %v948
        %v950 = vmul.f32 %v949, %v893
        %v951 = vsub.f32 %v947, %v950
        %v952 = vmul.f32 %v715, %v948
        %v953 = vmul.f32 %v952, %v893
        %v954 = vstv %s928
        %v955 = vmul.f32 %v723, %v954
        %v956 = vmul.f32 %v955, %v899
        %v957 = vsub.f32 %v953, %v956
        %v958 = vmul.f32 %v717, %v954
        %v959 = vmul.f32 %v958, %v899
        %v960 = vstv %s929
        %v961 = vmul.f32 %v725, %v960
        %v962 = vmul.f32 %v961, %v905
        %v963 = vsub.f32 %v959, %v962
        %v964 = vmul.f32 %v719, %v960
        %v965 = vmul.f32 %v964, %v905
        %v966 = vstv %s930
        %v967 = vmul.f32 %v727, %v966
        %v968 = vmul.f32 %v967, %v911
        %v969 = vsub.f32 %v965, %v968
        %v970 = vmul.f32 %v721, %v966
        %v971 = vmul.f32 %v970, %v911
        %v972 = vstv %s931
        %v973 = vmul.f32 %v729, %v972
        %v974 = vmul.f32 %v973, %v917
        %v975 = vsub.f32 %v971, %v974
        %v976 = vmul.f32 %v723, %v972
        %v977 = vmul.f32 %v976, %v917
        %v978 = vstv %s932
        %v979 = vmul.f32 %v731, %v978
        %v980 = vmul.f32 %v979, %v923
        %v981 = vsub.f32 %v977, %v980
        %s982 = sld [smem:[#allocation7 + $0x8]]
        %v983 = vstv %s982
        %v984 = vmul.f32 %v939, %v983
        %s985 = sld [smem:[#allocation7 + $0x9]]
        %v986 = vstv %s985
        %v987 = vmul.f32 %v945, %v986
        %v988 = vadd.f32 %v984, %v987
        %s989 = sld [smem:[#allocation7 + $0xa]]
        %v990 = vstv %s989
        %v991 = vmul.f32 %v951, %v990
        %v992 = vadd.f32 %v988, %v991
        %s993 = sld [smem:[#allocation7 + $0xb]]
        %v994 = vstv %s993
        %v995 = vmul.f32 %v957, %v994
        %v996 = vadd.f32 %v992, %v995
        %s997 = sld [smem:[#allocation7 + $0xc]]
        %v998 = vstv %s997
        %v999 = vmul.f32 %v963, %v998
        %v1000 = vadd.f32 %v996, %v999
        %s1001 = sld [smem:[#allocation7 + $0xd]]
        %v1002 = vstv %s1001
        %v1003 = vmul.f32 %v969, %v1002
        %v1004 = vadd.f32 %v1000, %v1003
        %s1005 = sld [smem:[#allocation7 + $0xe]]
        %v1006 = vstv %s1005
        %v1007 = vmul.f32 %v975, %v1006
        %v1008 = vadd.f32 %v1004, %v1007
        %s1009 = sld [smem:[#allocation7 + $0xf]]
        %v1010 = vstv %s1009
        %v1011 = vmul.f32 %v981, %v1010
        %v1012 = vadd.f32 %v1008, %v1011
        %v1013 = vadd.f32 %v691, %v1012
        %s1014 = sld [smem:[#allocation7 + $0x88]]
        %v1015 = vstv %s1014
        %v1016 = vmul.f32 %v939, %v1015
        %s1017 = sld [smem:[#allocation7 + $0x89]]
        %v1018 = vstv %s1017
        %v1019 = vmul.f32 %v945, %v1018
        %v1020 = vadd.f32 %v1016, %v1019
        %s1021 = sld [smem:[#allocation7 + $0x8a]]
        %v1022 = vstv %s1021
        %v1023 = vmul.f32 %v951, %v1022
        %v1024 = vadd.f32 %v1020, %v1023
        %s1025 = sld [smem:[#allocation7 + $0x8b]]
        %v1026 = vstv %s1025
        %v1027 = vmul.f32 %v957, %v1026
        %v1028 = vadd.f32 %v1024, %v1027
        %s1029 = sld [smem:[#allocation7 + $0x8c]]
        %v1030 = vstv %s1029
        %v1031 = vmul.f32 %v963, %v1030
        %v1032 = vadd.f32 %v1028, %v1031
        %s1033 = sld [smem:[#allocation7 + $0x8d]]
        %v1034 = vstv %s1033
        %v1035 = vmul.f32 %v969, %v1034
        %v1036 = vadd.f32 %v1032, %v1035
        %s1037 = sld [smem:[#allocation7 + $0x8e]]
        %v1038 = vstv %s1037
        %v1039 = vmul.f32 %v975, %v1038
        %v1040 = vadd.f32 %v1036, %v1039
        %s1041 = sld [smem:[#allocation7 + $0x8f]]
        %v1042 = vstv %s1041
        %v1043 = vmul.f32 %v981, %v1042
        %v1044 = vadd.f32 %v1040, %v1043
        %v1045 = vadd.f32 %v695, %v1044
        %s1046 = sadd.s32 0, 16
        %s1047 = scalar_lea.vmem %s293, %s1046 [#allocation9]
        %v1048 = vld [vmem:[%s1047] sm:$0xff]
        %v1049 = vmul.f32 %v1048, 0.5
        %v1050 = vtanh.pop %v1049
        %v1051 = vadd.f32 %v1050, 1.0
        %v1052 = vmul.f32 %v1049, %v1051
        %s1053 = sld [smem:[#allocation6 + $0x2]]
        %v1054 = vstv %s1053
        %v1055 = vmul.f32 %v1052, %v1054
        %v1056 = vadd.f32 %v1013, %v1055
        %s1057 = sld [smem:[#allocation6 + $0x82]]
        %v1058 = vstv %s1057
        %v1059 = vmul.f32 %v1052, %v1058
        %v1060 = vadd.f32 %v1045, %v1059
        %s1061 = sld [smem:[#allocation2 + $0x100]]
        %s1062 = sld [smem:[#allocation2 + $0x101]]
        %s1063 = sld [smem:[#allocation2 + $0x102]]
        %s1064 = sld [smem:[#allocation2 + $0x103]]
        %s1065 = sld [smem:[#allocation2 + $0x104]]
        %s1066 = sld [smem:[#allocation2 + $0x105]]
        %s1067 = sld [smem:[#allocation2 + $0x106]]
        %s1068 = sld [smem:[#allocation2 + $0x107]]
        %s1069 = sld [smem:[#allocation2 + $0x108]]
        %s1070 = sld [smem:[#allocation2 + $0x109]]
        %s1071 = sld [smem:[#allocation2 + $0x10a]]
        %s1072 = sld [smem:[#allocation2 + $0x10b]]
        %v1073 = vstv %s1061
        %v1074 = vsub.f32 %v1048, %v1073
        %v1075 = vstv %s1062
        %v1076 = vsub.f32 %v1048, %v1075
        %v1077 = vstv %s1063
        %v1078 = vsub.f32 %v1048, %v1077
        %v1079 = vstv %s1064
        %v1080 = vsub.f32 %v1048, %v1079
        %v1081 = vstv %s1065
        %v1082 = vsub.f32 %v1048, %v1081
        %v1083 = vstv %s1066
        %v1084 = vsub.f32 %v1048, %v1083
        %v1085 = vstv %s1067
        %v1086 = vsub.f32 %v1048, %v1085
        %v1087 = vstv %s1068
        %v1088 = vsub.f32 %v1048, %v1087
        %v1089 = vstv %s1069
        %v1090 = vsub.f32 %v1048, %v1089
        %v1091 = vstv %s1070
        %v1092 = vsub.f32 %v1048, %v1091
        %v1093 = vstv %s1071
        %v1094 = vsub.f32 %v1048, %v1093
        %v1095 = vstv %s1072
        %v1096 = vsub.f32 %v1048, %v1095
        %vm1097 = vcmp.ge.f32.partialorder %v1048, %v1073
        %vm1098 = vcmp.lt.f32.partialorder %v1048, %v1075
        %vm1099 = vmand %vm1097, %vm1098
        %v1100 = vsel %vm1099, 1, 0
        %v1101 = vcvt.s32.f32 %v1100
        %vm1102 = vcmp.ge.f32.partialorder %v1048, %v1075
        %vm1103 = vcmp.lt.f32.partialorder %v1048, %v1077
        %vm1104 = vmand %vm1102, %vm1103
        %v1105 = vsel %vm1104, 1, 0
        %v1106 = vcvt.s32.f32 %v1105
        %vm1107 = vcmp.ge.f32.partialorder %v1048, %v1077
        %vm1108 = vcmp.lt.f32.partialorder %v1048, %v1079
        %vm1109 = vmand %vm1107, %vm1108
        %v1110 = vsel %vm1109, 1, 0
        %v1111 = vcvt.s32.f32 %v1110
        %vm1112 = vcmp.ge.f32.partialorder %v1048, %v1079
        %vm1113 = vcmp.lt.f32.partialorder %v1048, %v1081
        %vm1114 = vmand %vm1112, %vm1113
        %v1115 = vsel %vm1114, 1, 0
        %v1116 = vcvt.s32.f32 %v1115
        %vm1117 = vcmp.ge.f32.partialorder %v1048, %v1081
        %vm1118 = vcmp.lt.f32.partialorder %v1048, %v1083
        %vm1119 = vmand %vm1117, %vm1118
        %v1120 = vsel %vm1119, 1, 0
        %v1121 = vcvt.s32.f32 %v1120
        %vm1122 = vcmp.ge.f32.partialorder %v1048, %v1083
        %vm1123 = vcmp.lt.f32.partialorder %v1048, %v1085
        %vm1124 = vmand %vm1122, %vm1123
        %v1125 = vsel %vm1124, 1, 0
        %v1126 = vcvt.s32.f32 %v1125
        %vm1127 = vcmp.ge.f32.partialorder %v1048, %v1085
        %vm1128 = vcmp.lt.f32.partialorder %v1048, %v1087
        %vm1129 = vmand %vm1127, %vm1128
        %v1130 = vsel %vm1129, 1, 0
        %v1131 = vcvt.s32.f32 %v1130
        %vm1132 = vcmp.ge.f32.partialorder %v1048, %v1087
        %vm1133 = vcmp.lt.f32.partialorder %v1048, %v1089
        %vm1134 = vmand %vm1132, %vm1133
        %v1135 = vsel %vm1134, 1, 0
        %v1136 = vcvt.s32.f32 %v1135
        %vm1137 = vcmp.ge.f32.partialorder %v1048, %v1089
        %vm1138 = vcmp.lt.f32.partialorder %v1048, %v1091
        %vm1139 = vmand %vm1137, %vm1138
        %v1140 = vsel %vm1139, 1, 0
        %v1141 = vcvt.s32.f32 %v1140
        %vm1142 = vcmp.ge.f32.partialorder %v1048, %v1091
        %vm1143 = vcmp.lt.f32.partialorder %v1048, %v1093
        %vm1144 = vmand %vm1142, %vm1143
        %v1145 = vsel %vm1144, 1, 0
        %v1146 = vcvt.s32.f32 %v1145
        %vm1147 = vcmp.ge.f32.partialorder %v1048, %v1093
        %vm1148 = vcmp.lt.f32.partialorder %v1048, %v1095
        %vm1149 = vmand %vm1147, %vm1148
        %v1150 = vsel %vm1149, 1, 0
        %v1151 = vcvt.s32.f32 %v1150
        %s1152 = sld [smem:[#allocation4 + $0x100]]
        %s1153 = sld [smem:[#allocation4 + $0x101]]
        %s1154 = sld [smem:[#allocation4 + $0x102]]
        %s1155 = sld [smem:[#allocation4 + $0x103]]
        %s1156 = sld [smem:[#allocation4 + $0x104]]
        %s1157 = sld [smem:[#allocation4 + $0x105]]
        %s1158 = sld [smem:[#allocation4 + $0x106]]
        %s1159 = sld [smem:[#allocation4 + $0x107]]
        %s1160 = sld [smem:[#allocation4 + $0x108]]
        %s1161 = sld [smem:[#allocation4 + $0x109]]
        %s1162 = sld [smem:[#allocation4 + $0x10a]]
        %v1163 = vstv %s1152
        %v1164 = vmul.f32 %v1074, %v1163
        %v1165 = vmul.f32 %v1164, %v1101
        %v1166 = vstv %s1153
        %v1167 = vmul.f32 %v1078, %v1166
        %v1168 = vmul.f32 %v1167, %v1106
        %v1169 = vsub.f32 %v1165, %v1168
        %v1170 = vmul.f32 %v1076, %v1166
        %v1171 = vmul.f32 %v1170, %v1106
        %v1172 = vstv %s1154
        %v1173 = vmul.f32 %v1080, %v1172
        %v1174 = vmul.f32 %v1173, %v1111
        %v1175 = vsub.f32 %v1171, %v1174
        %v1176 = vmul.f32 %v1078, %v1172
        %v1177 = vmul.f32 %v1176, %v1111
        %v1178 = vstv %s1155
        %v1179 = vmul.f32 %v1082, %v1178
        %v1180 = vmul.f32 %v1179, %v1116
        %v1181 = vsub.f32 %v1177, %v1180
        %v1182 = vmul.f32 %v1080, %v1178
        %v1183 = vmul.f32 %v1182, %v1116
        %v1184 = vstv %s1156
        %v1185 = vmul.f32 %v1084, %v1184
        %v1186 = vmul.f32 %v1185, %v1121
        %v1187 = vsub.f32 %v1183, %v1186
        %v1188 = vmul.f32 %v1082, %v1184
        %v1189 = vmul.f32 %v1188, %v1121
        %v1190 = vstv %s1157
        %v1191 = vmul.f32 %v1086, %v1190
        %v1192 = vmul.f32 %v1191, %v1126
        %v1193 = vsub.f32 %v1189, %v1192
        %v1194 = vmul.f32 %v1084, %v1190
        %v1195 = vmul.f32 %v1194, %v1126
        %v1196 = vstv %s1158
        %v1197 = vmul.f32 %v1088, %v1196
        %v1198 = vmul.f32 %v1197, %v1131
        %v1199 = vsub.f32 %v1195, %v1198
        %v1200 = vmul.f32 %v1086, %v1196
        %v1201 = vmul.f32 %v1200, %v1131
        %v1202 = vstv %s1159
        %v1203 = vmul.f32 %v1090, %v1202
        %v1204 = vmul.f32 %v1203, %v1136
        %v1205 = vsub.f32 %v1201, %v1204
        %v1206 = vmul.f32 %v1088, %v1202
        %v1207 = vmul.f32 %v1206, %v1136
        %v1208 = vstv %s1160
        %v1209 = vmul.f32 %v1092, %v1208
        %v1210 = vmul.f32 %v1209, %v1141
        %v1211 = vsub.f32 %v1207, %v1210
        %v1212 = vmul.f32 %v1090, %v1208
        %v1213 = vmul.f32 %v1212, %v1141
        %v1214 = vstv %s1161
        %v1215 = vmul.f32 %v1094, %v1214
        %v1216 = vmul.f32 %v1215, %v1146
        %v1217 = vsub.f32 %v1213, %v1216
        %v1218 = vmul.f32 %v1092, %v1214
        %v1219 = vmul.f32 %v1218, %v1146
        %v1220 = vstv %s1162
        %v1221 = vmul.f32 %v1096, %v1220
        %v1222 = vmul.f32 %v1221, %v1151
        %v1223 = vsub.f32 %v1219, %v1222
        %s1224 = sld [smem:[#allocation4 + $0x10c]]
        %s1225 = sld [smem:[#allocation4 + $0x10d]]
        %s1226 = sld [smem:[#allocation4 + $0x10e]]
        %s1227 = sld [smem:[#allocation4 + $0x10f]]
        %s1228 = sld [smem:[#allocation4 + $0x110]]
        %s1229 = sld [smem:[#allocation4 + $0x111]]
        %s1230 = sld [smem:[#allocation4 + $0x112]]
        %s1231 = sld [smem:[#allocation4 + $0x113]]
        %s1232 = sld [smem:[#allocation4 + $0x114]]
        %s1233 = sld [smem:[#allocation4 + $0x115]]
        %v1234 = vstv %s1224
        %v1235 = vmul.f32 %v1074, %v1234
        %v1236 = vmul.f32 %v1235, %v1169
        %v1237 = vstv %s1225
        %v1238 = vmul.f32 %v1080, %v1237
        %v1239 = vmul.f32 %v1238, %v1175
        %v1240 = vsub.f32 %v1236, %v1239
        %v1241 = vmul.f32 %v1076, %v1237
        %v1242 = vmul.f32 %v1241, %v1175
        %v1243 = vstv %s1226
        %v1244 = vmul.f32 %v1082, %v1243
        %v1245 = vmul.f32 %v1244, %v1181
        %v1246 = vsub.f32 %v1242, %v1245
        %v1247 = vmul.f32 %v1078, %v1243
        %v1248 = vmul.f32 %v1247, %v1181
        %v1249 = vstv %s1227
        %v1250 = vmul.f32 %v1084, %v1249
        %v1251 = vmul.f32 %v1250, %v1187
        %v1252 = vsub.f32 %v1248, %v1251
        %v1253 = vmul.f32 %v1080, %v1249
        %v1254 = vmul.f32 %v1253, %v1187
        %v1255 = vstv %s1228
        %v1256 = vmul.f32 %v1086, %v1255
        %v1257 = vmul.f32 %v1256, %v1193
        %v1258 = vsub.f32 %v1254, %v1257
        %v1259 = vmul.f32 %v1082, %v1255
        %v1260 = vmul.f32 %v1259, %v1193
        %v1261 = vstv %s1229
        %v1262 = vmul.f32 %v1088, %v1261
        %v1263 = vmul.f32 %v1262, %v1199
        %v1264 = vsub.f32 %v1260, %v1263
        %v1265 = vmul.f32 %v1084, %v1261
        %v1266 = vmul.f32 %v1265, %v1199
        %v1267 = vstv %s1230
        %v1268 = vmul.f32 %v1090, %v1267
        %v1269 = vmul.f32 %v1268, %v1205
        %v1270 = vsub.f32 %v1266, %v1269
        %v1271 = vmul.f32 %v1086, %v1267
        %v1272 = vmul.f32 %v1271, %v1205
        %v1273 = vstv %s1231
        %v1274 = vmul.f32 %v1092, %v1273
        %v1275 = vmul.f32 %v1274, %v1211
        %v1276 = vsub.f32 %v1272, %v1275
        %v1277 = vmul.f32 %v1088, %v1273
        %v1278 = vmul.f32 %v1277, %v1211
        %v1279 = vstv %s1232
        %v1280 = vmul.f32 %v1094, %v1279
        %v1281 = vmul.f32 %v1280, %v1217
        %v1282 = vsub.f32 %v1278, %v1281
        %v1283 = vmul.f32 %v1090, %v1279
        %v1284 = vmul.f32 %v1283, %v1217
        %v1285 = vstv %s1233
        %v1286 = vmul.f32 %v1096, %v1285
        %v1287 = vmul.f32 %v1286, %v1223
        %v1288 = vsub.f32 %v1284, %v1287
        %s1289 = sld [smem:[#allocation4 + $0x118]]
        %s1290 = sld [smem:[#allocation4 + $0x119]]
        %s1291 = sld [smem:[#allocation4 + $0x11a]]
        %s1292 = sld [smem:[#allocation4 + $0x11b]]
        %s1293 = sld [smem:[#allocation4 + $0x11c]]
        %s1294 = sld [smem:[#allocation4 + $0x11d]]
        %s1295 = sld [smem:[#allocation4 + $0x11e]]
        %s1296 = sld [smem:[#allocation4 + $0x11f]]
        %s1297 = sld [smem:[#allocation4 + $0x120]]
        %v1298 = vstv %s1289
        %v1299 = vmul.f32 %v1074, %v1298
        %v1300 = vmul.f32 %v1299, %v1240
        %v1301 = vstv %s1290
        %v1302 = vmul.f32 %v1082, %v1301
        %v1303 = vmul.f32 %v1302, %v1246
        %v1304 = vsub.f32 %v1300, %v1303
        %v1305 = vmul.f32 %v1076, %v1301
        %v1306 = vmul.f32 %v1305, %v1246
        %v1307 = vstv %s1291
        %v1308 = vmul.f32 %v1084, %v1307
        %v1309 = vmul.f32 %v1308, %v1252
        %v1310 = vsub.f32 %v1306, %v1309
        %v1311 = vmul.f32 %v1078, %v1307
        %v1312 = vmul.f32 %v1311, %v1252
        %v1313 = vstv %s1292
        %v1314 = vmul.f32 %v1086, %v1313
        %v1315 = vmul.f32 %v1314, %v1258
        %v1316 = vsub.f32 %v1312, %v1315
        %v1317 = vmul.f32 %v1080, %v1313
        %v1318 = vmul.f32 %v1317, %v1258
        %v1319 = vstv %s1293
        %v1320 = vmul.f32 %v1088, %v1319
        %v1321 = vmul.f32 %v1320, %v1264
        %v1322 = vsub.f32 %v1318, %v1321
        %v1323 = vmul.f32 %v1082, %v1319
        %v1324 = vmul.f32 %v1323, %v1264
        %v1325 = vstv %s1294
        %v1326 = vmul.f32 %v1090, %v1325
        %v1327 = vmul.f32 %v1326, %v1270
        %v1328 = vsub.f32 %v1324, %v1327
        %v1329 = vmul.f32 %v1084, %v1325
        %v1330 = vmul.f32 %v1329, %v1270
        %v1331 = vstv %s1295
        %v1332 = vmul.f32 %v1092, %v1331
        %v1333 = vmul.f32 %v1332, %v1276
        %v1334 = vsub.f32 %v1330, %v1333
        %v1335 = vmul.f32 %v1086, %v1331
        %v1336 = vmul.f32 %v1335, %v1276
        %v1337 = vstv %s1296
        %v1338 = vmul.f32 %v1094, %v1337
        %v1339 = vmul.f32 %v1338, %v1282
        %v1340 = vsub.f32 %v1336, %v1339
        %v1341 = vmul.f32 %v1088, %v1337
        %v1342 = vmul.f32 %v1341, %v1282
        %v1343 = vstv %s1297
        %v1344 = vmul.f32 %v1096, %v1343
        %v1345 = vmul.f32 %v1344, %v1288
        %v1346 = vsub.f32 %v1342, %v1345
        %s1347 = sld [smem:[#allocation7 + $0x10]]
        %v1348 = vstv %s1347
        %v1349 = vmul.f32 %v1304, %v1348
        %s1350 = sld [smem:[#allocation7 + $0x11]]
        %v1351 = vstv %s1350
        %v1352 = vmul.f32 %v1310, %v1351
        %v1353 = vadd.f32 %v1349, %v1352
        %s1354 = sld [smem:[#allocation7 + $0x12]]
        %v1355 = vstv %s1354
        %v1356 = vmul.f32 %v1316, %v1355
        %v1357 = vadd.f32 %v1353, %v1356
        %s1358 = sld [smem:[#allocation7 + $0x13]]
        %v1359 = vstv %s1358
        %v1360 = vmul.f32 %v1322, %v1359
        %v1361 = vadd.f32 %v1357, %v1360
        %s1362 = sld [smem:[#allocation7 + $0x14]]
        %v1363 = vstv %s1362
        %v1364 = vmul.f32 %v1328, %v1363
        %v1365 = vadd.f32 %v1361, %v1364
        %s1366 = sld [smem:[#allocation7 + $0x15]]
        %v1367 = vstv %s1366
        %v1368 = vmul.f32 %v1334, %v1367
        %v1369 = vadd.f32 %v1365, %v1368
        %s1370 = sld [smem:[#allocation7 + $0x16]]
        %v1371 = vstv %s1370
        %v1372 = vmul.f32 %v1340, %v1371
        %v1373 = vadd.f32 %v1369, %v1372
        %s1374 = sld [smem:[#allocation7 + $0x17]]
        %v1375 = vstv %s1374
        %v1376 = vmul.f32 %v1346, %v1375
        %v1377 = vadd.f32 %v1373, %v1376
        %v1378 = vadd.f32 %v1056, %v1377
        %s1379 = sld [smem:[#allocation7 + $0x90]]
        %v1380 = vstv %s1379
        %v1381 = vmul.f32 %v1304, %v1380
        %s1382 = sld [smem:[#allocation7 + $0x91]]
        %v1383 = vstv %s1382
        %v1384 = vmul.f32 %v1310, %v1383
        %v1385 = vadd.f32 %v1381, %v1384
        %s1386 = sld [smem:[#allocation7 + $0x92]]
        %v1387 = vstv %s1386
        %v1388 = vmul.f32 %v1316, %v1387
        %v1389 = vadd.f32 %v1385, %v1388
        %s1390 = sld [smem:[#allocation7 + $0x93]]
        %v1391 = vstv %s1390
        %v1392 = vmul.f32 %v1322, %v1391
        %v1393 = vadd.f32 %v1389, %v1392
        %s1394 = sld [smem:[#allocation7 + $0x94]]
        %v1395 = vstv %s1394
        %v1396 = vmul.f32 %v1328, %v1395
        %v1397 = vadd.f32 %v1393, %v1396
        %s1398 = sld [smem:[#allocation7 + $0x95]]
        %v1399 = vstv %s1398
        %v1400 = vmul.f32 %v1334, %v1399
        %v1401 = vadd.f32 %v1397, %v1400
        %s1402 = sld [smem:[#allocation7 + $0x96]]
        %v1403 = vstv %s1402
        %v1404 = vmul.f32 %v1340, %v1403
        %v1405 = vadd.f32 %v1401, %v1404
        %s1406 = sld [smem:[#allocation7 + $0x97]]
        %v1407 = vstv %s1406
        %v1408 = vmul.f32 %v1346, %v1407
        %v1409 = vadd.f32 %v1405, %v1408
        %v1410 = vadd.f32 %v1060, %v1409
        %s1411 = sadd.s32 0, 24
        %s1412 = scalar_lea.vmem %s293, %s1411 [#allocation9]
        %v1413 = vld [vmem:[%s1412] sm:$0xff]
        %v1414 = vmul.f32 %v1413, 0.5
        %v1415 = vtanh.pop %v1414
        %v1416 = vadd.f32 %v1415, 1.0
        %v1417 = vmul.f32 %v1414, %v1416
        %s1418 = sld [smem:[#allocation6 + $0x3]]
        %v1419 = vstv %s1418
        %v1420 = vmul.f32 %v1417, %v1419
        %v1421 = vadd.f32 %v1378, %v1420
        %s1422 = sld [smem:[#allocation6 + $0x83]]
        %v1423 = vstv %s1422
        %v1424 = vmul.f32 %v1417, %v1423
        %v1425 = vadd.f32 %v1410, %v1424
        %s1426 = sld [smem:[#allocation2 + $0x180]]
        %s1427 = sld [smem:[#allocation2 + $0x181]]
        %s1428 = sld [smem:[#allocation2 + $0x182]]
        %s1429 = sld [smem:[#allocation2 + $0x183]]
        %s1430 = sld [smem:[#allocation2 + $0x184]]
        %s1431 = sld [smem:[#allocation2 + $0x185]]
        %s1432 = sld [smem:[#allocation2 + $0x186]]
        %s1433 = sld [smem:[#allocation2 + $0x187]]
        %s1434 = sld [smem:[#allocation2 + $0x188]]
        %s1435 = sld [smem:[#allocation2 + $0x189]]
        %s1436 = sld [smem:[#allocation2 + $0x18a]]
        %s1437 = sld [smem:[#allocation2 + $0x18b]]
        %v1438 = vstv %s1426
        %v1439 = vsub.f32 %v1413, %v1438
        %v1440 = vstv %s1427
        %v1441 = vsub.f32 %v1413, %v1440
        %v1442 = vstv %s1428
        %v1443 = vsub.f32 %v1413, %v1442
        %v1444 = vstv %s1429
        %v1445 = vsub.f32 %v1413, %v1444
        %v1446 = vstv %s1430
        %v1447 = vsub.f32 %v1413, %v1446
        %v1448 = vstv %s1431
        %v1449 = vsub.f32 %v1413, %v1448
        %v1450 = vstv %s1432
        %v1451 = vsub.f32 %v1413, %v1450
        %v1452 = vstv %s1433
        %v1453 = vsub.f32 %v1413, %v1452
        %v1454 = vstv %s1434
        %v1455 = vsub.f32 %v1413, %v1454
        %v1456 = vstv %s1435
        %v1457 = vsub.f32 %v1413, %v1456
        %v1458 = vstv %s1436
        %v1459 = vsub.f32 %v1413, %v1458
        %v1460 = vstv %s1437
        %v1461 = vsub.f32 %v1413, %v1460
        %vm1462 = vcmp.ge.f32.partialorder %v1413, %v1438
        %vm1463 = vcmp.lt.f32.partialorder %v1413, %v1440
        %vm1464 = vmand %vm1462, %vm1463
        %v1465 = vsel %vm1464, 1, 0
        %v1466 = vcvt.s32.f32 %v1465
        %vm1467 = vcmp.ge.f32.partialorder %v1413, %v1440
        %vm1468 = vcmp.lt.f32.partialorder %v1413, %v1442
        %vm1469 = vmand %vm1467, %vm1468
        %v1470 = vsel %vm1469, 1, 0
        %v1471 = vcvt.s32.f32 %v1470
        %vm1472 = vcmp.ge.f32.partialorder %v1413, %v1442
        %vm1473 = vcmp.lt.f32.partialorder %v1413, %v1444
        %vm1474 = vmand %vm1472, %vm1473
        %v1475 = vsel %vm1474, 1, 0
        %v1476 = vcvt.s32.f32 %v1475
        %vm1477 = vcmp.ge.f32.partialorder %v1413, %v1444
        %vm1478 = vcmp.lt.f32.partialorder %v1413, %v1446
        %vm1479 = vmand %vm1477, %vm1478
        %v1480 = vsel %vm1479, 1, 0
        %v1481 = vcvt.s32.f32 %v1480
        %vm1482 = vcmp.ge.f32.partialorder %v1413, %v1446
        %vm1483 = vcmp.lt.f32.partialorder %v1413, %v1448
        %vm1484 = vmand %vm1482, %vm1483
        %v1485 = vsel %vm1484, 1, 0
        %v1486 = vcvt.s32.f32 %v1485
        %vm1487 = vcmp.ge.f32.partialorder %v1413, %v1448
        %vm1488 = vcmp.lt.f32.partialorder %v1413, %v1450
        %vm1489 = vmand %vm1487, %vm1488
        %v1490 = vsel %vm1489, 1, 0
        %v1491 = vcvt.s32.f32 %v1490
        %vm1492 = vcmp.ge.f32.partialorder %v1413, %v1450
        %vm1493 = vcmp.lt.f32.partialorder %v1413, %v1452
        %vm1494 = vmand %vm1492, %vm1493
        %v1495 = vsel %vm1494, 1, 0
        %v1496 = vcvt.s32.f32 %v1495
        %vm1497 = vcmp.ge.f32.partialorder %v1413, %v1452
        %vm1498 = vcmp.lt.f32.partialorder %v1413, %v1454
        %vm1499 = vmand %vm1497, %vm1498
        %v1500 = vsel %vm1499, 1, 0
        %v1501 = vcvt.s32.f32 %v1500
        %vm1502 = vcmp.ge.f32.partialorder %v1413, %v1454
        %vm1503 = vcmp.lt.f32.partialorder %v1413, %v1456
        %vm1504 = vmand %vm1502, %vm1503
        %v1505 = vsel %vm1504, 1, 0
        %v1506 = vcvt.s32.f32 %v1505
        %vm1507 = vcmp.ge.f32.partialorder %v1413, %v1456
        %vm1508 = vcmp.lt.f32.partialorder %v1413, %v1458
        %vm1509 = vmand %vm1507, %vm1508
        %v1510 = vsel %vm1509, 1, 0
        %v1511 = vcvt.s32.f32 %v1510
        %vm1512 = vcmp.ge.f32.partialorder %v1413, %v1458
        %vm1513 = vcmp.lt.f32.partialorder %v1413, %v1460
        %vm1514 = vmand %vm1512, %vm1513
        %v1515 = vsel %vm1514, 1, 0
        %v1516 = vcvt.s32.f32 %v1515
        %s1517 = sld [smem:[#allocation4 + $0x180]]
        %s1518 = sld [smem:[#allocation4 + $0x181]]
        %s1519 = sld [smem:[#allocation4 + $0x182]]
        %s1520 = sld [smem:[#allocation4 + $0x183]]
        %s1521 = sld [smem:[#allocation4 + $0x184]]
        %s1522 = sld [smem:[#allocation4 + $0x185]]
        %s1523 = sld [smem:[#allocation4 + $0x186]]
        %s1524 = sld [smem:[#allocation4 + $0x187]]
        %s1525 = sld [smem:[#allocation4 + $0x188]]
        %s1526 = sld [smem:[#allocation4 + $0x189]]
        %s1527 = sld [smem:[#allocation4 + $0x18a]]
        %v1528 = vstv %s1517
        %v1529 = vmul.f32 %v1439, %v1528
        %v1530 = vmul.f32 %v1529, %v1466
        %v1531 = vstv %s1518
        %v1532 = vmul.f32 %v1443, %v1531
        %v1533 = vmul.f32 %v1532, %v1471
        %v1534 = vsub.f32 %v1530, %v1533
        %v1535 = vmul.f32 %v1441, %v1531
        %v1536 = vmul.f32 %v1535, %v1471
        %v1537 = vstv %s1519
        %v1538 = vmul.f32 %v1445, %v1537
        %v1539 = vmul.f32 %v1538, %v1476
        %v1540 = vsub.f32 %v1536, %v1539
        %v1541 = vmul.f32 %v1443, %v1537
        %v1542 = vmul.f32 %v1541, %v1476
        %v1543 = vstv %s1520
        %v1544 = vmul.f32 %v1447, %v1543
        %v1545 = vmul.f32 %v1544, %v1481
        %v1546 = vsub.f32 %v1542, %v1545
        %v1547 = vmul.f32 %v1445, %v1543
        %v1548 = vmul.f32 %v1547, %v1481
        %v1549 = vstv %s1521
        %v1550 = vmul.f32 %v1449, %v1549
        %v1551 = vmul.f32 %v1550, %v1486
        %v1552 = vsub.f32 %v1548, %v1551
        %v1553 = vmul.f32 %v1447, %v1549
        %v1554 = vmul.f32 %v1553, %v1486
        %v1555 = vstv %s1522
        %v1556 = vmul.f32 %v1451, %v1555
        %v1557 = vmul.f32 %v1556, %v1491
        %v1558 = vsub.f32 %v1554, %v1557
        %v1559 = vmul.f32 %v1449, %v1555
        %v1560 = vmul.f32 %v1559, %v1491
        %v1561 = vstv %s1523
        %v1562 = vmul.f32 %v1453, %v1561
        %v1563 = vmul.f32 %v1562, %v1496
        %v1564 = vsub.f32 %v1560, %v1563
        %v1565 = vmul.f32 %v1451, %v1561
        %v1566 = vmul.f32 %v1565, %v1496
        %v1567 = vstv %s1524
        %v1568 = vmul.f32 %v1455, %v1567
        %v1569 = vmul.f32 %v1568, %v1501
        %v1570 = vsub.f32 %v1566, %v1569
        %v1571 = vmul.f32 %v1453, %v1567
        %v1572 = vmul.f32 %v1571, %v1501
        %v1573 = vstv %s1525
        %v1574 = vmul.f32 %v1457, %v1573
        %v1575 = vmul.f32 %v1574, %v1506
        %v1576 = vsub.f32 %v1572, %v1575
        %v1577 = vmul.f32 %v1455, %v1573
        %v1578 = vmul.f32 %v1577, %v1506
        %v1579 = vstv %s1526
        %v1580 = vmul.f32 %v1459, %v1579
        %v1581 = vmul.f32 %v1580, %v1511
        %v1582 = vsub.f32 %v1578, %v1581
        %v1583 = vmul.f32 %v1457, %v1579
        %v1584 = vmul.f32 %v1583, %v1511
        %v1585 = vstv %s1527
        %v1586 = vmul.f32 %v1461, %v1585
        %v1587 = vmul.f32 %v1586, %v1516
        %v1588 = vsub.f32 %v1584, %v1587
        %s1589 = sld [smem:[#allocation4 + $0x18c]]
        %s1590 = sld [smem:[#allocation4 + $0x18d]]
        %s1591 = sld [smem:[#allocation4 + $0x18e]]
        %s1592 = sld [smem:[#allocation4 + $0x18f]]
        %s1593 = sld [smem:[#allocation4 + $0x190]]
        %s1594 = sld [smem:[#allocation4 + $0x191]]
        %s1595 = sld [smem:[#allocation4 + $0x192]]
        %s1596 = sld [smem:[#allocation4 + $0x193]]
        %s1597 = sld [smem:[#allocation4 + $0x194]]
        %s1598 = sld [smem:[#allocation4 + $0x195]]
        %v1599 = vstv %s1589
        %v1600 = vmul.f32 %v1439, %v1599
        %v1601 = vmul.f32 %v1600, %v1534
        %v1602 = vstv %s1590
        %v1603 = vmul.f32 %v1445, %v1602
        %v1604 = vmul.f32 %v1603, %v1540
        %v1605 = vsub.f32 %v1601, %v1604
        %v1606 = vmul.f32 %v1441, %v1602
        %v1607 = vmul.f32 %v1606, %v1540
        %v1608 = vstv %s1591
        %v1609 = vmul.f32 %v1447, %v1608
        %v1610 = vmul.f32 %v1609, %v1546
        %v1611 = vsub.f32 %v1607, %v1610
        %v1612 = vmul.f32 %v1443, %v1608
        %v1613 = vmul.f32 %v1612, %v1546
        %v1614 = vstv %s1592
        %v1615 = vmul.f32 %v1449, %v1614
        %v1616 = vmul.f32 %v1615, %v1552
        %v1617 = vsub.f32 %v1613, %v1616
        %v1618 = vmul.f32 %v1445, %v1614
        %v1619 = vmul.f32 %v1618, %v1552
        %v1620 = vstv %s1593
        %v1621 = vmul.f32 %v1451, %v1620
        %v1622 = vmul.f32 %v1621, %v1558
        %v1623 = vsub.f32 %v1619, %v1622
        %v1624 = vmul.f32 %v1447, %v1620
        %v1625 = vmul.f32 %v1624, %v1558
        %v1626 = vstv %s1594
        %v1627 = vmul.f32 %v1453, %v1626
        %v1628 = vmul.f32 %v1627, %v1564
        %v1629 = vsub.f32 %v1625, %v1628
        %v1630 = vmul.f32 %v1449, %v1626
        %v1631 = vmul.f32 %v1630, %v1564
        %v1632 = vstv %s1595
        %v1633 = vmul.f32 %v1455, %v1632
        %v1634 = vmul.f32 %v1633, %v1570
        %v1635 = vsub.f32 %v1631, %v1634
        %v1636 = vmul.f32 %v1451, %v1632
        %v1637 = vmul.f32 %v1636, %v1570
        %v1638 = vstv %s1596
        %v1639 = vmul.f32 %v1457, %v1638
        %v1640 = vmul.f32 %v1639, %v1576
        %v1641 = vsub.f32 %v1637, %v1640
        %v1642 = vmul.f32 %v1453, %v1638
        %v1643 = vmul.f32 %v1642, %v1576
        %v1644 = vstv %s1597
        %v1645 = vmul.f32 %v1459, %v1644
        %v1646 = vmul.f32 %v1645, %v1582
        %v1647 = vsub.f32 %v1643, %v1646
        %v1648 = vmul.f32 %v1455, %v1644
        %v1649 = vmul.f32 %v1648, %v1582
        %v1650 = vstv %s1598
        %v1651 = vmul.f32 %v1461, %v1650
        %v1652 = vmul.f32 %v1651, %v1588
        %v1653 = vsub.f32 %v1649, %v1652
        %s1654 = sld [smem:[#allocation4 + $0x198]]
        %s1655 = sld [smem:[#allocation4 + $0x199]]
        %s1656 = sld [smem:[#allocation4 + $0x19a]]
        %s1657 = sld [smem:[#allocation4 + $0x19b]]
        %s1658 = sld [smem:[#allocation4 + $0x19c]]
        %s1659 = sld [smem:[#allocation4 + $0x19d]]
        %s1660 = sld [smem:[#allocation4 + $0x19e]]
        %s1661 = sld [smem:[#allocation4 + $0x19f]]
        %s1662 = sld [smem:[#allocation4 + $0x1a0]]
        %v1663 = vstv %s1654
        %v1664 = vmul.f32 %v1439, %v1663
        %v1665 = vmul.f32 %v1664, %v1605
        %v1666 = vstv %s1655
        %v1667 = vmul.f32 %v1447, %v1666
        %v1668 = vmul.f32 %v1667, %v1611
        %v1669 = vsub.f32 %v1665, %v1668
        %v1670 = vmul.f32 %v1441, %v1666
        %v1671 = vmul.f32 %v1670, %v1611
        %v1672 = vstv %s1656
        %v1673 = vmul.f32 %v1449, %v1672
        %v1674 = vmul.f32 %v1673, %v1617
        %v1675 = vsub.f32 %v1671, %v1674
        %v1676 = vmul.f32 %v1443, %v1672
        %v1677 = vmul.f32 %v1676, %v1617
        %v1678 = vstv %s1657
        %v1679 = vmul.f32 %v1451, %v1678
        %v1680 = vmul.f32 %v1679, %v1623
        %v1681 = vsub.f32 %v1677, %v1680
        %v1682 = vmul.f32 %v1445, %v1678
        %v1683 = vmul.f32 %v1682, %v1623
        %v1684 = vstv %s1658
        %v1685 = vmul.f32 %v1453, %v1684
        %v1686 = vmul.f32 %v1685, %v1629
        %v1687 = vsub.f32 %v1683, %v1686
        %v1688 = vmul.f32 %v1447, %v1684
        %v1689 = vmul.f32 %v1688, %v1629
        %v1690 = vstv %s1659
        %v1691 = vmul.f32 %v1455, %v1690
        %v1692 = vmul.f32 %v1691, %v1635
        %v1693 = vsub.f32 %v1689, %v1692
        %v1694 = vmul.f32 %v1449, %v1690
        %v1695 = vmul.f32 %v1694, %v1635
        %v1696 = vstv %s1660
        %v1697 = vmul.f32 %v1457, %v1696
        %v1698 = vmul.f32 %v1697, %v1641
        %v1699 = vsub.f32 %v1695, %v1698
        %v1700 = vmul.f32 %v1451, %v1696
        %v1701 = vmul.f32 %v1700, %v1641
        %v1702 = vstv %s1661
        %v1703 = vmul.f32 %v1459, %v1702
        %v1704 = vmul.f32 %v1703, %v1647
        %v1705 = vsub.f32 %v1701, %v1704
        %v1706 = vmul.f32 %v1453, %v1702
        %v1707 = vmul.f32 %v1706, %v1647
        %v1708 = vstv %s1662
        %v1709 = vmul.f32 %v1461, %v1708
        %v1710 = vmul.f32 %v1709, %v1653
        %v1711 = vsub.f32 %v1707, %v1710
        %s1712 = sld [smem:[#allocation7 + $0x18]]
        %v1713 = vstv %s1712
        %v1714 = vmul.f32 %v1669, %v1713
        %s1715 = sld [smem:[#allocation7 + $0x19]]
        %v1716 = vstv %s1715
        %v1717 = vmul.f32 %v1675, %v1716
        %v1718 = vadd.f32 %v1714, %v1717
        %s1719 = sld [smem:[#allocation7 + $0x1a]]
        %v1720 = vstv %s1719
        %v1721 = vmul.f32 %v1681, %v1720
        %v1722 = vadd.f32 %v1718, %v1721
        %s1723 = sld [smem:[#allocation7 + $0x1b]]
        %v1724 = vstv %s1723
        %v1725 = vmul.f32 %v1687, %v1724
        %v1726 = vadd.f32 %v1722, %v1725
        %s1727 = sld [smem:[#allocation7 + $0x1c]]
        %v1728 = vstv %s1727
        %v1729 = vmul.f32 %v1693, %v1728
        %v1730 = vadd.f32 %v1726, %v1729
        %s1731 = sld [smem:[#allocation7 + $0x1d]]
        %v1732 = vstv %s1731
        %v1733 = vmul.f32 %v1699, %v1732
        %v1734 = vadd.f32 %v1730, %v1733
        %s1735 = sld [smem:[#allocation7 + $0x1e]]
        %v1736 = vstv %s1735
        %v1737 = vmul.f32 %v1705, %v1736
        %v1738 = vadd.f32 %v1734, %v1737
        %s1739 = sld [smem:[#allocation7 + $0x1f]]
        %v1740 = vstv %s1739
        %v1741 = vmul.f32 %v1711, %v1740
        %v1742 = vadd.f32 %v1738, %v1741
        %v1743 = vadd.f32 %v1421, %v1742
        %s1744 = sld [smem:[#allocation7 + $0x98]]
        %v1745 = vstv %s1744
        %v1746 = vmul.f32 %v1669, %v1745
        %s1747 = sld [smem:[#allocation7 + $0x99]]
        %v1748 = vstv %s1747
        %v1749 = vmul.f32 %v1675, %v1748
        %v1750 = vadd.f32 %v1746, %v1749
        %s1751 = sld [smem:[#allocation7 + $0x9a]]
        %v1752 = vstv %s1751
        %v1753 = vmul.f32 %v1681, %v1752
        %v1754 = vadd.f32 %v1750, %v1753
        %s1755 = sld [smem:[#allocation7 + $0x9b]]
        %v1756 = vstv %s1755
        %v1757 = vmul.f32 %v1687, %v1756
        %v1758 = vadd.f32 %v1754, %v1757
        %s1759 = sld [smem:[#allocation7 + $0x9c]]
        %v1760 = vstv %s1759
        %v1761 = vmul.f32 %v1693, %v1760
        %v1762 = vadd.f32 %v1758, %v1761
        %s1763 = sld [smem:[#allocation7 + $0x9d]]
        %v1764 = vstv %s1763
        %v1765 = vmul.f32 %v1699, %v1764
        %v1766 = vadd.f32 %v1762, %v1765
        %s1767 = sld [smem:[#allocation7 + $0x9e]]
        %v1768 = vstv %s1767
        %v1769 = vmul.f32 %v1705, %v1768
        %v1770 = vadd.f32 %v1766, %v1769
        %s1771 = sld [smem:[#allocation7 + $0x9f]]
        %v1772 = vstv %s1771
        %v1773 = vmul.f32 %v1711, %v1772
        %v1774 = vadd.f32 %v1770, %v1773
        %v1775 = vadd.f32 %v1425, %v1774
        %1776 = vst [vmem:[%s317] sm:$0xff] %v1743
        %s1777 = scalar_lea.vmem %s317, %s681 [#allocation10]
        %1778 = vst [vmem:[%s1777] sm:$0xff] %v1775
        %s1779 = sand.u32 %s137, 1
        %s1780 = sand.u32 %s137, 1
        %s1781 = smul.addr %s1780, 16
        %s1782 = scalar_lea.vmem [#allocation10], %s1781
        // Predicated region
        $region95: #{kan_convolutional_layer.1} parent=73 // pred_check
          %p1783 = pneg %p147
        $region96: #{kan_convolutional_layer.1} parent=73 // pred_check_branch
          %1785 = sbr.rel (%p1783) target = $region98
        $region97: #{kan_convolutional_layer.1} parent=73 // pred_region
          %s1786 = smul.addr %s19, 8
          %s1787 = scalar_lea.vmem %s5, %s1786
          // Predicated region
          $region99: #{kan_convolutional_layer.1} parent=97 // pred_check
            _
          $region100: #{kan_convolutional_layer.1} parent=97 // pred_check_branch
            %1789 = sbr.rel (0) target = $region102
          $region101: #{kan_convolutional_layer.1} parent=97 // pred_region
            // Predicated region
            $region103: #{kan_convolutional_layer.1} parent=101 // pred_check
              _
            $region104: #{kan_convolutional_layer.1} parent=101 // pred_check_branch
              %1791 = sbr.rel (0) target = $region106
            $region105: #{kan_convolutional_layer.1} parent=101 // pred_region
              // Predicated region
              $region118: #{kan_convolutional_layer.1} parent=105 // pred_check
                _
              $region119: #{kan_convolutional_layer.1} parent=105 // pred_check_branch
                %1809 = sbr.rel (0) target = $region121
              $region120: #{kan_convolutional_layer.1} parent=105 // pred_region
                loop: start=0, step=1, limit=1
                $region122: #{kan_convolutional_layer.1} parent=120 // loop_pre_header
                  _
                $region123: #{kan_convolutional_layer.1} parent=120 // loop_header
                  %s1811 = sphi 0, %s1815
                  %p1812 = scmp.ge.s32.totalorder %s1811, 1
                  %s1816 = sphi %s1782, %s1782
                  %s1817 = sphi %s1787, %s1787
                $region124: #{kan_convolutional_layer.1} parent=120 // loop_header_branch
                  %1814 = sbr.rel (%p1812) target = $region128
                $region125: #{kan_convolutional_layer.1} parent=120 // loop_body
                  %v1818 = vld [vmem:[%s1816] sm:$0xff]
                  %1819 = vst [vmem:[%s1817] sm:$0xff] %v1818
                  %v1820 = vld [vmem:[%s1816 + $0x8] sm:$0xff]
                  %1821 = vst [vmem:[%s1817 + $0x10] sm:$0xff] %v1820
                $region126: #{kan_convolutional_layer.1} parent=120 // loop_footer
                  %s1815 = sadd.s32 1, %s1811
                $region127: #{kan_convolutional_layer.1} parent=120 // loop_footer_branch
                  %1810 = sbr.rel target = $region123
                $region128: #{kan_convolutional_layer.1} parent=120 // loop_exit
                  _
              $region121: #{kan_convolutional_layer.1} parent=105 // pred_fallthru
                _
              // Predicated region
              $region129: #{kan_convolutional_layer.1} parent=105 // pred_check
                _
              $region130: #{kan_convolutional_layer.1} parent=105 // pred_check_branch
                %1823 = sbr.rel target = $region132
              $region131: #{kan_convolutional_layer.1} parent=105 // pred_region
                _
              $region132: #{kan_convolutional_layer.1} parent=105 // pred_fallthru
                _
            $region106: #{kan_convolutional_layer.1} parent=101 // pred_fallthru
              _
            // Predicated region
            $region107: #{kan_convolutional_layer.1} parent=101 // pred_check
              _
            $region108: #{kan_convolutional_layer.1} parent=101 // pred_check_branch
              %1793 = sbr.rel target = $region110
            $region109: #{kan_convolutional_layer.1} parent=101 // pred_region
              %s1795 = ssub.s32 256, 1
              loop: start=0, step=1, limit=1
              $region111: #{kan_convolutional_layer.1} parent=109 // loop_pre_header
                _
              $region112: #{kan_convolutional_layer.1} parent=109 // loop_header
                %s1797 = sphi 0, %s1801
                %p1798 = scmp.ge.s32.totalorder %s1797, 1
                %s1802 = sphi %s1782, %s1782
                %s1803 = sphi %s1787, %s1787
              $region113: #{kan_convolutional_layer.1} parent=109 // loop_header_branch
                %1800 = sbr.rel (%p1798) target = $region117
              $region114: #{kan_convolutional_layer.1} parent=109 // loop_body
                %v1804 = vld [vmem:[%s1802] sm:%s1795]
                %1805 = vst [vmem:[%s1803] sm:%s1795] %v1804
                %v1806 = vld [vmem:[%s1802 + $0x8] sm:%s1795]
                %1807 = vst [vmem:[%s1803 + $0x10] sm:%s1795] %v1806
              $region115: #{kan_convolutional_layer.1} parent=109 // loop_footer
                %s1801 = sadd.s32 1, %s1797
              $region116: #{kan_convolutional_layer.1} parent=109 // loop_footer_branch
                %1796 = sbr.rel target = $region112
              $region117: #{kan_convolutional_layer.1} parent=109 // loop_exit
                _
            $region110: #{kan_convolutional_layer.1} parent=101 // pred_fallthru
              _
          $region102: #{kan_convolutional_layer.1} parent=97 // pred_fallthru
            _
          %1824 = vnop
        $region98: #{kan_convolutional_layer.1} parent=73 // pred_fallthru
          _
      $region74: #{kan_convolutional_layer.1} parent=5 // pred_fallthru
        _
      %p1825 = scmp.le.s32.totalorder 2, %s14
      // Predicated region
      $region133: #{kan_convolutional_layer.1} parent=5 // pred_check
        %p1826 = pneg %p1825
      $region134: #{kan_convolutional_layer.1} parent=5 // pred_check_branch
        %1828 = sbr.rel (%p1826) target = $region136
      $region135: #{kan_convolutional_layer.1} parent=5 // pred_region
        %s1829 = ssub.s32 %s14, 2
        // Predicated region
        $region137: #{kan_convolutional_layer.1} parent=135 // pred_check
          %p1830 = pneg %p153
        $region138: #{kan_convolutional_layer.1} parent=135 // pred_check_branch
          %1832 = sbr.rel (%p1830) target = $region140
        $region139: #{kan_convolutional_layer.1} parent=135 // pred_region
          %s1833 = sand.u32 %s138, 1
          %s1834 = sand.u32 %s138, 1
          %s1835 = smul.addr %s1834, 16
          %s1836 = scalar_lea.vmem [#allocation10], %s1835
        $region140: #{kan_convolutional_layer.1} parent=135 // pred_fallthru
          _
      $region136: #{kan_convolutional_layer.1} parent=5 // pred_fallthru
        _
    $region6: #{kan_convolutional_layer.1} parent=1 // loop_footer
      %s18 = sadd.s32 1, %s14
    $region7: #{kan_convolutional_layer.1} parent=1 // loop_footer_branch
      %13 = sbr.rel target = $region3
    $region8: #{kan_convolutional_layer.1} parent=1 // loop_exit
      _
    %1837 = vsyncpa [#allocation3], 1
    %s1838 = scalar_lea.sflag [#allocation3], 1
    %1839 = vsyncpa %s1838, 1
    %1840 = vsyncpa [#allocation5], 1
    %1841 = vsyncpa [#allocation8], 1

</llo_original>
